<compile_context>
chip_gen: v5e
topology: v5e:2x2
jax: 0.10.0
libtpu: 0.0.40
codegen_flags: <defaults>
</compile_context>

<pallas_src>
import math

import jax
import jax.numpy as jnp
from jax.experimental import pallas as pl
from jax.experimental.pallas import tpu as pltpu

SEQ = 3                       # max_position_embeddings = 3
HIDDEN = 16
HEADS = 2
HEAD_DIM = HIDDEN // HEADS
INTER = 32
N_LAYERS = 2
N_CLASSES = 2
WIDTH = SEQ * HIDDEN          # 48: all positions concatenated along sublanes
IWIDTH = SEQ * INTER          # 96
LN_EPS = 1e-12                # BERT LayerNorm eps
LANE = 128


# ----------------------------------------------------------------------------
# In-kernel helpers
# ----------------------------------------------------------------------------
_ERF_P = 0.3275911
_ERF_A = (0.254829592, -0.284496736, 1.421413741, -1.453152027, 1.061405429)


def _erf_approx(z):
    """Abramowitz & Stegun 7.1.26, |err| <= 1.5e-7 (f32-exact for our purposes).

    Avoids relying on an erf lowering in Mosaic; uses only exp (EUP) + VALU.
    """
    za = jnp.abs(z)
    t = 1.0 / (1.0 + _ERF_P * za)
    a1, a2, a3, a4, a5 = _ERF_A
    poly = ((((a5 * t + a4) * t + a3) * t + a2) * t + a1) * t
    e = 1.0 - poly * jnp.exp(-za * za)
    return jnp.where(z < 0.0, -e, e)


def _gelu_exact(x):
    return x * 0.5 * (1.0 + _erf_approx(x * (1.0 / math.sqrt(2.0))))


def _ln_bd(h, g, b, msum, mexp):
    """Per-position LayerNorm on a (48, T) slab; stats via tiny MXU matmuls.

    msum: (3, 48) 0/1 per-position row-sum selector; mexp = msum.T expander.
    """
    mu = jnp.dot(msum, h, preferred_element_type=jnp.float32) * (1.0 / HIDDEN)    # (3, T)
    mu_f = jnp.dot(mexp, mu, preferred_element_type=jnp.float32)                  # (48, T)
    d = h - mu_f
    var = jnp.dot(msum, d * d, preferred_element_type=jnp.float32) * (1.0 / HIDDEN)
    inv = jax.lax.rsqrt(var + LN_EPS)                                             # (3, T)
    inv_f = jnp.dot(mexp, inv, preferred_element_type=jnp.float32)                # (48, T)
    return d * inv_f * g + b


# ----------------------------------------------------------------------------
# Kernel
# ----------------------------------------------------------------------------
def _time_token_kernel(
    x_ref,                       # (48, TILE_B)   embedded inputs (pos/type already added)
    eg_ref, eb_ref,              # (48, 1)        embedding-LN gamma/beta, tiled per position
    wq_ref, bq_ref,              # (L, 48, 48), (L, 48, 1)   block-diag Wq^T (1/sqrt(hd) folded)
    wk_ref, bk_ref,              # (L, 3, 48, 48), (L, 48, 1) block-permuted Wk^T per roll r
    wv_ref, bv_ref,              # (L, 3, 48, 48), (L, 48, 1)
    wo_ref, bo_ref,              # (L, 48, 48), (L, 48, 1)   block-diag attn-output proj
    g1_ref, b1_ref,              # (L, 48, 1)     post-attention LayerNorm
    wi_ref, bi_ref,              # (L, 96, 48), (L, 96, 1)   block-diag FFN-in
    wf_ref, bf_ref,              # (L, 48, 96), (L, 48, 1)   block-diag FFN-out
    g2_ref, b2_ref,              # (L, 48, 1)     post-FFN LayerNorm
    sel_ref, selT_ref,           # (6, 48), (48, 6) per-(pos,head) reduce / expand selectors
    msum_ref, mexp_ref,          # (3, 48), (48, 3) per-position reduce / expand selectors
    lw_ref, lb_ref,              # (2, 48), (2, 1) final linear (transposed)
    y_ref,                       # (2, TILE_B)    logits, lane-dense store
):
    msum, mexp = msum_ref[...], mexp_ref[...]
    sel, selT = sel_ref[...], selT_ref[...]

    # --- BertEmbeddings LayerNorm (gather + adds were done in the wrapper).
    h = _ln_bd(x_ref[...], eg_ref[...], eb_ref[...], msum, mexp)          # (48, T)

    # --- 2 BertLayers, fully unrolled.
    for l in range(N_LAYERS):
        q = jnp.dot(wq_ref[l], h, preferred_element_type=jnp.float32) + bq_ref[l]

        # scores: for roll r, wk_ref[l, r] produces, at row block i, the key of
        # position (i+r)%3, so q*k_r reduced by `sel` gives all (query, head)
        # scores against key j=(i+r)%3 in one lane-dense (6, T) slab.
        s = []
        for r in range(SEQ):
            k_r = jnp.dot(wk_ref[l, r], h, preferred_element_type=jnp.float32) + bk_ref[l]
            s.append(jnp.dot(sel, q * k_r, preferred_element_type=jnp.float32))   # (6, T)

        # softmax over the 3 key positions (order-invariant across r).
        m = jnp.maximum(jnp.maximum(s[0], s[1]), s[2])
        e = [jnp.exp(s[r] - m) for r in range(SEQ)]
        inv = 1.0 / (e[0] + e[1] + e[2])   # exact (keeps 1e-4 parity); pl.reciprocal(approx=True) is a drop-in

        ctx = None
        for r in range(SEQ):
            v_r = jnp.dot(wv_ref[l, r], h, preferred_element_type=jnp.float32) + bv_ref[l]
            p_f = jnp.dot(selT, e[r] * inv, preferred_element_type=jnp.float32)   # (48, T)
            term = p_f * v_r
            ctx = term if ctx is None else ctx + term

        ao = jnp.dot(wo_ref[l], ctx, preferred_element_type=jnp.float32) + bo_ref[l]
        h = _ln_bd(ao + h, g1_ref[l], b1_ref[l], msum, mexp)

        it = _gelu_exact(jnp.dot(wi_ref[l], h, preferred_element_type=jnp.float32) + bi_ref[l])
        ff = jnp.dot(wf_ref[l], it, preferred_element_type=jnp.float32) + bf_ref[l]
        h = _ln_bd(ff + h, g2_ref[l], b2_ref[l], msum, mexp)

    # --- final Linear(48, 2): reshape(bz,48)@W == W^T @ h (rows are already in
    # position-major order), one lane-dense (2, TILE_B) store.
    y_ref[...] = jnp.dot(lw_ref[...], h, preferred_element_type=jnp.float32) + lb_ref[...]


# ----------------------------------------------------------------------------
# Wrapper: parameter preprocessing + pallas_call
# ----------------------------------------------------------------------------
def _round_up(a, m):
    return ((a + m - 1) // m) * m


def _block_place(wT, r):
    """Place block wT (out,in) at block-row p, block-col (p+r)%SEQ -> (3*out, 3*in)."""
    o, i = wT.shape
    full = jnp.zeros((SEQ * o, SEQ * i), jnp.float32)
    for p in range(SEQ):
        c = (p + r) % SEQ
        full = full.at[p * o:(p + 1) * o, c * i:(c + 1) * i].set(wT.astype(jnp.float32))
    return full


def _tile_pos(v):
    """Tile a per-hidden-dim vector across the 3 positions -> (3*n, 1)."""
    return jnp.tile(jnp.reshape(v, (-1,)), SEQ)[:, None].astype(jnp.float32)


def _prep_params(params):
    inv_sqrt_d = 1.0 / math.sqrt(HEAD_DIM)

    def per_layer(l):
        qkv_w = params["qkv_w"][l]          # (16, 48), columns = [q | k | v]
        qkv_b = params["qkv_b"][l, 0]       # (48,)
        wq, wk, wv = (qkv_w[:, :HIDDEN], qkv_w[:, HIDDEN:2 * HIDDEN], qkv_w[:, 2 * HIDDEN:])
        bq, bk, bv = (qkv_b[:HIDDEN], qkv_b[HIDDEN:2 * HIDDEN], qkv_b[2 * HIDDEN:])
        return dict(
            wq=_block_place(wq.T * inv_sqrt_d, 0),           # fold score scaling into q
            bq=_tile_pos(bq * inv_sqrt_d),
            wk=jnp.stack([_block_place(wk.T, r) for r in range(SEQ)]),
            bk=_tile_pos(bk),
            wv=jnp.stack([_block_place(wv.T, r) for r in range(SEQ)]),
            bv=_tile_pos(bv),
            wo=_block_place(params["ao_w"][l].T, 0),
            bo=_tile_pos(params["ao_b"][l]),
            g1=_tile_pos(params["ln1_g"][l]), b1=_tile_pos(params["ln1_b"][l]),
            wi=_block_place(params["int_w"][l].T, 0),
            bi=_tile_pos(params["int_b"][l]),
            wf=_block_place(params["fo_w"][l].T, 0),
            bf=_tile_pos(params["fo_b"][l]),
            g2=_tile_pos(params["ln2_g"][l]), b2=_tile_pos(params["ln2_b"][l]),
        )

    per = [per_layer(l) for l in range(N_LAYERS)]
    stk = lambda key: jnp.stack([p[key] for p in per])

    rows = jnp.arange(WIDTH)
    pos_of = rows // HIDDEN
    head_of = (rows % HIDDEN) // HEAD_DIM
    sel = (jnp.arange(SEQ * HEADS)[:, None]
           == (HEADS * pos_of + head_of)[None, :]).astype(jnp.float32)        # (6, 48)
    msum = (jnp.arange(SEQ)[:, None] == pos_of[None, :]).astype(jnp.float32)  # (3, 48)

    return [
        _tile_pos(params["eln_g"]), _tile_pos(params["eln_b"]),
        stk("wq"), stk("bq"), stk("wk"), stk("bk"), stk("wv"), stk("bv"),
        stk("wo"), stk("bo"), stk("g1"), stk("b1"),
        stk("wi"), stk("bi"), stk("wf"), stk("bf"), stk("g2"), stk("b2"),
        sel, sel.T, msum, msum.T,
        params["lin_w"].T.astype(jnp.float32),
        jnp.reshape(params["lin_b"], (N_CLASSES, 1)).astype(jnp.float32),
    ]


def model_time_token_forward(input_ids, params, labels=None, tile_b=1024):
    """Mirrors ModelTimeToken.forward: returns (loss, logits)."""
    bz = input_ids.shape[0]

    # --- glue: embedding gather + position / token-type add (XLA fuses these).
    # TODO(synk): fuse the gather itself (scalar-prefetched ids + in-kernel
    # gather) to drop the remaining (bz, 48) HBM round trip.
    x = (params["tok_emb"][input_ids]
         + params["pos_emb"][None]
         + params["tt_emb"][None]).astype(jnp.float32)                 # (bz, 3, 16)

    # Lane-dense batch tile (multiple of 128).  For batches that allow it, keep
    # >= 2 grid steps so the "parallel" batch axis shards across both v7x TCs.
    tile = min(int(tile_b), _round_up(max(bz, 1), LANE))
    if bz > LANE:
        tile = min(tile, _round_up((bz + 1) // 2, LANE))
    tile = max(LANE, _round_up(tile, LANE))
    padded = _round_up(bz, tile)

    x2 = jnp.reshape(x, (bz, WIDTH))
    if padded != bz:
        x2 = jnp.pad(x2, ((0, padded - bz), (0, 0)))
    xt = x2.T                                                          # (48, padded), batch-in-lanes

    ordered = _prep_params(params)                                     # batch-independent constants

    def full_spec(a):
        nd = a.ndim
        return pl.BlockSpec(a.shape, lambda b, _nd=nd: (0,) * _nd)

    in_specs = [pl.BlockSpec((WIDTH, tile), lambda b: (0, b))]
    in_specs += [full_spec(a) for a in ordered]

    y_pad = pl.pallas_call(
        _time_token_kernel,
        out_shape=jax.ShapeDtypeStruct((N_CLASSES, padded), jnp.float32),
        grid=(padded // tile,),
        in_specs=in_specs,
        out_specs=pl.BlockSpec((N_CLASSES, tile), lambda b: (0, b)),
        compiler_params=pltpu.CompilerParams(
            dimension_semantics=("parallel",),
            vmem_limit_bytes=32 * 1024 * 1024),
    )(xt, *ordered)

    y = y_pad[:, :bz].T                                                # (bz, 2)

    loss = None
    if labels is not None:
        # CrossEntropyLoss (mean reduction) — plain JAX glue.
        logp = jax.nn.log_softmax(y, axis=-1)
        loss = -jnp.mean(jnp.take_along_axis(logp, labels[:, None], axis=-1))
    return loss, y


# ----------------------------------------------------------------------------
# Parameter init + pure-JAX reference (for the self-check)
# ----------------------------------------------------------------------------
def init_params(key, vocab_size):
    ks = jax.random.split(key, 16)
    s = 0.02

    def nrm(k, shape):
        return jax.random.normal(k, shape, jnp.float32) * s

    return dict(
        tok_emb=nrm(ks[0], (vocab_size, HIDDEN)),
        pos_emb=nrm(ks[1], (SEQ, HIDDEN)),
        tt_emb=nrm(ks[2], (1, HIDDEN)),
        eln_g=jnp.ones((1, HIDDEN), jnp.float32),
        eln_b=jnp.zeros((1, HIDDEN), jnp.float32),
        qkv_w=nrm(ks[3], (N_LAYERS, HIDDEN, 3 * HIDDEN)),
        qkv_b=nrm(ks[4], (N_LAYERS, 1, 3 * HIDDEN)),
        ao_w=nrm(ks[5], (N_LAYERS, HIDDEN, HIDDEN)),
        ao_b=nrm(ks[6], (N_LAYERS, 1, HIDDEN)),
        ln1_g=jnp.ones((N_LAYERS, 1, HIDDEN), jnp.float32),
        ln1_b=jnp.zeros((N_LAYERS, 1, HIDDEN), jnp.float32),
        int_w=nrm(ks[7], (N_LAYERS, HIDDEN, INTER)),
        int_b=nrm(ks[8], (N_LAYERS, 1, INTER)),
        fo_w=nrm(ks[9], (N_LAYERS, INTER, HIDDEN)),
        fo_b=nrm(ks[10], (N_LAYERS, 1, HIDDEN)),
        ln2_g=jnp.ones((N_LAYERS, 1, HIDDEN), jnp.float32),
        ln2_b=jnp.zeros((N_LAYERS, 1, HIDDEN), jnp.float32),
        lin_w=nrm(ks[11], (SEQ * HIDDEN, N_CLASSES)),
        lin_b=nrm(ks[12], (1, N_CLASSES)),
    )


def _layernorm(h, g, b):
    mu = jnp.mean(h, axis=-1, keepdims=True)
    var = jnp.mean((h - mu) ** 2, axis=-1, keepdims=True)
    return (h - mu) * jax.lax.rsqrt(var + LN_EPS) * g + b


def _reference_single(x, p):
    """Pure-JAX reference for one example (same math as the PyTorch module)."""
    h = x + p["pos_emb"] + p["tt_emb"]
    h = _layernorm(h, p["eln_g"], p["eln_b"])
    for l in range(N_LAYERS):
        qkv = h @ p["qkv_w"][l] + p["qkv_b"][l]
        ctx = []
        for hd in range(HEADS):
            q = qkv[:, hd * HEAD_DIM:(hd + 1) * HEAD_DIM]
            k = qkv[:, HIDDEN + hd * HEAD_DIM:HIDDEN + (hd + 1) * HEAD_DIM]
            v = qkv[:, 2 * HIDDEN + hd * HEAD_DIM:2 * HIDDEN + (hd + 1) * HEAD_DIM]
            sc = (q @ k.T) / jnp.sqrt(float(HEAD_DIM))
            ctx.append(jax.nn.softmax(sc, axis=-1) @ v)
        ctx = jnp.concatenate(ctx, axis=-1)
        ao = ctx @ p["ao_w"][l] + p["ao_b"][l]
        h = _layernorm(ao + h, p["ln1_g"][l], p["ln1_b"][l])
        it = jax.nn.gelu(h @ p["int_w"][l] + p["int_b"][l], approximate=False)
        ff = it @ p["fo_w"][l] + p["fo_b"][l]
        h = _layernorm(ff + h, p["ln2_g"][l], p["ln2_b"][l])
    return h.reshape(SEQ * HIDDEN) @ p["lin_w"] + p["lin_b"][0]


if __name__ == "__main__":
    vocab_size = 128
    key = jax.random.PRNGKey(0)
    pkey, ikey, lkey = jax.random.split(key, 3)
    params = init_params(pkey, vocab_size)

    def check(bz):
        ik, lk = jax.random.split(jax.random.fold_in(ikey, bz))
        input_ids = jax.random.randint(ik, (bz, SEQ), 0, vocab_size, dtype=jnp.int32)
        labels = jax.random.randint(lk, (bz,), 0, N_CLASSES, dtype=jnp.int32)

        loss, y = model_time_token_forward(input_ids, params, labels=labels, tile_b=1024)
        y = jax.block_until_ready(y)
        loss = jax.block_until_ready(loss)

        x = params["tok_emb"][input_ids]
        y_ref = jax.vmap(lambda xx: _reference_single(xx, params))(x)
        assert y.shape == (bz, N_CLASSES)
        assert jnp.allclose(y, y_ref, atol=1e-4, rtol=1e-4), (y, y_ref)
        assert bool(jnp.isfinite(loss))

    check(16)    # single grid step, batch padded to one 128-lane tile
    check(200)   # two grid steps + batch padding (exercises the multi-tile path)

    print("KERNEL_OK")
</pallas_src>

<mosaic_0001>
module attributes {stable_mosaic.version = 11 : i64} {
  func.func @_time_token_kernel(%arg0: i32, %arg1: memref<48x128xf32, #tpu.memory_space<vmem>>, %arg2: memref<48x1xf32, #tpu.memory_space<vmem>>, %arg3: memref<48x1xf32, #tpu.memory_space<vmem>>, %arg4: memref<2x48x48xf32, #tpu.memory_space<vmem>>, %arg5: memref<2x48x1xf32, #tpu.memory_space<vmem>>, %arg6: memref<2x3x48x48xf32, #tpu.memory_space<vmem>>, %arg7: memref<2x48x1xf32, #tpu.memory_space<vmem>>, %arg8: memref<2x3x48x48xf32, #tpu.memory_space<vmem>>, %arg9: memref<2x48x1xf32, #tpu.memory_space<vmem>>, %arg10: memref<2x48x48xf32, #tpu.memory_space<vmem>>, %arg11: memref<2x48x1xf32, #tpu.memory_space<vmem>>, %arg12: memref<2x48x1xf32, #tpu.memory_space<vmem>>, %arg13: memref<2x48x1xf32, #tpu.memory_space<vmem>>, %arg14: memref<2x96x48xf32, #tpu.memory_space<vmem>>, %arg15: memref<2x96x1xf32, #tpu.memory_space<vmem>>, %arg16: memref<2x48x96xf32, #tpu.memory_space<vmem>>, %arg17: memref<2x48x1xf32, #tpu.memory_space<vmem>>, %arg18: memref<2x48x1xf32, #tpu.memory_space<vmem>>, %arg19: memref<2x48x1xf32, #tpu.memory_space<vmem>>, %arg20: memref<6x48xf32, #tpu.memory_space<vmem>>, %arg21: memref<48x6xf32, #tpu.memory_space<vmem>>, %arg22: memref<3x48xf32, #tpu.memory_space<vmem>>, %arg23: memref<48x3xf32, #tpu.memory_space<vmem>>, %arg24: memref<2x48xf32, #tpu.memory_space<vmem>>, %arg25: memref<2x1xf32, #tpu.memory_space<vmem>>, %arg26: memref<2x128xf32, #tpu.memory_space<vmem>>) attributes {dimension_semantics = [#tpu.dimension_semantics<parallel>], iteration_bounds = array<i64: 1>, scalar_prefetch = 0 : i64, scratch_operands = 0 : i64, tpu.core_type = #tpu.core_type<tc>, window_params = [{transform_indices = @transform_0, window_bounds = array<i64: 48, 128>}, {pipeline_mode = #tpu.pipeline_mode<synchronous>, transform_indices = @transform_1, window_bounds = array<i64: 48, 1>}, {pipeline_mode = #tpu.pipeline_mode<synchronous>, transform_indices = @transform_2, window_bounds = array<i64: 48, 1>}, {pipeline_mode = #tpu.pipeline_mode<synchronous>, transform_indices = @transform_3, window_bounds = array<i64: 2, 48, 48>}, {pipeline_mode = #tpu.pipeline_mode<synchronous>, transform_indices = @transform_4, window_bounds = array<i64: 2, 48, 1>}, {pipeline_mode = #tpu.pipeline_mode<synchronous>, transform_indices = @transform_5, window_bounds = array<i64: 2, 3, 48, 48>}, {pipeline_mode = #tpu.pipeline_mode<synchronous>, transform_indices = @transform_6, window_bounds = array<i64: 2, 48, 1>}, {pipeline_mode = #tpu.pipeline_mode<synchronous>, transform_indices = @transform_7, window_bounds = array<i64: 2, 3, 48, 48>}, {pipeline_mode = #tpu.pipeline_mode<synchronous>, transform_indices = @transform_8, window_bounds = array<i64: 2, 48, 1>}, {pipeline_mode = #tpu.pipeline_mode<synchronous>, transform_indices = @transform_9, window_bounds = array<i64: 2, 48, 48>}, {pipeline_mode = #tpu.pipeline_mode<synchronous>, transform_indices = @transform_10, window_bounds = array<i64: 2, 48, 1>}, {pipeline_mode = #tpu.pipeline_mode<synchronous>, transform_indices = @transform_11, window_bounds = array<i64: 2, 48, 1>}, {pipeline_mode = #tpu.pipeline_mode<synchronous>, transform_indices = @transform_12, window_bounds = array<i64: 2, 48, 1>}, {pipeline_mode = #tpu.pipeline_mode<synchronous>, transform_indices = @transform_13, window_bounds = array<i64: 2, 96, 48>}, {pipeline_mode = #tpu.pipeline_mode<synchronous>, transform_indices = @transform_14, window_bounds = array<i64: 2, 96, 1>}, {pipeline_mode = #tpu.pipeline_mode<synchronous>, transform_indices = @transform_15, window_bounds = array<i64: 2, 48, 96>}, {pipeline_mode = #tpu.pipeline_mode<synchronous>, transform_indices = @transform_16, window_bounds = array<i64: 2, 48, 1>}, {pipeline_mode = #tpu.pipeline_mode<synchronous>, transform_indices = @transform_17, window_bounds = array<i64: 2, 48, 1>}, {pipeline_mode = #tpu.pipeline_mode<synchronous>, transform_indices = @transform_18, window_bounds = array<i64: 2, 48, 1>}, {pipeline_mode = #tpu.pipeline_mode<synchronous>, transform_indices = @transform_19, window_bounds = array<i64: 6, 48>}, {pipeline_mode = #tpu.pipeline_mode<synchronous>, transform_indices = @transform_20, window_bounds = array<i64: 48, 6>}, {pipeline_mode = #tpu.pipeline_mode<synchronous>, transform_indices = @transform_21, window_bounds = array<i64: 3, 48>}, {pipeline_mode = #tpu.pipeline_mode<synchronous>, transform_indices = @transform_22, window_bounds = array<i64: 48, 3>}, {pipeline_mode = #tpu.pipeline_mode<synchronous>, transform_indices = @transform_23, window_bounds = array<i64: 2, 48>}, {pipeline_mode = #tpu.pipeline_mode<synchronous>, transform_indices = @transform_24, window_bounds = array<i64: 2, 1>}, {transform_indices = @transform_25, window_bounds = array<i64: 2, 128>}]} {
    %c0 = arith.constant 0 : index
    %c0_0 = arith.constant 0 : index
    %0 = vector.load %arg22[%c0, %c0_0] : memref<3x48xf32, #tpu.memory_space<vmem>>, vector<3x48xf32>
    %c0_1 = arith.constant 0 : index
    %c0_2 = arith.constant 0 : index
    %1 = vector.load %arg23[%c0_1, %c0_2] : memref<48x3xf32, #tpu.memory_space<vmem>>, vector<48x3xf32>
    %c0_3 = arith.constant 0 : index
    %c0_4 = arith.constant 0 : index
    %2 = vector.load %arg20[%c0_3, %c0_4] : memref<6x48xf32, #tpu.memory_space<vmem>>, vector<6x48xf32>
    %c0_5 = arith.constant 0 : index
    %c0_6 = arith.constant 0 : index
    %3 = vector.load %arg21[%c0_5, %c0_6] : memref<48x6xf32, #tpu.memory_space<vmem>>, vector<48x6xf32>
    %c0_7 = arith.constant 0 : index
    %c0_8 = arith.constant 0 : index
    %4 = vector.load %arg1[%c0_7, %c0_8] : memref<48x128xf32, #tpu.memory_space<vmem>>, vector<48x128xf32>
    %c0_9 = arith.constant 0 : index
    %c0_10 = arith.constant 0 : index
    %5 = vector.load %arg2[%c0_9, %c0_10] : memref<48x1xf32, #tpu.memory_space<vmem>>, vector<48x1xf32>
    %c0_11 = arith.constant 0 : index
    %c0_12 = arith.constant 0 : index
    %6 = vector.load %arg3[%c0_11, %c0_12] : memref<48x1xf32, #tpu.memory_space<vmem>>, vector<48x1xf32>
    %cst = arith.constant dense<0.000000e+00> : vector<3x128xf32>
    %7 = tpu.matmul %0, %4, %cst {dimension_numbers = #tpu.dot_dimension_numbers<[1], [0], [0], [1], [0, 0, 1, 1], [], []>} : vector<3x48xf32>, vector<48x128xf32>, vector<3x128xf32> -> vector<3x128xf32>
    %cst_13 = arith.constant 6.250000e-02 : f32
    %8 = vector.broadcast %cst_13 : f32 to vector<3x128xf32>
    %9 = arith.mulf %7, %8 : vector<3x128xf32>
    %cst_14 = arith.constant dense<0.000000e+00> : vector<48x128xf32>
    %10 = tpu.matmul %1, %9, %cst_14 {dimension_numbers = #tpu.dot_dimension_numbers<[1], [0], [0], [1], [0, 0, 1, 1], [], []>} : vector<48x3xf32>, vector<3x128xf32>, vector<48x128xf32> -> vector<48x128xf32>
    %11 = arith.subf %4, %10 : vector<48x128xf32>
    %12 = arith.mulf %11, %11 : vector<48x128xf32>
    %cst_15 = arith.constant dense<0.000000e+00> : vector<3x128xf32>
    %13 = tpu.matmul %0, %12, %cst_15 {dimension_numbers = #tpu.dot_dimension_numbers<[1], [0], [0], [1], [0, 0, 1, 1], [], []>} : vector<3x48xf32>, vector<48x128xf32>, vector<3x128xf32> -> vector<3x128xf32>
    %cst_16 = arith.constant 6.250000e-02 : f32
    %14 = vector.broadcast %cst_16 : f32 to vector<3x128xf32>
    %15 = arith.mulf %13, %14 : vector<3x128xf32>
    %cst_17 = arith.constant 9.99999996E-13 : f32
    %16 = vector.broadcast %cst_17 : f32 to vector<3x128xf32>
    %17 = arith.addf %15, %16 : vector<3x128xf32>
    %18 = math.rsqrt %17 : vector<3x128xf32>
    %cst_18 = arith.constant dense<0.000000e+00> : vector<48x128xf32>
    %19 = tpu.matmul %1, %18, %cst_18 {dimension_numbers = #tpu.dot_dimension_numbers<[1], [0], [0], [1], [0, 0, 1, 1], [], []>} : vector<48x3xf32>, vector<3x128xf32>, vector<48x128xf32> -> vector<48x128xf32>
    %20 = arith.mulf %11, %19 : vector<48x128xf32>
    %21 = vector.broadcast %5 : vector<48x1xf32> to vector<48x128xf32>
    %22 = arith.mulf %20, %21 : vector<48x128xf32>
    %23 = vector.broadcast %6 : vector<48x1xf32> to vector<48x128xf32>
    %24 = arith.addf %22, %23 : vector<48x128xf32>
    %c0_19 = arith.constant 0 : index
    %c0_20 = arith.constant 0 : index
    %c0_21 = arith.constant 0 : index
    %25 = vector.load %arg4[%c0_19, %c0_20, %c0_21] : memref<2x48x48xf32, #tpu.memory_space<vmem>>, vector<1x48x48xf32>
    %26 = vector.shape_cast %25 : vector<1x48x48xf32> to vector<48x48xf32>
    %cst_22 = arith.constant dense<0.000000e+00> : vector<48x128xf32>
    %27 = tpu.matmul %26, %24, %cst_22 {dimension_numbers = #tpu.dot_dimension_numbers<[1], [0], [0], [1], [0, 0, 1, 1], [], []>} : vector<48x48xf32>, vector<48x128xf32>, vector<48x128xf32> -> vector<48x128xf32>
    %c0_23 = arith.constant 0 : index
    %c0_24 = arith.constant 0 : index
    %c0_25 = arith.constant 0 : index
    %28 = vector.load %arg5[%c0_23, %c0_24, %c0_25] : memref<2x48x1xf32, #tpu.memory_space<vmem>>, vector<1x48x1xf32>
    %29 = vector.shape_cast %28 : vector<1x48x1xf32> to vector<48x1xf32>
    %30 = vector.broadcast %29 : vector<48x1xf32> to vector<48x128xf32>
    %31 = arith.addf %27, %30 : vector<48x128xf32>
    %c0_26 = arith.constant 0 : index
    %c0_27 = arith.constant 0 : index
    %c0_28 = arith.constant 0 : index
    %c0_29 = arith.constant 0 : index
    %32 = vector.load %arg6[%c0_26, %c0_27, %c0_28, %c0_29] : memref<2x3x48x48xf32, #tpu.memory_space<vmem>>, vector<1x1x48x48xf32>
    %33 = vector.shape_cast %32 : vector<1x1x48x48xf32> to vector<48x48xf32>
    %cst_30 = arith.constant dense<0.000000e+00> : vector<48x128xf32>
    %34 = tpu.matmul %33, %24, %cst_30 {dimension_numbers = #tpu.dot_dimension_numbers<[1], [0], [0], [1], [0, 0, 1, 1], [], []>} : vector<48x48xf32>, vector<48x128xf32>, vector<48x128xf32> -> vector<48x128xf32>
    %c0_31 = arith.constant 0 : index
    %c0_32 = arith.constant 0 : index
    %c0_33 = arith.constant 0 : index
    %35 = vector.load %arg7[%c0_31, %c0_32, %c0_33] : memref<2x48x1xf32, #tpu.memory_space<vmem>>, vector<1x48x1xf32>
    %36 = vector.shape_cast %35 : vector<1x48x1xf32> to vector<48x1xf32>
    %37 = vector.broadcast %36 : vector<48x1xf32> to vector<48x128xf32>
    %38 = arith.addf %34, %37 : vector<48x128xf32>
    %39 = arith.mulf %31, %38 : vector<48x128xf32>
    %cst_34 = arith.constant dense<0.000000e+00> : vector<6x128xf32>
    %40 = tpu.matmul %2, %39, %cst_34 {dimension_numbers = #tpu.dot_dimension_numbers<[1], [0], [0], [1], [0, 0, 1, 1], [], []>} : vector<6x48xf32>, vector<48x128xf32>, vector<6x128xf32> -> vector<6x128xf32>
    %c0_35 = arith.constant 0 : index
    %c1 = arith.constant 1 : index
    %c0_36 = arith.constant 0 : index
    %c0_37 = arith.constant 0 : index
    %41 = vector.load %arg6[%c0_35, %c1, %c0_36, %c0_37] : memref<2x3x48x48xf32, #tpu.memory_space<vmem>>, vector<1x1x48x48xf32>
    %42 = vector.shape_cast %41 : vector<1x1x48x48xf32> to vector<48x48xf32>
    %cst_38 = arith.constant dense<0.000000e+00> : vector<48x128xf32>
    %43 = tpu.matmul %42, %24, %cst_38 {dimension_numbers = #tpu.dot_dimension_numbers<[1], [0], [0], [1], [0, 0, 1, 1], [], []>} : vector<48x48xf32>, vector<48x128xf32>, vector<48x128xf32> -> vector<48x128xf32>
    %c0_39 = arith.constant 0 : index
    %c0_40 = arith.constant 0 : index
    %c0_41 = arith.constant 0 : index
    %44 = vector.load %arg7[%c0_39, %c0_40, %c0_41] : memref<2x48x1xf32, #tpu.memory_space<vmem>>, vector<1x48x1xf32>
    %45 = vector.shape_cast %44 : vector<1x48x1xf32> to vector<48x1xf32>
    %46 = vector.broadcast %45 : vector<48x1xf32> to vector<48x128xf32>
    %47 = arith.addf %43, %46 : vector<48x128xf32>
    %48 = arith.mulf %31, %47 : vector<48x128xf32>
    %cst_42 = arith.constant dense<0.000000e+00> : vector<6x128xf32>
    %49 = tpu.matmul %2, %48, %cst_42 {dimension_numbers = #tpu.dot_dimension_numbers<[1], [0], [0], [1], [0, 0, 1, 1], [], []>} : vector<6x48xf32>, vector<48x128xf32>, vector<6x128xf32> -> vector<6x128xf32>
    %c0_43 = arith.constant 0 : index
    %c2 = arith.constant 2 : index
    %c0_44 = arith.constant 0 : index
    %c0_45 = arith.constant 0 : index
    %50 = vector.load %arg6[%c0_43, %c2, %c0_44, %c0_45] : memref<2x3x48x48xf32, #tpu.memory_space<vmem>>, vector<1x1x48x48xf32>
    %51 = vector.shape_cast %50 : vector<1x1x48x48xf32> to vector<48x48xf32>
    %cst_46 = arith.constant dense<0.000000e+00> : vector<48x128xf32>
    %52 = tpu.matmul %51, %24, %cst_46 {dimension_numbers = #tpu.dot_dimension_numbers<[1], [0], [0], [1], [0, 0, 1, 1], [], []>} : vector<48x48xf32>, vector<48x128xf32>, vector<48x128xf32> -> vector<48x128xf32>
    %c0_47 = arith.constant 0 : index
    %c0_48 = arith.constant 0 : index
    %c0_49 = arith.constant 0 : index
    %53 = vector.load %arg7[%c0_47, %c0_48, %c0_49] : memref<2x48x1xf32, #tpu.memory_space<vmem>>, vector<1x48x1xf32>
    %54 = vector.shape_cast %53 : vector<1x48x1xf32> to vector<48x1xf32>
    %55 = vector.broadcast %54 : vector<48x1xf32> to vector<48x128xf32>
    %56 = arith.addf %52, %55 : vector<48x128xf32>
    %57 = arith.mulf %31, %56 : vector<48x128xf32>
    %cst_50 = arith.constant dense<0.000000e+00> : vector<6x128xf32>
    %58 = tpu.matmul %2, %57, %cst_50 {dimension_numbers = #tpu.dot_dimension_numbers<[1], [0], [0], [1], [0, 0, 1, 1], [], []>} : vector<6x48xf32>, vector<48x128xf32>, vector<6x128xf32> -> vector<6x128xf32>
    %59 = arith.maximumf %40, %49 : vector<6x128xf32>
    %60 = arith.maximumf %59, %58 : vector<6x128xf32>
    %61 = arith.subf %40, %60 : vector<6x128xf32>
    %62 = math.exp %61 : vector<6x128xf32>
    %63 = arith.subf %49, %60 : vector<6x128xf32>
    %64 = math.exp %63 : vector<6x128xf32>
    %65 = arith.subf %58, %60 : vector<6x128xf32>
    %66 = math.exp %65 : vector<6x128xf32>
    %67 = arith.addf %62, %64 : vector<6x128xf32>
    %68 = arith.addf %67, %66 : vector<6x128xf32>
    %cst_51 = arith.constant 1.000000e+00 : f32
    %69 = vector.broadcast %cst_51 : f32 to vector<6x128xf32>
    %70 = arith.divf %69, %68 : vector<6x128xf32>
    %c0_52 = arith.constant 0 : index
    %c0_53 = arith.constant 0 : index
    %c0_54 = arith.constant 0 : index
    %c0_55 = arith.constant 0 : index
    %71 = vector.load %arg8[%c0_52, %c0_53, %c0_54, %c0_55] : memref<2x3x48x48xf32, #tpu.memory_space<vmem>>, vector<1x1x48x48xf32>
    %72 = vector.shape_cast %71 : vector<1x1x48x48xf32> to vector<48x48xf32>
    %cst_56 = arith.constant dense<0.000000e+00> : vector<48x128xf32>
    %73 = tpu.matmul %72, %24, %cst_56 {dimension_numbers = #tpu.dot_dimension_numbers<[1], [0], [0], [1], [0, 0, 1, 1], [], []>} : vector<48x48xf32>, vector<48x128xf32>, vector<48x128xf32> -> vector<48x128xf32>
    %c0_57 = arith.constant 0 : index
    %c0_58 = arith.constant 0 : index
    %c0_59 = arith.constant 0 : index
    %74 = vector.load %arg9[%c0_57, %c0_58, %c0_59] : memref<2x48x1xf32, #tpu.memory_space<vmem>>, vector<1x48x1xf32>
    %75 = vector.shape_cast %74 : vector<1x48x1xf32> to vector<48x1xf32>
    %76 = vector.broadcast %75 : vector<48x1xf32> to vector<48x128xf32>
    %77 = arith.addf %73, %76 : vector<48x128xf32>
    %78 = arith.mulf %62, %70 : vector<6x128xf32>
    %cst_60 = arith.constant dense<0.000000e+00> : vector<48x128xf32>
    %79 = tpu.matmul %3, %78, %cst_60 {dimension_numbers = #tpu.dot_dimension_numbers<[1], [0], [0], [1], [0, 0, 1, 1], [], []>} : vector<48x6xf32>, vector<6x128xf32>, vector<48x128xf32> -> vector<48x128xf32>
    %80 = arith.mulf %79, %77 : vector<48x128xf32>
    %c0_61 = arith.constant 0 : index
    %c1_62 = arith.constant 1 : index
    %c0_63 = arith.constant 0 : index
    %c0_64 = arith.constant 0 : index
    %81 = vector.load %arg8[%c0_61, %c1_62, %c0_63, %c0_64] : memref<2x3x48x48xf32, #tpu.memory_space<vmem>>, vector<1x1x48x48xf32>
    %82 = vector.shape_cast %81 : vector<1x1x48x48xf32> to vector<48x48xf32>
    %cst_65 = arith.constant dense<0.000000e+00> : vector<48x128xf32>
    %83 = tpu.matmul %82, %24, %cst_65 {dimension_numbers = #tpu.dot_dimension_numbers<[1], [0], [0], [1], [0, 0, 1, 1], [], []>} : vector<48x48xf32>, vector<48x128xf32>, vector<48x128xf32> -> vector<48x128xf32>
    %c0_66 = arith.constant 0 : index
    %c0_67 = arith.constant 0 : index
    %c0_68 = arith.constant 0 : index
    %84 = vector.load %arg9[%c0_66, %c0_67, %c0_68] : memref<2x48x1xf32, #tpu.memory_space<vmem>>, vector<1x48x1xf32>
    %85 = vector.shape_cast %84 : vector<1x48x1xf32> to vector<48x1xf32>
    %86 = vector.broadcast %85 : vector<48x1xf32> to vector<48x128xf32>
    %87 = arith.addf %83, %86 : vector<48x128xf32>
    %88 = arith.mulf %64, %70 : vector<6x128xf32>
    %cst_69 = arith.constant dense<0.000000e+00> : vector<48x128xf32>
    %89 = tpu.matmul %3, %88, %cst_69 {dimension_numbers = #tpu.dot_dimension_numbers<[1], [0], [0], [1], [0, 0, 1, 1], [], []>} : vector<48x6xf32>, vector<6x128xf32>, vector<48x128xf32> -> vector<48x128xf32>
    %90 = arith.mulf %89, %87 : vector<48x128xf32>
    %91 = arith.addf %80, %90 : vector<48x128xf32>
    %c0_70 = arith.constant 0 : index
    %c2_71 = arith.constant 2 : index
    %c0_72 = arith.constant 0 : index
    %c0_73 = arith.constant 0 : index
    %92 = vector.load %arg8[%c0_70, %c2_71, %c0_72, %c0_73] : memref<2x3x48x48xf32, #tpu.memory_space<vmem>>, vector<1x1x48x48xf32>
    %93 = vector.shape_cast %92 : vector<1x1x48x48xf32> to vector<48x48xf32>
    %cst_74 = arith.constant dense<0.000000e+00> : vector<48x128xf32>
    %94 = tpu.matmul %93, %24, %cst_74 {dimension_numbers = #tpu.dot_dimension_numbers<[1], [0], [0], [1], [0, 0, 1, 1], [], []>} : vector<48x48xf32>, vector<48x128xf32>, vector<48x128xf32> -> vector<48x128xf32>
    %c0_75 = arith.constant 0 : index
    %c0_76 = arith.constant 0 : index
    %c0_77 = arith.constant 0 : index
    %95 = vector.load %arg9[%c0_75, %c0_76, %c0_77] : memref<2x48x1xf32, #tpu.memory_space<vmem>>, vector<1x48x1xf32>
    %96 = vector.shape_cast %95 : vector<1x48x1xf32> to vector<48x1xf32>
    %97 = vector.broadcast %96 : vector<48x1xf32> to vector<48x128xf32>
    %98 = arith.addf %94, %97 : vector<48x128xf32>
    %99 = arith.mulf %66, %70 : vector<6x128xf32>
    %cst_78 = arith.constant dense<0.000000e+00> : vector<48x128xf32>
    %100 = tpu.matmul %3, %99, %cst_78 {dimension_numbers = #tpu.dot_dimension_numbers<[1], [0], [0], [1], [0, 0, 1, 1], [], []>} : vector<48x6xf32>, vector<6x128xf32>, vector<48x128xf32> -> vector<48x128xf32>
    %101 = arith.mulf %100, %98 : vector<48x128xf32>
    %102 = arith.addf %91, %101 : vector<48x128xf32>
    %c0_79 = arith.constant 0 : index
    %c0_80 = arith.constant 0 : index
    %c0_81 = arith.constant 0 : index
    %103 = vector.load %arg10[%c0_79, %c0_80, %c0_81] : memref<2x48x48xf32, #tpu.memory_space<vmem>>, vector<1x48x48xf32>
    %104 = vector.shape_cast %103 : vector<1x48x48xf32> to vector<48x48xf32>
    %cst_82 = arith.constant dense<0.000000e+00> : vector<48x128xf32>
    %105 = tpu.matmul %104, %102, %cst_82 {dimension_numbers = #tpu.dot_dimension_numbers<[1], [0], [0], [1], [0, 0, 1, 1], [], []>} : vector<48x48xf32>, vector<48x128xf32>, vector<48x128xf32> -> vector<48x128xf32>
    %c0_83 = arith.constant 0 : index
    %c0_84 = arith.constant 0 : index
    %c0_85 = arith.constant 0 : index
    %106 = vector.load %arg11[%c0_83, %c0_84, %c0_85] : memref<2x48x1xf32, #tpu.memory_space<vmem>>, vector<1x48x1xf32>
    %107 = vector.shape_cast %106 : vector<1x48x1xf32> to vector<48x1xf32>
    %108 = vector.broadcast %107 : vector<48x1xf32> to vector<48x128xf32>
    %109 = arith.addf %105, %108 : vector<48x128xf32>
    %110 = arith.addf %109, %24 : vector<48x128xf32>
    %c0_86 = arith.constant 0 : index
    %c0_87 = arith.constant 0 : index
    %c0_88 = arith.constant 0 : index
    %111 = vector.load %arg12[%c0_86, %c0_87, %c0_88] : memref<2x48x1xf32, #tpu.memory_space<vmem>>, vector<1x48x1xf32>
    %112 = vector.shape_cast %111 : vector<1x48x1xf32> to vector<48x1xf32>
    %c0_89 = arith.constant 0 : index
    %c0_90 = arith.constant 0 : index
    %c0_91 = arith.constant 0 : index
    %113 = vector.load %arg13[%c0_89, %c0_90, %c0_91] : memref<2x48x1xf32, #tpu.memory_space<vmem>>, vector<1x48x1xf32>
    %114 = vector.shape_cast %113 : vector<1x48x1xf32> to vector<48x1xf32>
    %cst_92 = arith.constant dense<0.000000e+00> : vector<3x128xf32>
    %115 = tpu.matmul %0, %110, %cst_92 {dimension_numbers = #tpu.dot_dimension_numbers<[1], [0], [0], [1], [0, 0, 1, 1], [], []>} : vector<3x48xf32>, vector<48x128xf32>, vector<3x128xf32> -> vector<3x128xf32>
    %cst_93 = arith.constant 6.250000e-02 : f32
    %116 = vector.broadcast %cst_93 : f32 to vector<3x128xf32>
    %117 = arith.mulf %115, %116 : vector<3x128xf32>
    %cst_94 = arith.constant dense<0.000000e+00> : vector<48x128xf32>
    %118 = tpu.matmul %1, %117, %cst_94 {dimension_numbers = #tpu.dot_dimension_numbers<[1], [0], [0], [1], [0, 0, 1, 1], [], []>} : vector<48x3xf32>, vector<3x128xf32>, vector<48x128xf32> -> vector<48x128xf32>
    %119 = arith.subf %110, %118 : vector<48x128xf32>
    %120 = arith.mulf %119, %119 : vector<48x128xf32>
    %cst_95 = arith.constant dense<0.000000e+00> : vector<3x128xf32>
    %121 = tpu.matmul %0, %120, %cst_95 {dimension_numbers = #tpu.dot_dimension_numbers<[1], [0], [0], [1], [0, 0, 1, 1], [], []>} : vector<3x48xf32>, vector<48x128xf32>, vector<3x128xf32> -> vector<3x128xf32>
    %cst_96 = arith.constant 6.250000e-02 : f32
    %122 = vector.broadcast %cst_96 : f32 to vector<3x128xf32>
    %123 = arith.mulf %121, %122 : vector<3x128xf32>
    %cst_97 = arith.constant 9.99999996E-13 : f32
    %124 = vector.broadcast %cst_97 : f32 to vector<3x128xf32>
    %125 = arith.addf %123, %124 : vector<3x128xf32>
    %126 = math.rsqrt %125 : vector<3x128xf32>
    %cst_98 = arith.constant dense<0.000000e+00> : vector<48x128xf32>
    %127 = tpu.matmul %1, %126, %cst_98 {dimension_numbers = #tpu.dot_dimension_numbers<[1], [0], [0], [1], [0, 0, 1, 1], [], []>} : vector<48x3xf32>, vector<3x128xf32>, vector<48x128xf32> -> vector<48x128xf32>
    %128 = arith.mulf %119, %127 : vector<48x128xf32>
    %129 = vector.broadcast %112 : vector<48x1xf32> to vector<48x128xf32>
    %130 = arith.mulf %128, %129 : vector<48x128xf32>
    %131 = vector.broadcast %114 : vector<48x1xf32> to vector<48x128xf32>
    %132 = arith.addf %130, %131 : vector<48x128xf32>
    %c0_99 = arith.constant 0 : index
    %c0_100 = arith.constant 0 : index
    %c0_101 = arith.constant 0 : index
    %133 = vector.load %arg14[%c0_99, %c0_100, %c0_101] : memref<2x96x48xf32, #tpu.memory_space<vmem>>, vector<1x96x48xf32>
    %134 = vector.shape_cast %133 : vector<1x96x48xf32> to vector<96x48xf32>
    %cst_102 = arith.constant dense<0.000000e+00> : vector<96x128xf32>
    %135 = tpu.matmul %134, %132, %cst_102 {dimension_numbers = #tpu.dot_dimension_numbers<[1], [0], [0], [1], [0, 0, 1, 1], [], []>} : vector<96x48xf32>, vector<48x128xf32>, vector<96x128xf32> -> vector<96x128xf32>
    %c0_103 = arith.constant 0 : index
    %c0_104 = arith.constant 0 : index
    %c0_105 = arith.constant 0 : index
    %136 = vector.load %arg15[%c0_103, %c0_104, %c0_105] : memref<2x96x1xf32, #tpu.memory_space<vmem>>, vector<1x96x1xf32>
    %137 = vector.shape_cast %136 : vector<1x96x1xf32> to vector<96x1xf32>
    %138 = vector.broadcast %137 : vector<96x1xf32> to vector<96x128xf32>
    %139 = arith.addf %135, %138 : vector<96x128xf32>
    %cst_106 = arith.constant 5.000000e-01 : f32
    %140 = vector.broadcast %cst_106 : f32 to vector<96x128xf32>
    %141 = arith.mulf %139, %140 : vector<96x128xf32>
    %cst_107 = arith.constant 0.707106769 : f32
    %142 = vector.broadcast %cst_107 : f32 to vector<96x128xf32>
    %143 = arith.mulf %139, %142 : vector<96x128xf32>
    %144 = math.absf %143 : vector<96x128xf32>
    %cst_108 = arith.constant 0.327591091 : f32
    %145 = vector.broadcast %cst_108 : f32 to vector<96x128xf32>
    %146 = arith.mulf %145, %144 : vector<96x128xf32>
    %cst_109 = arith.constant 1.000000e+00 : f32
    %147 = vector.broadcast %cst_109 : f32 to vector<96x128xf32>
    %148 = arith.addf %147, %146 : vector<96x128xf32>
    %cst_110 = arith.constant 1.000000e+00 : f32
    %149 = vector.broadcast %cst_110 : f32 to vector<96x128xf32>
    %150 = arith.divf %149, %148 : vector<96x128xf32>
    %cst_111 = arith.constant 1.06140542 : f32
    %151 = vector.broadcast %cst_111 : f32 to vector<96x128xf32>
    %152 = arith.mulf %151, %150 : vector<96x128xf32>
    %cst_112 = arith.constant -1.45315206 : f32
    %153 = vector.broadcast %cst_112 : f32 to vector<96x128xf32>
    %154 = arith.addf %152, %153 : vector<96x128xf32>
    %155 = arith.mulf %154, %150 : vector<96x128xf32>
    %cst_113 = arith.constant 1.42141378 : f32
    %156 = vector.broadcast %cst_113 : f32 to vector<96x128xf32>
    %157 = arith.addf %155, %156 : vector<96x128xf32>
    %158 = arith.mulf %157, %150 : vector<96x128xf32>
    %cst_114 = arith.constant -0.284496725 : f32
    %159 = vector.broadcast %cst_114 : f32 to vector<96x128xf32>
    %160 = arith.addf %158, %159 : vector<96x128xf32>
    %161 = arith.mulf %160, %150 : vector<96x128xf32>
    %cst_115 = arith.constant 0.254829586 : f32
    %162 = vector.broadcast %cst_115 : f32 to vector<96x128xf32>
    %163 = arith.addf %161, %162 : vector<96x128xf32>
    %164 = arith.mulf %163, %150 : vector<96x128xf32>
    %cst_116 = arith.constant 0.000000e+00 : f32
    %165 = vector.broadcast %cst_116 : f32 to vector<96x128xf32>
    %166 = arith.subf %165, %144 : vector<96x128xf32>
    %167 = arith.mulf %166, %144 : vector<96x128xf32>
    %168 = math.exp %167 : vector<96x128xf32>
    %169 = arith.mulf %164, %168 : vector<96x128xf32>
    %cst_117 = arith.constant 1.000000e+00 : f32
    %170 = vector.broadcast %cst_117 : f32 to vector<96x128xf32>
    %171 = arith.subf %170, %169 : vector<96x128xf32>
    %cst_118 = arith.constant 0.000000e+00 : f32
    %172 = vector.broadcast %cst_118 : f32 to vector<96x128xf32>
    %173 = arith.cmpf olt, %143, %172 : vector<96x128xf32>
    %cst_119 = arith.constant 0.000000e+00 : f32
    %174 = vector.broadcast %cst_119 : f32 to vector<96x128xf32>
    %175 = arith.subf %174, %171 : vector<96x128xf32>
    %176 = arith.select %173, %175, %171 : vector<96x128xi1>, vector<96x128xf32>
    %cst_120 = arith.constant 1.000000e+00 : f32
    %177 = vector.broadcast %cst_120 : f32 to vector<96x128xf32>
    %178 = arith.addf %177, %176 : vector<96x128xf32>
    %179 = arith.mulf %141, %178 : vector<96x128xf32>
    %c0_121 = arith.constant 0 : index
    %c0_122 = arith.constant 0 : index
    %c0_123 = arith.constant 0 : index
    %180 = vector.load %arg16[%c0_121, %c0_122, %c0_123] : memref<2x48x96xf32, #tpu.memory_space<vmem>>, vector<1x48x96xf32>
    %181 = vector.shape_cast %180 : vector<1x48x96xf32> to vector<48x96xf32>
    %cst_124 = arith.constant dense<0.000000e+00> : vector<48x128xf32>
    %182 = tpu.matmul %181, %179, %cst_124 {dimension_numbers = #tpu.dot_dimension_numbers<[1], [0], [0], [1], [0, 0, 1, 1], [], []>} : vector<48x96xf32>, vector<96x128xf32>, vector<48x128xf32> -> vector<48x128xf32>
    %c0_125 = arith.constant 0 : index
    %c0_126 = arith.constant 0 : index
    %c0_127 = arith.constant 0 : index
    %183 = vector.load %arg17[%c0_125, %c0_126, %c0_127] : memref<2x48x1xf32, #tpu.memory_space<vmem>>, vector<1x48x1xf32>
    %184 = vector.shape_cast %183 : vector<1x48x1xf32> to vector<48x1xf32>
    %185 = vector.broadcast %184 : vector<48x1xf32> to vector<48x128xf32>
    %186 = arith.addf %182, %185 : vector<48x128xf32>
    %187 = arith.addf %186, %132 : vector<48x128xf32>
    %c0_128 = arith.constant 0 : index
    %c0_129 = arith.constant 0 : index
    %c0_130 = arith.constant 0 : index
    %188 = vector.load %arg18[%c0_128, %c0_129, %c0_130] : memref<2x48x1xf32, #tpu.memory_space<vmem>>, vector<1x48x1xf32>
    %189 = vector.shape_cast %188 : vector<1x48x1xf32> to vector<48x1xf32>
    %c0_131 = arith.constant 0 : index
    %c0_132 = arith.constant 0 : index
    %c0_133 = arith.constant 0 : index
    %190 = vector.load %arg19[%c0_131, %c0_132, %c0_133] : memref<2x48x1xf32, #tpu.memory_space<vmem>>, vector<1x48x1xf32>
    %191 = vector.shape_cast %190 : vector<1x48x1xf32> to vector<48x1xf32>
    %cst_134 = arith.constant dense<0.000000e+00> : vector<3x128xf32>
    %192 = tpu.matmul %0, %187, %cst_134 {dimension_numbers = #tpu.dot_dimension_numbers<[1], [0], [0], [1], [0, 0, 1, 1], [], []>} : vector<3x48xf32>, vector<48x128xf32>, vector<3x128xf32> -> vector<3x128xf32>
    %cst_135 = arith.constant 6.250000e-02 : f32
    %193 = vector.broadcast %cst_135 : f32 to vector<3x128xf32>
    %194 = arith.mulf %192, %193 : vector<3x128xf32>
    %cst_136 = arith.constant dense<0.000000e+00> : vector<48x128xf32>
    %195 = tpu.matmul %1, %194, %cst_136 {dimension_numbers = #tpu.dot_dimension_numbers<[1], [0], [0], [1], [0, 0, 1, 1], [], []>} : vector<48x3xf32>, vector<3x128xf32>, vector<48x128xf32> -> vector<48x128xf32>
    %196 = arith.subf %187, %195 : vector<48x128xf32>
    %197 = arith.mulf %196, %196 : vector<48x128xf32>
    %cst_137 = arith.constant dense<0.000000e+00> : vector<3x128xf32>
    %198 = tpu.matmul %0, %197, %cst_137 {dimension_numbers = #tpu.dot_dimension_numbers<[1], [0], [0], [1], [0, 0, 1, 1], [], []>} : vector<3x48xf32>, vector<48x128xf32>, vector<3x128xf32> -> vector<3x128xf32>
    %cst_138 = arith.constant 6.250000e-02 : f32
    %199 = vector.broadcast %cst_138 : f32 to vector<3x128xf32>
    %200 = arith.mulf %198, %199 : vector<3x128xf32>
    %cst_139 = arith.constant 9.99999996E-13 : f32
    %201 = vector.broadcast %cst_139 : f32 to vector<3x128xf32>
    %202 = arith.addf %200, %201 : vector<3x128xf32>
    %203 = math.rsqrt %202 : vector<3x128xf32>
    %cst_140 = arith.constant dense<0.000000e+00> : vector<48x128xf32>
    %204 = tpu.matmul %1, %203, %cst_140 {dimension_numbers = #tpu.dot_dimension_numbers<[1], [0], [0], [1], [0, 0, 1, 1], [], []>} : vector<48x3xf32>, vector<3x128xf32>, vector<48x128xf32> -> vector<48x128xf32>
    %205 = arith.mulf %196, %204 : vector<48x128xf32>
    %206 = vector.broadcast %189 : vector<48x1xf32> to vector<48x128xf32>
    %207 = arith.mulf %205, %206 : vector<48x128xf32>
    %208 = vector.broadcast %191 : vector<48x1xf32> to vector<48x128xf32>
    %209 = arith.addf %207, %208 : vector<48x128xf32>
    %c1_141 = arith.constant 1 : index
    %c0_142 = arith.constant 0 : index
    %c0_143 = arith.constant 0 : index
    %210 = vector.load %arg4[%c1_141, %c0_142, %c0_143] : memref<2x48x48xf32, #tpu.memory_space<vmem>>, vector<1x48x48xf32>
    %211 = vector.shape_cast %210 : vector<1x48x48xf32> to vector<48x48xf32>
    %cst_144 = arith.constant dense<0.000000e+00> : vector<48x128xf32>
    %212 = tpu.matmul %211, %209, %cst_144 {dimension_numbers = #tpu.dot_dimension_numbers<[1], [0], [0], [1], [0, 0, 1, 1], [], []>} : vector<48x48xf32>, vector<48x128xf32>, vector<48x128xf32> -> vector<48x128xf32>
    %c1_145 = arith.constant 1 : index
    %c0_146 = arith.constant 0 : index
    %c0_147 = arith.constant 0 : index
    %213 = vector.load %arg5[%c1_145, %c0_146, %c0_147] : memref<2x48x1xf32, #tpu.memory_space<vmem>>, vector<1x48x1xf32>
    %214 = vector.shape_cast %213 : vector<1x48x1xf32> to vector<48x1xf32>
    %215 = vector.broadcast %214 : vector<48x1xf32> to vector<48x128xf32>
    %216 = arith.addf %212, %215 : vector<48x128xf32>
    %c1_148 = arith.constant 1 : index
    %c0_149 = arith.constant 0 : index
    %c0_150 = arith.constant 0 : index
    %c0_151 = arith.constant 0 : index
    %217 = vector.load %arg6[%c1_148, %c0_149, %c0_150, %c0_151] : memref<2x3x48x48xf32, #tpu.memory_space<vmem>>, vector<1x1x48x48xf32>
    %218 = vector.shape_cast %217 : vector<1x1x48x48xf32> to vector<48x48xf32>
    %cst_152 = arith.constant dense<0.000000e+00> : vector<48x128xf32>
    %219 = tpu.matmul %218, %209, %cst_152 {dimension_numbers = #tpu.dot_dimension_numbers<[1], [0], [0], [1], [0, 0, 1, 1], [], []>} : vector<48x48xf32>, vector<48x128xf32>, vector<48x128xf32> -> vector<48x128xf32>
    %c1_153 = arith.constant 1 : index
    %c0_154 = arith.constant 0 : index
    %c0_155 = arith.constant 0 : index
    %220 = vector.load %arg7[%c1_153, %c0_154, %c0_155] : memref<2x48x1xf32, #tpu.memory_space<vmem>>, vector<1x48x1xf32>
    %221 = vector.shape_cast %220 : vector<1x48x1xf32> to vector<48x1xf32>
    %222 = vector.broadcast %221 : vector<48x1xf32> to vector<48x128xf32>
    %223 = arith.addf %219, %222 : vector<48x128xf32>
    %224 = arith.mulf %216, %223 : vector<48x128xf32>
    %cst_156 = arith.constant dense<0.000000e+00> : vector<6x128xf32>
    %225 = tpu.matmul %2, %224, %cst_156 {dimension_numbers = #tpu.dot_dimension_numbers<[1], [0], [0], [1], [0, 0, 1, 1], [], []>} : vector<6x48xf32>, vector<48x128xf32>, vector<6x128xf32> -> vector<6x128xf32>
    %c1_157 = arith.constant 1 : index
    %c1_158 = arith.constant 1 : index
    %c0_159 = arith.constant 0 : index
    %c0_160 = arith.constant 0 : index
    %226 = vector.load %arg6[%c1_157, %c1_158, %c0_159, %c0_160] : memref<2x3x48x48xf32, #tpu.memory_space<vmem>>, vector<1x1x48x48xf32>
    %227 = vector.shape_cast %226 : vector<1x1x48x48xf32> to vector<48x48xf32>
    %cst_161 = arith.constant dense<0.000000e+00> : vector<48x128xf32>
    %228 = tpu.matmul %227, %209, %cst_161 {dimension_numbers = #tpu.dot_dimension_numbers<[1], [0], [0], [1], [0, 0, 1, 1], [], []>} : vector<48x48xf32>, vector<48x128xf32>, vector<48x128xf32> -> vector<48x128xf32>
    %c1_162 = arith.constant 1 : index
    %c0_163 = arith.constant 0 : index
    %c0_164 = arith.constant 0 : index
    %229 = vector.load %arg7[%c1_162, %c0_163, %c0_164] : memref<2x48x1xf32, #tpu.memory_space<vmem>>, vector<1x48x1xf32>
    %230 = vector.shape_cast %229 : vector<1x48x1xf32> to vector<48x1xf32>
    %231 = vector.broadcast %230 : vector<48x1xf32> to vector<48x128xf32>
    %232 = arith.addf %228, %231 : vector<48x128xf32>
    %233 = arith.mulf %216, %232 : vector<48x128xf32>
    %cst_165 = arith.constant dense<0.000000e+00> : vector<6x128xf32>
    %234 = tpu.matmul %2, %233, %cst_165 {dimension_numbers = #tpu.dot_dimension_numbers<[1], [0], [0], [1], [0, 0, 1, 1], [], []>} : vector<6x48xf32>, vector<48x128xf32>, vector<6x128xf32> -> vector<6x128xf32>
    %c1_166 = arith.constant 1 : index
    %c2_167 = arith.constant 2 : index
    %c0_168 = arith.constant 0 : index
    %c0_169 = arith.constant 0 : index
    %235 = vector.load %arg6[%c1_166, %c2_167, %c0_168, %c0_169] : memref<2x3x48x48xf32, #tpu.memory_space<vmem>>, vector<1x1x48x48xf32>
    %236 = vector.shape_cast %235 : vector<1x1x48x48xf32> to vector<48x48xf32>
    %cst_170 = arith.constant dense<0.000000e+00> : vector<48x128xf32>
    %237 = tpu.matmul %236, %209, %cst_170 {dimension_numbers = #tpu.dot_dimension_numbers<[1], [0], [0], [1], [0, 0, 1, 1], [], []>} : vector<48x48xf32>, vector<48x128xf32>, vector<48x128xf32> -> vector<48x128xf32>
    %c1_171 = arith.constant 1 : index
    %c0_172 = arith.constant 0 : index
    %c0_173 = arith.constant 0 : index
    %238 = vector.load %arg7[%c1_171, %c0_172, %c0_173] : memref<2x48x1xf32, #tpu.memory_space<vmem>>, vector<1x48x1xf32>
    %239 = vector.shape_cast %238 : vector<1x48x1xf32> to vector<48x1xf32>
    %240 = vector.broadcast %239 : vector<48x1xf32> to vector<48x128xf32>
    %241 = arith.addf %237, %240 : vector<48x128xf32>
    %242 = arith.mulf %216, %241 : vector<48x128xf32>
    %cst_174 = arith.constant dense<0.000000e+00> : vector<6x128xf32>
    %243 = tpu.matmul %2, %242, %cst_174 {dimension_numbers = #tpu.dot_dimension_numbers<[1], [0], [0], [1], [0, 0, 1, 1], [], []>} : vector<6x48xf32>, vector<48x128xf32>, vector<6x128xf32> -> vector<6x128xf32>
    %244 = arith.maximumf %225, %234 : vector<6x128xf32>
    %245 = arith.maximumf %244, %243 : vector<6x128xf32>
    %246 = arith.subf %225, %245 : vector<6x128xf32>
    %247 = math.exp %246 : vector<6x128xf32>
    %248 = arith.subf %234, %245 : vector<6x128xf32>
    %249 = math.exp %248 : vector<6x128xf32>
    %250 = arith.subf %243, %245 : vector<6x128xf32>
    %251 = math.exp %250 : vector<6x128xf32>
    %252 = arith.addf %247, %249 : vector<6x128xf32>
    %253 = arith.addf %252, %251 : vector<6x128xf32>
    %cst_175 = arith.constant 1.000000e+00 : f32
    %254 = vector.broadcast %cst_175 : f32 to vector<6x128xf32>
    %255 = arith.divf %254, %253 : vector<6x128xf32>
    %c1_176 = arith.constant 1 : index
    %c0_177 = arith.constant 0 : index
    %c0_178 = arith.constant 0 : index
    %c0_179 = arith.constant 0 : index
    %256 = vector.load %arg8[%c1_176, %c0_177, %c0_178, %c0_179] : memref<2x3x48x48xf32, #tpu.memory_space<vmem>>, vector<1x1x48x48xf32>
    %257 = vector.shape_cast %256 : vector<1x1x48x48xf32> to vector<48x48xf32>
    %cst_180 = arith.constant dense<0.000000e+00> : vector<48x128xf32>
    %258 = tpu.matmul %257, %209, %cst_180 {dimension_numbers = #tpu.dot_dimension_numbers<[1], [0], [0], [1], [0, 0, 1, 1], [], []>} : vector<48x48xf32>, vector<48x128xf32>, vector<48x128xf32> -> vector<48x128xf32>
    %c1_181 = arith.constant 1 : index
    %c0_182 = arith.constant 0 : index
    %c0_183 = arith.constant 0 : index
    %259 = vector.load %arg9[%c1_181, %c0_182, %c0_183] : memref<2x48x1xf32, #tpu.memory_space<vmem>>, vector<1x48x1xf32>
    %260 = vector.shape_cast %259 : vector<1x48x1xf32> to vector<48x1xf32>
    %261 = vector.broadcast %260 : vector<48x1xf32> to vector<48x128xf32>
    %262 = arith.addf %258, %261 : vector<48x128xf32>
    %263 = arith.mulf %247, %255 : vector<6x128xf32>
    %cst_184 = arith.constant dense<0.000000e+00> : vector<48x128xf32>
    %264 = tpu.matmul %3, %263, %cst_184 {dimension_numbers = #tpu.dot_dimension_numbers<[1], [0], [0], [1], [0, 0, 1, 1], [], []>} : vector<48x6xf32>, vector<6x128xf32>, vector<48x128xf32> -> vector<48x128xf32>
    %265 = arith.mulf %264, %262 : vector<48x128xf32>
    %c1_185 = arith.constant 1 : index
    %c1_186 = arith.constant 1 : index
    %c0_187 = arith.constant 0 : index
    %c0_188 = arith.constant 0 : index
    %266 = vector.load %arg8[%c1_185, %c1_186, %c0_187, %c0_188] : memref<2x3x48x48xf32, #tpu.memory_space<vmem>>, vector<1x1x48x48xf32>
    %267 = vector.shape_cast %266 : vector<1x1x48x48xf32> to vector<48x48xf32>
    %cst_189 = arith.constant dense<0.000000e+00> : vector<48x128xf32>
    %268 = tpu.matmul %267, %209, %cst_189 {dimension_numbers = #tpu.dot_dimension_numbers<[1], [0], [0], [1], [0, 0, 1, 1], [], []>} : vector<48x48xf32>, vector<48x128xf32>, vector<48x128xf32> -> vector<48x128xf32>
    %c1_190 = arith.constant 1 : index
    %c0_191 = arith.constant 0 : index
    %c0_192 = arith.constant 0 : index
    %269 = vector.load %arg9[%c1_190, %c0_191, %c0_192] : memref<2x48x1xf32, #tpu.memory_space<vmem>>, vector<1x48x1xf32>
    %270 = vector.shape_cast %269 : vector<1x48x1xf32> to vector<48x1xf32>
    %271 = vector.broadcast %270 : vector<48x1xf32> to vector<48x128xf32>
    %272 = arith.addf %268, %271 : vector<48x128xf32>
    %273 = arith.mulf %249, %255 : vector<6x128xf32>
    %cst_193 = arith.constant dense<0.000000e+00> : vector<48x128xf32>
    %274 = tpu.matmul %3, %273, %cst_193 {dimension_numbers = #tpu.dot_dimension_numbers<[1], [0], [0], [1], [0, 0, 1, 1], [], []>} : vector<48x6xf32>, vector<6x128xf32>, vector<48x128xf32> -> vector<48x128xf32>
    %275 = arith.mulf %274, %272 : vector<48x128xf32>
    %276 = arith.addf %265, %275 : vector<48x128xf32>
    %c1_194 = arith.constant 1 : index
    %c2_195 = arith.constant 2 : index
    %c0_196 = arith.constant 0 : index
    %c0_197 = arith.constant 0 : index
    %277 = vector.load %arg8[%c1_194, %c2_195, %c0_196, %c0_197] : memref<2x3x48x48xf32, #tpu.memory_space<vmem>>, vector<1x1x48x48xf32>
    %278 = vector.shape_cast %277 : vector<1x1x48x48xf32> to vector<48x48xf32>
    %cst_198 = arith.constant dense<0.000000e+00> : vector<48x128xf32>
    %279 = tpu.matmul %278, %209, %cst_198 {dimension_numbers = #tpu.dot_dimension_numbers<[1], [0], [0], [1], [0, 0, 1, 1], [], []>} : vector<48x48xf32>, vector<48x128xf32>, vector<48x128xf32> -> vector<48x128xf32>
    %c1_199 = arith.constant 1 : index
    %c0_200 = arith.constant 0 : index
    %c0_201 = arith.constant 0 : index
    %280 = vector.load %arg9[%c1_199, %c0_200, %c0_201] : memref<2x48x1xf32, #tpu.memory_space<vmem>>, vector<1x48x1xf32>
    %281 = vector.shape_cast %280 : vector<1x48x1xf32> to vector<48x1xf32>
    %282 = vector.broadcast %281 : vector<48x1xf32> to vector<48x128xf32>
    %283 = arith.addf %279, %282 : vector<48x128xf32>
    %284 = arith.mulf %251, %255 : vector<6x128xf32>
    %cst_202 = arith.constant dense<0.000000e+00> : vector<48x128xf32>
    %285 = tpu.matmul %3, %284, %cst_202 {dimension_numbers = #tpu.dot_dimension_numbers<[1], [0], [0], [1], [0, 0, 1, 1], [], []>} : vector<48x6xf32>, vector<6x128xf32>, vector<48x128xf32> -> vector<48x128xf32>
    %286 = arith.mulf %285, %283 : vector<48x128xf32>
    %287 = arith.addf %276, %286 : vector<48x128xf32>
    %c1_203 = arith.constant 1 : index
    %c0_204 = arith.constant 0 : index
    %c0_205 = arith.constant 0 : index
    %288 = vector.load %arg10[%c1_203, %c0_204, %c0_205] : memref<2x48x48xf32, #tpu.memory_space<vmem>>, vector<1x48x48xf32>
    %289 = vector.shape_cast %288 : vector<1x48x48xf32> to vector<48x48xf32>
    %cst_206 = arith.constant dense<0.000000e+00> : vector<48x128xf32>
    %290 = tpu.matmul %289, %287, %cst_206 {dimension_numbers = #tpu.dot_dimension_numbers<[1], [0], [0], [1], [0, 0, 1, 1], [], []>} : vector<48x48xf32>, vector<48x128xf32>, vector<48x128xf32> -> vector<48x128xf32>
    %c1_207 = arith.constant 1 : index
    %c0_208 = arith.constant 0 : index
    %c0_209 = arith.constant 0 : index
    %291 = vector.load %arg11[%c1_207, %c0_208, %c0_209] : memref<2x48x1xf32, #tpu.memory_space<vmem>>, vector<1x48x1xf32>
    %292 = vector.shape_cast %291 : vector<1x48x1xf32> to vector<48x1xf32>
    %293 = vector.broadcast %292 : vector<48x1xf32> to vector<48x128xf32>
    %294 = arith.addf %290, %293 : vector<48x128xf32>
    %295 = arith.addf %294, %209 : vector<48x128xf32>
    %c1_210 = arith.constant 1 : index
    %c0_211 = arith.constant 0 : index
    %c0_212 = arith.constant 0 : index
    %296 = vector.load %arg12[%c1_210, %c0_211, %c0_212] : memref<2x48x1xf32, #tpu.memory_space<vmem>>, vector<1x48x1xf32>
    %297 = vector.shape_cast %296 : vector<1x48x1xf32> to vector<48x1xf32>
    %c1_213 = arith.constant 1 : index
    %c0_214 = arith.constant 0 : index
    %c0_215 = arith.constant 0 : index
    %298 = vector.load %arg13[%c1_213, %c0_214, %c0_215] : memref<2x48x1xf32, #tpu.memory_space<vmem>>, vector<1x48x1xf32>
    %299 = vector.shape_cast %298 : vector<1x48x1xf32> to vector<48x1xf32>
    %cst_216 = arith.constant dense<0.000000e+00> : vector<3x128xf32>
    %300 = tpu.matmul %0, %295, %cst_216 {dimension_numbers = #tpu.dot_dimension_numbers<[1], [0], [0], [1], [0, 0, 1, 1], [], []>} : vector<3x48xf32>, vector<48x128xf32>, vector<3x128xf32> -> vector<3x128xf32>
    %cst_217 = arith.constant 6.250000e-02 : f32
    %301 = vector.broadcast %cst_217 : f32 to vector<3x128xf32>
    %302 = arith.mulf %300, %301 : vector<3x128xf32>
    %cst_218 = arith.constant dense<0.000000e+00> : vector<48x128xf32>
    %303 = tpu.matmul %1, %302, %cst_218 {dimension_numbers = #tpu.dot_dimension_numbers<[1], [0], [0], [1], [0, 0, 1, 1], [], []>} : vector<48x3xf32>, vector<3x128xf32>, vector<48x128xf32> -> vector<48x128xf32>
    %304 = arith.subf %295, %303 : vector<48x128xf32>
    %305 = arith.mulf %304, %304 : vector<48x128xf32>
    %cst_219 = arith.constant dense<0.000000e+00> : vector<3x128xf32>
    %306 = tpu.matmul %0, %305, %cst_219 {dimension_numbers = #tpu.dot_dimension_numbers<[1], [0], [0], [1], [0, 0, 1, 1], [], []>} : vector<3x48xf32>, vector<48x128xf32>, vector<3x128xf32> -> vector<3x128xf32>
    %cst_220 = arith.constant 6.250000e-02 : f32
    %307 = vector.broadcast %cst_220 : f32 to vector<3x128xf32>
    %308 = arith.mulf %306, %307 : vector<3x128xf32>
    %cst_221 = arith.constant 9.99999996E-13 : f32
    %309 = vector.broadcast %cst_221 : f32 to vector<3x128xf32>
    %310 = arith.addf %308, %309 : vector<3x128xf32>
    %311 = math.rsqrt %310 : vector<3x128xf32>
    %cst_222 = arith.constant dense<0.000000e+00> : vector<48x128xf32>
    %312 = tpu.matmul %1, %311, %cst_222 {dimension_numbers = #tpu.dot_dimension_numbers<[1], [0], [0], [1], [0, 0, 1, 1], [], []>} : vector<48x3xf32>, vector<3x128xf32>, vector<48x128xf32> -> vector<48x128xf32>
    %313 = arith.mulf %304, %312 : vector<48x128xf32>
    %314 = vector.broadcast %297 : vector<48x1xf32> to vector<48x128xf32>
    %315 = arith.mulf %313, %314 : vector<48x128xf32>
    %316 = vector.broadcast %299 : vector<48x1xf32> to vector<48x128xf32>
    %317 = arith.addf %315, %316 : vector<48x128xf32>
    %c1_223 = arith.constant 1 : index
    %c0_224 = arith.constant 0 : index
    %c0_225 = arith.constant 0 : index
    %318 = vector.load %arg14[%c1_223, %c0_224, %c0_225] : memref<2x96x48xf32, #tpu.memory_space<vmem>>, vector<1x96x48xf32>
    %319 = vector.shape_cast %318 : vector<1x96x48xf32> to vector<96x48xf32>
    %cst_226 = arith.constant dense<0.000000e+00> : vector<96x128xf32>
    %320 = tpu.matmul %319, %317, %cst_226 {dimension_numbers = #tpu.dot_dimension_numbers<[1], [0], [0], [1], [0, 0, 1, 1], [], []>} : vector<96x48xf32>, vector<48x128xf32>, vector<96x128xf32> -> vector<96x128xf32>
    %c1_227 = arith.constant 1 : index
    %c0_228 = arith.constant 0 : index
    %c0_229 = arith.constant 0 : index
    %321 = vector.load %arg15[%c1_227, %c0_228, %c0_229] : memref<2x96x1xf32, #tpu.memory_space<vmem>>, vector<1x96x1xf32>
    %322 = vector.shape_cast %321 : vector<1x96x1xf32> to vector<96x1xf32>
    %323 = vector.broadcast %322 : vector<96x1xf32> to vector<96x128xf32>
    %324 = arith.addf %320, %323 : vector<96x128xf32>
    %cst_230 = arith.constant 5.000000e-01 : f32
    %325 = vector.broadcast %cst_230 : f32 to vector<96x128xf32>
    %326 = arith.mulf %324, %325 : vector<96x128xf32>
    %cst_231 = arith.constant 0.707106769 : f32
    %327 = vector.broadcast %cst_231 : f32 to vector<96x128xf32>
    %328 = arith.mulf %324, %327 : vector<96x128xf32>
    %329 = math.absf %328 : vector<96x128xf32>
    %cst_232 = arith.constant 0.327591091 : f32
    %330 = vector.broadcast %cst_232 : f32 to vector<96x128xf32>
    %331 = arith.mulf %330, %329 : vector<96x128xf32>
    %cst_233 = arith.constant 1.000000e+00 : f32
    %332 = vector.broadcast %cst_233 : f32 to vector<96x128xf32>
    %333 = arith.addf %332, %331 : vector<96x128xf32>
    %cst_234 = arith.constant 1.000000e+00 : f32
    %334 = vector.broadcast %cst_234 : f32 to vector<96x128xf32>
    %335 = arith.divf %334, %333 : vector<96x128xf32>
    %cst_235 = arith.constant 1.06140542 : f32
    %336 = vector.broadcast %cst_235 : f32 to vector<96x128xf32>
    %337 = arith.mulf %336, %335 : vector<96x128xf32>
    %cst_236 = arith.constant -1.45315206 : f32
    %338 = vector.broadcast %cst_236 : f32 to vector<96x128xf32>
    %339 = arith.addf %337, %338 : vector<96x128xf32>
    %340 = arith.mulf %339, %335 : vector<96x128xf32>
    %cst_237 = arith.constant 1.42141378 : f32
    %341 = vector.broadcast %cst_237 : f32 to vector<96x128xf32>
    %342 = arith.addf %340, %341 : vector<96x128xf32>
    %343 = arith.mulf %342, %335 : vector<96x128xf32>
    %cst_238 = arith.constant -0.284496725 : f32
    %344 = vector.broadcast %cst_238 : f32 to vector<96x128xf32>
    %345 = arith.addf %343, %344 : vector<96x128xf32>
    %346 = arith.mulf %345, %335 : vector<96x128xf32>
    %cst_239 = arith.constant 0.254829586 : f32
    %347 = vector.broadcast %cst_239 : f32 to vector<96x128xf32>
    %348 = arith.addf %346, %347 : vector<96x128xf32>
    %349 = arith.mulf %348, %335 : vector<96x128xf32>
    %cst_240 = arith.constant 0.000000e+00 : f32
    %350 = vector.broadcast %cst_240 : f32 to vector<96x128xf32>
    %351 = arith.subf %350, %329 : vector<96x128xf32>
    %352 = arith.mulf %351, %329 : vector<96x128xf32>
    %353 = math.exp %352 : vector<96x128xf32>
    %354 = arith.mulf %349, %353 : vector<96x128xf32>
    %cst_241 = arith.constant 1.000000e+00 : f32
    %355 = vector.broadcast %cst_241 : f32 to vector<96x128xf32>
    %356 = arith.subf %355, %354 : vector<96x128xf32>
    %cst_242 = arith.constant 0.000000e+00 : f32
    %357 = vector.broadcast %cst_242 : f32 to vector<96x128xf32>
    %358 = arith.cmpf olt, %328, %357 : vector<96x128xf32>
    %cst_243 = arith.constant 0.000000e+00 : f32
    %359 = vector.broadcast %cst_243 : f32 to vector<96x128xf32>
    %360 = arith.subf %359, %356 : vector<96x128xf32>
    %361 = arith.select %358, %360, %356 : vector<96x128xi1>, vector<96x128xf32>
    %cst_244 = arith.constant 1.000000e+00 : f32
    %362 = vector.broadcast %cst_244 : f32 to vector<96x128xf32>
    %363 = arith.addf %362, %361 : vector<96x128xf32>
    %364 = arith.mulf %326, %363 : vector<96x128xf32>
    %c1_245 = arith.constant 1 : index
    %c0_246 = arith.constant 0 : index
    %c0_247 = arith.constant 0 : index
    %365 = vector.load %arg16[%c1_245, %c0_246, %c0_247] : memref<2x48x96xf32, #tpu.memory_space<vmem>>, vector<1x48x96xf32>
    %366 = vector.shape_cast %365 : vector<1x48x96xf32> to vector<48x96xf32>
    %cst_248 = arith.constant dense<0.000000e+00> : vector<48x128xf32>
    %367 = tpu.matmul %366, %364, %cst_248 {dimension_numbers = #tpu.dot_dimension_numbers<[1], [0], [0], [1], [0, 0, 1, 1], [], []>} : vector<48x96xf32>, vector<96x128xf32>, vector<48x128xf32> -> vector<48x128xf32>
    %c1_249 = arith.constant 1 : index
    %c0_250 = arith.constant 0 : index
    %c0_251 = arith.constant 0 : index
    %368 = vector.load %arg17[%c1_249, %c0_250, %c0_251] : memref<2x48x1xf32, #tpu.memory_space<vmem>>, vector<1x48x1xf32>
    %369 = vector.shape_cast %368 : vector<1x48x1xf32> to vector<48x1xf32>
    %370 = vector.broadcast %369 : vector<48x1xf32> to vector<48x128xf32>
    %371 = arith.addf %367, %370 : vector<48x128xf32>
    %372 = arith.addf %371, %317 : vector<48x128xf32>
    %c1_252 = arith.constant 1 : index
    %c0_253 = arith.constant 0 : index
    %c0_254 = arith.constant 0 : index
    %373 = vector.load %arg18[%c1_252, %c0_253, %c0_254] : memref<2x48x1xf32, #tpu.memory_space<vmem>>, vector<1x48x1xf32>
    %374 = vector.shape_cast %373 : vector<1x48x1xf32> to vector<48x1xf32>
    %c1_255 = arith.constant 1 : index
    %c0_256 = arith.constant 0 : index
    %c0_257 = arith.constant 0 : index
    %375 = vector.load %arg19[%c1_255, %c0_256, %c0_257] : memref<2x48x1xf32, #tpu.memory_space<vmem>>, vector<1x48x1xf32>
    %376 = vector.shape_cast %375 : vector<1x48x1xf32> to vector<48x1xf32>
    %cst_258 = arith.constant dense<0.000000e+00> : vector<3x128xf32>
    %377 = tpu.matmul %0, %372, %cst_258 {dimension_numbers = #tpu.dot_dimension_numbers<[1], [0], [0], [1], [0, 0, 1, 1], [], []>} : vector<3x48xf32>, vector<48x128xf32>, vector<3x128xf32> -> vector<3x128xf32>
    %cst_259 = arith.constant 6.250000e-02 : f32
    %378 = vector.broadcast %cst_259 : f32 to vector<3x128xf32>
    %379 = arith.mulf %377, %378 : vector<3x128xf32>
    %cst_260 = arith.constant dense<0.000000e+00> : vector<48x128xf32>
    %380 = tpu.matmul %1, %379, %cst_260 {dimension_numbers = #tpu.dot_dimension_numbers<[1], [0], [0], [1], [0, 0, 1, 1], [], []>} : vector<48x3xf32>, vector<3x128xf32>, vector<48x128xf32> -> vector<48x128xf32>
    %381 = arith.subf %372, %380 : vector<48x128xf32>
    %382 = arith.mulf %381, %381 : vector<48x128xf32>
    %cst_261 = arith.constant dense<0.000000e+00> : vector<3x128xf32>
    %383 = tpu.matmul %0, %382, %cst_261 {dimension_numbers = #tpu.dot_dimension_numbers<[1], [0], [0], [1], [0, 0, 1, 1], [], []>} : vector<3x48xf32>, vector<48x128xf32>, vector<3x128xf32> -> vector<3x128xf32>
    %cst_262 = arith.constant 6.250000e-02 : f32
    %384 = vector.broadcast %cst_262 : f32 to vector<3x128xf32>
    %385 = arith.mulf %383, %384 : vector<3x128xf32>
    %cst_263 = arith.constant 9.99999996E-13 : f32
    %386 = vector.broadcast %cst_263 : f32 to vector<3x128xf32>
    %387 = arith.addf %385, %386 : vector<3x128xf32>
    %388 = math.rsqrt %387 : vector<3x128xf32>
    %cst_264 = arith.constant dense<0.000000e+00> : vector<48x128xf32>
    %389 = tpu.matmul %1, %388, %cst_264 {dimension_numbers = #tpu.dot_dimension_numbers<[1], [0], [0], [1], [0, 0, 1, 1], [], []>} : vector<48x3xf32>, vector<3x128xf32>, vector<48x128xf32> -> vector<48x128xf32>
    %390 = arith.mulf %381, %389 : vector<48x128xf32>
    %391 = vector.broadcast %374 : vector<48x1xf32> to vector<48x128xf32>
    %392 = arith.mulf %390, %391 : vector<48x128xf32>
    %393 = vector.broadcast %376 : vector<48x1xf32> to vector<48x128xf32>
    %394 = arith.addf %392, %393 : vector<48x128xf32>
    %c0_265 = arith.constant 0 : index
    %c0_266 = arith.constant 0 : index
    %395 = vector.load %arg24[%c0_265, %c0_266] : memref<2x48xf32, #tpu.memory_space<vmem>>, vector<2x48xf32>
    %cst_267 = arith.constant dense<0.000000e+00> : vector<2x128xf32>
    %396 = tpu.matmul %395, %394, %cst_267 {dimension_numbers = #tpu.dot_dimension_numbers<[1], [0], [0], [1], [0, 0, 1, 1], [], []>} : vector<2x48xf32>, vector<48x128xf32>, vector<2x128xf32> -> vector<2x128xf32>
    %c0_268 = arith.constant 0 : index
    %c0_269 = arith.constant 0 : index
    %397 = vector.load %arg25[%c0_268, %c0_269] : memref<2x1xf32, #tpu.memory_space<vmem>>, vector<2x1xf32>
    %398 = vector.broadcast %397 : vector<2x1xf32> to vector<2x128xf32>
    %399 = arith.addf %396, %398 : vector<2x128xf32>
    %c0_270 = arith.constant 0 : index
    %c0_271 = arith.constant 0 : index
    %400 = vector.load %arg26[%c0_270, %c0_271] : memref<2x128xf32, #tpu.memory_space<vmem>>, vector<2x128xf32>
    tpu.vector_store %arg26[%c0_270, %c0_271], %399 {strides = array<i32>} : memref<2x128xf32, #tpu.memory_space<vmem>>, vector<2x128xf32>,
    return
  }
  func.func @transform_0(%arg0: i32) -> (i32, i32) {
    %c0_i32 = arith.constant 0 : i32
    %c0_i32_0 = arith.constant 0 : i32
    return %c0_i32, %arg0 : i32, i32
  }
  func.func @transform_1(%arg0: i32) -> (i32, i32) {
    %c0_i32 = arith.constant 0 : i32
    %c0_i32_0 = arith.constant 0 : i32
    %c0_i32_1 = arith.constant 0 : i32
    return %c0_i32, %c0_i32_0 : i32, i32
  }
  func.func @transform_2(%arg0: i32) -> (i32, i32) {
    %c0_i32 = arith.constant 0 : i32
    %c0_i32_0 = arith.constant 0 : i32
    %c0_i32_1 = arith.constant 0 : i32
    return %c0_i32, %c0_i32_0 : i32, i32
  }
  func.func @transform_3(%arg0: i32) -> (i32, i32, i32) {
    %c0_i32 = arith.constant 0 : i32
    %c0_i32_0 = arith.constant 0 : i32
    %c0_i32_1 = arith.constant 0 : i32
    %c0_i32_2 = arith.constant 0 : i32
    return %c0_i32, %c0_i32_0, %c0_i32_1 : i32, i32, i32
  }
  func.func @transform_4(%arg0: i32) -> (i32, i32, i32) {
    %c0_i32 = arith.constant 0 : i32
    %c0_i32_0 = arith.constant 0 : i32
    %c0_i32_1 = arith.constant 0 : i32
    %c0_i32_2 = arith.constant 0 : i32
    return %c0_i32, %c0_i32_0, %c0_i32_1 : i32, i32, i32
  }
  func.func @transform_5(%arg0: i32) -> (i32, i32, i32, i32) {
    %c0_i32 = arith.constant 0 : i32
    %c0_i32_0 = arith.constant 0 : i32
    %c0_i32_1 = arith.constant 0 : i32
    %c0_i32_2 = arith.constant 0 : i32
    %c0_i32_3 = arith.constant 0 : i32
    return %c0_i32, %c0_i32_0, %c0_i32_1, %c0_i32_2 : i32, i32, i32, i32
  }
  func.func @transform_6(%arg0: i32) -> (i32, i32, i32) {
    %c0_i32 = arith.constant 0 : i32
    %c0_i32_0 = arith.constant 0 : i32
    %c0_i32_1 = arith.constant 0 : i32
    %c0_i32_2 = arith.constant 0 : i32
    return %c0_i32, %c0_i32_0, %c0_i32_1 : i32, i32, i32
  }
  func.func @transform_7(%arg0: i32) -> (i32, i32, i32, i32) {
    %c0_i32 = arith.constant 0 : i32
    %c0_i32_0 = arith.constant 0 : i32
    %c0_i32_1 = arith.constant 0 : i32
    %c0_i32_2 = arith.constant 0 : i32
    %c0_i32_3 = arith.constant 0 : i32
    return %c0_i32, %c0_i32_0, %c0_i32_1, %c0_i32_2 : i32, i32, i32, i32
  }
  func.func @transform_8(%arg0: i32) -> (i32, i32, i32) {
    %c0_i32 = arith.constant 0 : i32
    %c0_i32_0 = arith.constant 0 : i32
    %c0_i32_1 = arith.constant 0 : i32
    %c0_i32_2 = arith.constant 0 : i32
    return %c0_i32, %c0_i32_0, %c0_i32_1 : i32, i32, i32
  }
  func.func @transform_9(%arg0: i32) -> (i32, i32, i32) {
    %c0_i32 = arith.constant 0 : i32
    %c0_i32_0 = arith.constant 0 : i32
    %c0_i32_1 = arith.constant 0 : i32
    %c0_i32_2 = arith.constant 0 : i32
    return %c0_i32, %c0_i32_0, %c0_i32_1 : i32, i32, i32
  }
  func.func @transform_10(%arg0: i32) -> (i32, i32, i32) {
    %c0_i32 = arith.constant 0 : i32
    %c0_i32_0 = arith.constant 0 : i32
    %c0_i32_1 = arith.constant 0 : i32
    %c0_i32_2 = arith.constant 0 : i32
    return %c0_i32, %c0_i32_0, %c0_i32_1 : i32, i32, i32
  }
  func.func @transform_11(%arg0: i32) -> (i32, i32, i32) {
    %c0_i32 = arith.constant 0 : i32
    %c0_i32_0 = arith.constant 0 : i32
    %c0_i32_1 = arith.constant 0 : i32
    %c0_i32_2 = arith.constant 0 : i32
    return %c0_i32, %c0_i32_0, %c0_i32_1 : i32, i32, i32
  }
  func.func @transform_12(%arg0: i32) -> (i32, i32, i32) {
    %c0_i32 = arith.constant 0 : i32
    %c0_i32_0 = arith.constant 0 : i32
    %c0_i32_1 = arith.constant 0 : i32
    %c0_i32_2 = arith.constant 0 : i32
    return %c0_i32, %c0_i32_0, %c0_i32_1 : i32, i32, i32
  }
  func.func @transform_13(%arg0: i32) -> (i32, i32, i32) {
    %c0_i32 = arith.constant 0 : i32
    %c0_i32_0 = arith.constant 0 : i32
    %c0_i32_1 = arith.constant 0 : i32
    %c0_i32_2 = arith.constant 0 : i32
    return %c0_i32, %c0_i32_0, %c0_i32_1 : i32, i32, i32
  }
  func.func @transform_14(%arg0: i32) -> (i32, i32, i32) {
    %c0_i32 = arith.constant 0 : i32
    %c0_i32_0 = arith.constant 0 : i32
    %c0_i32_1 = arith.constant 0 : i32
    %c0_i32_2 = arith.constant 0 : i32
    return %c0_i32, %c0_i32_0, %c0_i32_1 : i32, i32, i32
  }
  func.func @transform_15(%arg0: i32) -> (i32, i32, i32) {
    %c0_i32 = arith.constant 0 : i32
    %c0_i32_0 = arith.constant 0 : i32
    %c0_i32_1 = arith.constant 0 : i32
    %c0_i32_2 = arith.constant 0 : i32
    return %c0_i32, %c0_i32_0, %c0_i32_1 : i32, i32, i32
  }
  func.func @transform_16(%arg0: i32) -> (i32, i32, i32) {
    %c0_i32 = arith.constant 0 : i32
    %c0_i32_0 = arith.constant 0 : i32
    %c0_i32_1 = arith.constant 0 : i32
    %c0_i32_2 = arith.constant 0 : i32
    return %c0_i32, %c0_i32_0, %c0_i32_1 : i32, i32, i32
  }
  func.func @transform_17(%arg0: i32) -> (i32, i32, i32) {
    %c0_i32 = arith.constant 0 : i32
    %c0_i32_0 = arith.constant 0 : i32
    %c0_i32_1 = arith.constant 0 : i32
    %c0_i32_2 = arith.constant 0 : i32
    return %c0_i32, %c0_i32_0, %c0_i32_1 : i32, i32, i32
  }
  func.func @transform_18(%arg0: i32) -> (i32, i32, i32) {
    %c0_i32 = arith.constant 0 : i32
    %c0_i32_0 = arith.constant 0 : i32
    %c0_i32_1 = arith.constant 0 : i32
    %c0_i32_2 = arith.constant 0 : i32
    return %c0_i32, %c0_i32_0, %c0_i32_1 : i32, i32, i32
  }
  func.func @transform_19(%arg0: i32) -> (i32, i32) {
    %c0_i32 = arith.constant 0 : i32
    %c0_i32_0 = arith.constant 0 : i32
    %c0_i32_1 = arith.constant 0 : i32
    return %c0_i32, %c0_i32_0 : i32, i32
  }
  func.func @transform_20(%arg0: i32) -> (i32, i32) {
    %c0_i32 = arith.constant 0 : i32
    %c0_i32_0 = arith.constant 0 : i32
    %c0_i32_1 = arith.constant 0 : i32
    return %c0_i32, %c0_i32_0 : i32, i32
  }
  func.func @transform_21(%arg0: i32) -> (i32, i32) {
    %c0_i32 = arith.constant 0 : i32
    %c0_i32_0 = arith.constant 0 : i32
    %c0_i32_1 = arith.constant 0 : i32
    return %c0_i32, %c0_i32_0 : i32, i32
  }
  func.func @transform_22(%arg0: i32) -> (i32, i32) {
    %c0_i32 = arith.constant 0 : i32
    %c0_i32_0 = arith.constant 0 : i32
    %c0_i32_1 = arith.constant 0 : i32
    return %c0_i32, %c0_i32_0 : i32, i32
  }
  func.func @transform_23(%arg0: i32) -> (i32, i32) {
    %c0_i32 = arith.constant 0 : i32
    %c0_i32_0 = arith.constant 0 : i32
    %c0_i32_1 = arith.constant 0 : i32
    return %c0_i32, %c0_i32_0 : i32, i32
  }
  func.func @transform_24(%arg0: i32) -> (i32, i32) {
    %c0_i32 = arith.constant 0 : i32
    %c0_i32_0 = arith.constant 0 : i32
    %c0_i32_1 = arith.constant 0 : i32
    return %c0_i32, %c0_i32_0 : i32, i32
  }
  func.func @transform_25(%arg0: i32) -> (i32, i32) {
    %c0_i32 = arith.constant 0 : i32
    %c0_i32_0 = arith.constant 0 : i32
    return %c0_i32, %arg0 : i32, i32
  }
}

</mosaic_0001>

<llo_original>
// kernel: tpu_custom_call.1
$region0: #{tpu_custom_call.1}
  #allocation0 [shape = 'u32[]', space=smem, size = 0x4, offset = 0x4, fixed_abs, tag = 'smem constant byte address 0x4 - core index']
  #allocation1 [shape = 'u32[72,128]{1,0:T(1,128)}', space=vmem, size = 0x9000, scoped, tag = 'internal scratch']
  %s0 = inlined_call_operand.vmem [shape: f32[48,128], index: 0, kind: input, shape index: {}]
  %s1 = inlined_call_operand.vmem [shape: f32[48,1], index: 1, kind: input, shape index: {}]
  %s2 = inlined_call_operand.vmem [shape: f32[48,1], index: 2, kind: input, shape index: {}]
  %s3 = inlined_call_operand.vmem [shape: f32[2,48,48], index: 3, kind: input, shape index: {}]
  %s4 = inlined_call_operand.vmem [shape: f32[2,48,1], index: 4, kind: input, shape index: {}]
  %s5 = inlined_call_operand.vmem [shape: f32[2,3,48,48], index: 5, kind: input, shape index: {}]
  %s6 = inlined_call_operand.vmem [shape: f32[2,48,1], index: 6, kind: input, shape index: {}]
  %s7 = inlined_call_operand.vmem [shape: f32[2,3,48,48], index: 7, kind: input, shape index: {}]
  %s8 = inlined_call_operand.vmem [shape: f32[2,48,1], index: 8, kind: input, shape index: {}]
  %s9 = inlined_call_operand.vmem [shape: f32[2,48,48], index: 9, kind: input, shape index: {}]
  %s10 = inlined_call_operand.vmem [shape: f32[2,48,1], index: 10, kind: input, shape index: {}]
  %s11 = inlined_call_operand.vmem [shape: f32[2,48,1], index: 11, kind: input, shape index: {}]
  %s12 = inlined_call_operand.vmem [shape: f32[2,48,1], index: 12, kind: input, shape index: {}]
  %s13 = inlined_call_operand.vmem [shape: f32[2,96,48], index: 13, kind: input, shape index: {}]
  %s14 = inlined_call_operand.vmem [shape: f32[2,96,1], index: 14, kind: input, shape index: {}]
  %s15 = inlined_call_operand.vmem [shape: f32[2,48,96], index: 15, kind: input, shape index: {}]
  %s16 = inlined_call_operand.vmem [shape: f32[2,48,1], index: 16, kind: input, shape index: {}]
  %s17 = inlined_call_operand.vmem [shape: f32[2,48,1], index: 17, kind: input, shape index: {}]
  %s18 = inlined_call_operand.vmem [shape: f32[2,48,1], index: 18, kind: input, shape index: {}]
  %s19 = inlined_call_operand.vmem [shape: f32[6,48], index: 19, kind: input, shape index: {}]
  %s20 = inlined_call_operand.vmem [shape: f32[48,6], index: 20, kind: input, shape index: {}]
  %s21 = inlined_call_operand.vmem [shape: f32[3,48], index: 21, kind: input, shape index: {}]
  %s22 = inlined_call_operand.vmem [shape: f32[48,3], index: 22, kind: input, shape index: {}]
  %s23 = inlined_call_operand.vmem [shape: f32[2,48], index: 23, kind: input, shape index: {}]
  %s24 = inlined_call_operand.vmem [shape: f32[2,1], index: 24, kind: input, shape index: {}]
  %s25 = inlined_call_operand.hbm [shape: f32[2,128], index: 25, kind: output, shape index: {}]
  %s26 = sld [smem:[#allocation0]]
  $region110: #{tpu_custom_call.1} parent=0
    _
  %s28 = ssub.s32 1, %s26
  %s29 = scalar_select 0, %s28, %s26
  $region1: #{tpu_custom_call.1} parent=0
    #allocation2 [shape = 'u8[1024]{0}', space=vmem, size = 0x400, scoped, tag = 'output window, operand 0, single buffered']
    #allocation3 [shape = 's32[1]{0}', space=sflag, size = 0x4, scoped, tag = 'scoped memory for tpu_custom_call.1']
    %30 = vsyncpa [#allocation3], 0
    // Predicated region
    $region2: #{tpu_custom_call.1} parent=1 // pred_check
      _
    $region3: #{tpu_custom_call.1} parent=1 // pred_check_branch
      %32 = sbr.rel (0) target = $region5
    $region4: #{tpu_custom_call.1} parent=1 // pred_region
      _
    $region5: #{tpu_custom_call.1} parent=1 // pred_fallthru
      _
    // Predicated region
    $region6: #{tpu_custom_call.1} parent=1 // pred_check
      _
    $region7: #{tpu_custom_call.1} parent=1 // pred_check_branch
      %34 = sbr.rel (0) target = $region9
    $region8: #{tpu_custom_call.1} parent=1 // pred_region
      _
    $region9: #{tpu_custom_call.1} parent=1 // pred_fallthru
      _
    // Predicated region
    $region10: #{tpu_custom_call.1} parent=1 // pred_check
      _
    $region11: #{tpu_custom_call.1} parent=1 // pred_check_branch
      %36 = sbr.rel (0) target = $region13
    $region12: #{tpu_custom_call.1} parent=1 // pred_region
      _
    $region13: #{tpu_custom_call.1} parent=1 // pred_fallthru
      _
    // Predicated region
    $region14: #{tpu_custom_call.1} parent=1 // pred_check
      _
    $region15: #{tpu_custom_call.1} parent=1 // pred_check_branch
      %38 = sbr.rel (0) target = $region17
    $region16: #{tpu_custom_call.1} parent=1 // pred_region
      _
    $region17: #{tpu_custom_call.1} parent=1 // pred_fallthru
      _
    // Predicated region
    $region18: #{tpu_custom_call.1} parent=1 // pred_check
      _
    $region19: #{tpu_custom_call.1} parent=1 // pred_check_branch
      %40 = sbr.rel (0) target = $region21
    $region20: #{tpu_custom_call.1} parent=1 // pred_region
      _
    $region21: #{tpu_custom_call.1} parent=1 // pred_fallthru
      _
    // Predicated region
    $region22: #{tpu_custom_call.1} parent=1 // pred_check
      _
    $region23: #{tpu_custom_call.1} parent=1 // pred_check_branch
      %42 = sbr.rel (0) target = $region25
    $region24: #{tpu_custom_call.1} parent=1 // pred_region
      _
    $region25: #{tpu_custom_call.1} parent=1 // pred_fallthru
      _
    // Predicated region
    $region26: #{tpu_custom_call.1} parent=1 // pred_check
      _
    $region27: #{tpu_custom_call.1} parent=1 // pred_check_branch
      %44 = sbr.rel (0) target = $region29
    $region28: #{tpu_custom_call.1} parent=1 // pred_region
      _
    $region29: #{tpu_custom_call.1} parent=1 // pred_fallthru
      _
    // Predicated region
    $region30: #{tpu_custom_call.1} parent=1 // pred_check
      _
    $region31: #{tpu_custom_call.1} parent=1 // pred_check_branch
      %46 = sbr.rel (0) target = $region33
    $region32: #{tpu_custom_call.1} parent=1 // pred_region
      _
    $region33: #{tpu_custom_call.1} parent=1 // pred_fallthru
      _
    // Predicated region
    $region34: #{tpu_custom_call.1} parent=1 // pred_check
      _
    $region35: #{tpu_custom_call.1} parent=1 // pred_check_branch
      %48 = sbr.rel (0) target = $region37
    $region36: #{tpu_custom_call.1} parent=1 // pred_region
      _
    $region37: #{tpu_custom_call.1} parent=1 // pred_fallthru
      _
    // Predicated region
    $region38: #{tpu_custom_call.1} parent=1 // pred_check
      _
    $region39: #{tpu_custom_call.1} parent=1 // pred_check_branch
      %50 = sbr.rel (0) target = $region41
    $region40: #{tpu_custom_call.1} parent=1 // pred_region
      _
    $region41: #{tpu_custom_call.1} parent=1 // pred_fallthru
      _
    // Predicated region
    $region42: #{tpu_custom_call.1} parent=1 // pred_check
      _
    $region43: #{tpu_custom_call.1} parent=1 // pred_check_branch
      %52 = sbr.rel (0) target = $region45
    $region44: #{tpu_custom_call.1} parent=1 // pred_region
      _
    $region45: #{tpu_custom_call.1} parent=1 // pred_fallthru
      _
    // Predicated region
    $region46: #{tpu_custom_call.1} parent=1 // pred_check
      _
    $region47: #{tpu_custom_call.1} parent=1 // pred_check_branch
      %54 = sbr.rel (0) target = $region49
    $region48: #{tpu_custom_call.1} parent=1 // pred_region
      _
    $region49: #{tpu_custom_call.1} parent=1 // pred_fallthru
      _
    // Predicated region
    $region50: #{tpu_custom_call.1} parent=1 // pred_check
      _
    $region51: #{tpu_custom_call.1} parent=1 // pred_check_branch
      %56 = sbr.rel (0) target = $region53
    $region52: #{tpu_custom_call.1} parent=1 // pred_region
      _
    $region53: #{tpu_custom_call.1} parent=1 // pred_fallthru
      _
    // Predicated region
    $region54: #{tpu_custom_call.1} parent=1 // pred_check
      _
    $region55: #{tpu_custom_call.1} parent=1 // pred_check_branch
      %58 = sbr.rel (0) target = $region57
    $region56: #{tpu_custom_call.1} parent=1 // pred_region
      _
    $region57: #{tpu_custom_call.1} parent=1 // pred_fallthru
      _
    // Predicated region
    $region58: #{tpu_custom_call.1} parent=1 // pred_check
      _
    $region59: #{tpu_custom_call.1} parent=1 // pred_check_branch
      %60 = sbr.rel (0) target = $region61
    $region60: #{tpu_custom_call.1} parent=1 // pred_region
      _
    $region61: #{tpu_custom_call.1} parent=1 // pred_fallthru
      _
    // Predicated region
    $region62: #{tpu_custom_call.1} parent=1 // pred_check
      _
    $region63: #{tpu_custom_call.1} parent=1 // pred_check_branch
      %62 = sbr.rel (0) target = $region65
    $region64: #{tpu_custom_call.1} parent=1 // pred_region
      _
    $region65: #{tpu_custom_call.1} parent=1 // pred_fallthru
      _
    // Predicated region
    $region66: #{tpu_custom_call.1} parent=1 // pred_check
      _
    $region67: #{tpu_custom_call.1} parent=1 // pred_check_branch
      %64 = sbr.rel (0) target = $region69
    $region68: #{tpu_custom_call.1} parent=1 // pred_region
      _
    $region69: #{tpu_custom_call.1} parent=1 // pred_fallthru
      _
    // Predicated region
    $region70: #{tpu_custom_call.1} parent=1 // pred_check
      _
    $region71: #{tpu_custom_call.1} parent=1 // pred_check_branch
      %66 = sbr.rel (0) target = $region73
    $region72: #{tpu_custom_call.1} parent=1 // pred_region
      _
    $region73: #{tpu_custom_call.1} parent=1 // pred_fallthru
      _
    // Predicated region
    $region74: #{tpu_custom_call.1} parent=1 // pred_check
      _
    $region75: #{tpu_custom_call.1} parent=1 // pred_check_branch
      %68 = sbr.rel (0) target = $region77
    $region76: #{tpu_custom_call.1} parent=1 // pred_region
      _
    $region77: #{tpu_custom_call.1} parent=1 // pred_fallthru
      _
    // Predicated region
    $region78: #{tpu_custom_call.1} parent=1 // pred_check
      _
    $region79: #{tpu_custom_call.1} parent=1 // pred_check_branch
      %70 = sbr.rel (0) target = $region81
    $region80: #{tpu_custom_call.1} parent=1 // pred_region
      _
    $region81: #{tpu_custom_call.1} parent=1 // pred_fallthru
      _
    // Predicated region
    $region82: #{tpu_custom_call.1} parent=1 // pred_check
      _
    $region83: #{tpu_custom_call.1} parent=1 // pred_check_branch
      %72 = sbr.rel (0) target = $region85
    $region84: #{tpu_custom_call.1} parent=1 // pred_region
      _
    $region85: #{tpu_custom_call.1} parent=1 // pred_fallthru
      _
    // Predicated region
    $region86: #{tpu_custom_call.1} parent=1 // pred_check
      _
    $region87: #{tpu_custom_call.1} parent=1 // pred_check_branch
      %74 = sbr.rel (0) target = $region89
    $region88: #{tpu_custom_call.1} parent=1 // pred_region
      _
    $region89: #{tpu_custom_call.1} parent=1 // pred_fallthru
      _
    // Predicated region
    $region90: #{tpu_custom_call.1} parent=1 // pred_check
      _
    $region91: #{tpu_custom_call.1} parent=1 // pred_check_branch
      %76 = sbr.rel (0) target = $region93
    $region92: #{tpu_custom_call.1} parent=1 // pred_region
      _
    $region93: #{tpu_custom_call.1} parent=1 // pred_fallthru
      _
    // Predicated region
    $region94: #{tpu_custom_call.1} parent=1 // pred_check
      _
    $region95: #{tpu_custom_call.1} parent=1 // pred_check_branch
      %78 = sbr.rel (0) target = $region97
    $region96: #{tpu_custom_call.1} parent=1 // pred_region
      _
    $region97: #{tpu_custom_call.1} parent=1 // pred_fallthru
      _
    // Predicated region
    $region98: #{tpu_custom_call.1} parent=1 // pred_check
      _
    $region99: #{tpu_custom_call.1} parent=1 // pred_check_branch
      %80 = sbr.rel (0) target = $region101
    $region100: #{tpu_custom_call.1} parent=1 // pred_region
      _
    $region101: #{tpu_custom_call.1} parent=1 // pred_fallthru
      _
    %v81 = vld [vmem:[%s21] sm:$0x7]
    %v82 = vld [vmem:[%s22] sm:$0xff]
    %v83 = vld [vmem:[%s22 + $0x8] sm:$0xff]
    %v84 = vld [vmem:[%s22 + $0x10] sm:$0xff]
    %v85 = vld [vmem:[%s22 + $0x18] sm:$0xff]
    %v86 = vld [vmem:[%s22 + $0x20] sm:$0xff]
    %v87 = vld [vmem:[%s22 + $0x28] sm:$0xff]
    %v88 = vld [vmem:[%s19] sm:$0x3f]
    %v89 = vld [vmem:[%s20] sm:$0xff]
    %v90 = vld [vmem:[%s20 + $0x8] sm:$0xff]
    %v91 = vld [vmem:[%s20 + $0x10] sm:$0xff]
    %v92 = vld [vmem:[%s20 + $0x18] sm:$0xff]
    %v93 = vld [vmem:[%s20 + $0x20] sm:$0xff]
    %v94 = vld [vmem:[%s20 + $0x28] sm:$0xff]
    %v95 = vld [vmem:[%s0] sm:$0xff]
    %v96 = vld [vmem:[%s0 + $0x8] sm:$0xff]
    %v97 = vld [vmem:[%s0 + $0x10] sm:$0xff]
    %v98 = vld [vmem:[%s0 + $0x18] sm:$0xff]
    %v99 = vld [vmem:[%s0 + $0x20] sm:$0xff]
    %v100 = vld [vmem:[%s0 + $0x28] sm:$0xff]
    %v101 = vld [vmem:[%s1] sm:$0xff]
    %v102 = vld [vmem:[%s1 + $0x8] sm:$0xff]
    %v103 = vld [vmem:[%s1 + $0x10] sm:$0xff]
    %v104 = vld [vmem:[%s1 + $0x18] sm:$0xff]
    %v105 = vld [vmem:[%s1 + $0x20] sm:$0xff]
    %v106 = vld [vmem:[%s1 + $0x28] sm:$0xff]
    %v107 = vld [vmem:[%s2] sm:$0xff]
    %v108 = vld [vmem:[%s2 + $0x8] sm:$0xff]
    %v109 = vld [vmem:[%s2 + $0x10] sm:$0xff]
    %v110 = vld [vmem:[%s2 + $0x18] sm:$0xff]
    %v111 = vld [vmem:[%s2 + $0x20] sm:$0xff]
    %v112 = vld [vmem:[%s2 + $0x28] sm:$0xff]
    %vm113 = vcmask 392192
    %v115 = vsel %vm113, %v81, 0
    %117 = vmatpush.msra.mxu0 0.0
    %118 = vmatpush.msra.mxu0 0.0
    %119 = vmatpush.msra.mxu0 0.0
    %120 = vmatpush.msra.mxu0 0.0
    %121 = vmatpush.msra.mxu0 0.0
    %122 = vmatpush.msra.mxu0 0.0
    %123 = vmatpush.msra.mxu0 0.0
    %124 = vmatpush.msra.mxu0 0.0
    %125 = vmatpush.msra.mxu0 0.0
    %126 = vmatpush.msra.mxu0 0.0
    %127 = vmatpush.msra.mxu0 %v100
    %128 = vmatpush.msra.mxu0 %v99
    %129 = vmatpush.msra.mxu0 %v98
    %130 = vmatpush.msra.mxu0 %v97
    %131 = vmatpush.msra.mxu0 %v96
    %132 = vmatpush.msra.mxu0 %v95
    %133 = vmatmul.f32.gmra.mxu0 %v115
    %v134 = vpop.f32.mrf.mxu0
    %v135 = vadd.f32 0.0, %v134
    %136 = vdwg.mxu0
    %v137 = vmul.f32 %v135, 0.0625
    %vm138 = vcmask 23552
    %v140 = vsel %vm138, %v82, 0
    %v143 = vsel %vm138, %v83, 0
    %v146 = vsel %vm138, %v84, 0
    %v149 = vsel %vm138, %v85, 0
    %v152 = vsel %vm138, %v86, 0
    %v155 = vsel %vm138, %v87, 0
    %vm157 = vcmask 1042432
    %v159 = vsel %vm157, %v137, 0
    %161 = vmatpush.msra.mxu0 0.0
    %162 = vmatpush.msra.mxu0 0.0
    %163 = vmatpush.msra.mxu0 0.0
    %164 = vmatpush.msra.mxu0 0.0
    %165 = vmatpush.msra.mxu0 0.0
    %166 = vmatpush.msra.mxu0 0.0
    %167 = vmatpush.msra.mxu0 0.0
    %168 = vmatpush.msra.mxu0 0.0
    %169 = vmatpush.msra.mxu0 0.0
    %170 = vmatpush.msra.mxu0 0.0
    %171 = vmatpush.msra.mxu0 0.0
    %172 = vmatpush.msra.mxu0 0.0
    %173 = vmatpush.msra.mxu0 0.0
    %174 = vmatpush.msra.mxu0 0.0
    %175 = vmatpush.msra.mxu0 0.0
    %176 = vmatpush.msra.mxu0 %v159
    %177 = vmatmul.f32.gmra.mxu0 %v140
    %v178 = vpop.f32.mrf.mxu0
    %v179 = vadd.f32 0.0, %v178
    %180 = vmatmul.f32.gmra.mxu0 %v143
    %v181 = vpop.f32.mrf.mxu0
    %v182 = vadd.f32 0.0, %v181
    %183 = vmatmul.f32.gmra.mxu0 %v146
    %v184 = vpop.f32.mrf.mxu0
    %v185 = vadd.f32 0.0, %v184
    %186 = vmatmul.f32.gmra.mxu0 %v149
    %v187 = vpop.f32.mrf.mxu0
    %v188 = vadd.f32 0.0, %v187
    %189 = vmatmul.f32.gmra.mxu0 %v152
    %v190 = vpop.f32.mrf.mxu0
    %v191 = vadd.f32 0.0, %v190
    %192 = vmatmul.f32.gmra.mxu0 %v155
    %v193 = vpop.f32.mrf.mxu0
    %v194 = vadd.f32 0.0, %v193
    %195 = vdwg.mxu0
    %v196 = vsub.f32 %v95, %v179
    %v197 = vsub.f32 %v96, %v182
    %v198 = vsub.f32 %v97, %v185
    %v199 = vsub.f32 %v98, %v188
    %v200 = vsub.f32 %v99, %v191
    %v201 = vsub.f32 %v100, %v194
    %v202 = vmul.f32 %v196, %v196
    %v203 = vmul.f32 %v197, %v197
    %v204 = vmul.f32 %v198, %v198
    %v205 = vmul.f32 %v199, %v199
    %v206 = vmul.f32 %v200, %v200
    %v207 = vmul.f32 %v201, %v201
    %208 = vmatpush.msra.mxu0 0.0
    %209 = vmatpush.msra.mxu0 0.0
    %210 = vmatpush.msra.mxu0 0.0
    %211 = vmatpush.msra.mxu0 0.0
    %212 = vmatpush.msra.mxu0 0.0
    %213 = vmatpush.msra.mxu0 0.0
    %214 = vmatpush.msra.mxu0 0.0
    %215 = vmatpush.msra.mxu0 0.0
    %216 = vmatpush.msra.mxu0 0.0
    %217 = vmatpush.msra.mxu0 0.0
    %218 = vmatpush.msra.mxu0 %v207
    %219 = vmatpush.msra.mxu0 %v206
    %220 = vmatpush.msra.mxu0 %v205
    %221 = vmatpush.msra.mxu0 %v204
    %222 = vmatpush.msra.mxu0 %v203
    %223 = vmatpush.msra.mxu0 %v202
    %224 = vmatmul.f32.gmra.mxu0 %v115
    %v225 = vpop.f32.mrf.mxu0
    %v226 = vadd.f32 0.0, %v225
    %227 = vdwg.mxu0
    %v228 = vmul.f32 %v226, 0.0625
    %v229 = vadd.f32 %v228, 1e-12
    %v230 = vrsqrt.pop %v229
    %v231 = vmul.f32 %v230, %v229
    %v232 = vmul.f32 %v231, %v230
    %v233 = vmul.f32 0.5, %v232
    %v234 = vsub.f32 1.5, %v233
    %v235 = vmul.f32 %v230, %v234
    %vm236 = vweird.f32 %v229
    %vm237 = vweird.f32 %v230
    %vm238 = vmor %vm236, %vm237
    %v239 = vsel %vm238, %v230, %v235
    %v241 = vsel %vm157, %v239, 0
    %243 = vmatpush.msra.mxu0 0.0
    %244 = vmatpush.msra.mxu0 0.0
    %245 = vmatpush.msra.mxu0 0.0
    %246 = vmatpush.msra.mxu0 0.0
    %247 = vmatpush.msra.mxu0 0.0
    %248 = vmatpush.msra.mxu0 0.0
    %249 = vmatpush.msra.mxu0 0.0
    %250 = vmatpush.msra.mxu0 0.0
    %251 = vmatpush.msra.mxu0 0.0
    %252 = vmatpush.msra.mxu0 0.0
    %253 = vmatpush.msra.mxu0 0.0
    %254 = vmatpush.msra.mxu0 0.0
    %255 = vmatpush.msra.mxu0 0.0
    %256 = vmatpush.msra.mxu0 0.0
    %257 = vmatpush.msra.mxu0 0.0
    %258 = vmatpush.msra.mxu0 %v241
    %259 = vmatmul.f32.gmra.mxu0 %v140
    %v260 = vpop.f32.mrf.mxu0
    %v261 = vadd.f32 0.0, %v260
    %262 = vmatmul.f32.gmra.mxu0 %v143
    %v263 = vpop.f32.mrf.mxu0
    %v264 = vadd.f32 0.0, %v263
    %265 = vmatmul.f32.gmra.mxu0 %v146
    %v266 = vpop.f32.mrf.mxu0
    %v267 = vadd.f32 0.0, %v266
    %268 = vmatmul.f32.gmra.mxu0 %v149
    %v269 = vpop.f32.mrf.mxu0
    %v270 = vadd.f32 0.0, %v269
    %271 = vmatmul.f32.gmra.mxu0 %v152
    %v272 = vpop.f32.mrf.mxu0
    %v273 = vadd.f32 0.0, %v272
    %274 = vmatmul.f32.gmra.mxu0 %v155
    %v275 = vpop.f32.mrf.mxu0
    %v276 = vadd.f32 0.0, %v275
    %277 = vdwg.mxu0
    %v278 = vmul.f32 %v196, %v261
    %v279 = vmul.f32 %v197, %v264
    %v280 = vmul.f32 %v198, %v267
    %v281 = vmul.f32 %v199, %v270
    %v282 = vmul.f32 %v200, %v273
    %v283 = vmul.f32 %v201, %v276
    %285 = vset.pattern.permute.xlu0 0
    %286 = vperm.xlu0 %285, %v101
    %v287 = vpop.permute.xlu0 %286
    %290 = vset.pattern.permute.xlu0 0
    %291 = vperm.xlu0 %290, %v102
    %v292 = vpop.permute.xlu0 %291
    %295 = vset.pattern.permute.xlu0 0
    %296 = vperm.xlu0 %295, %v103
    %v297 = vpop.permute.xlu0 %296
    %300 = vset.pattern.permute.xlu0 0
    %301 = vperm.xlu0 %300, %v104
    %v302 = vpop.permute.xlu0 %301
    %305 = vset.pattern.permute.xlu0 0
    %306 = vperm.xlu0 %305, %v105
    %v307 = vpop.permute.xlu0 %306
    %310 = vset.pattern.permute.xlu0 0
    %311 = vperm.xlu0 %310, %v106
    %v312 = vpop.permute.xlu0 %311
    %v314 = vmul.f32 %v278, %v287
    %v315 = vmul.f32 %v279, %v292
    %v316 = vmul.f32 %v280, %v297
    %v317 = vmul.f32 %v281, %v302
    %v318 = vmul.f32 %v282, %v307
    %v319 = vmul.f32 %v283, %v312
    %321 = vset.pattern.permute.xlu0 0
    %322 = vperm.xlu0 %321, %v107
    %v323 = vpop.permute.xlu0 %322
    %326 = vset.pattern.permute.xlu0 0
    %327 = vperm.xlu0 %326, %v108
    %v328 = vpop.permute.xlu0 %327
    %331 = vset.pattern.permute.xlu0 0
    %332 = vperm.xlu0 %331, %v109
    %v333 = vpop.permute.xlu0 %332
    %336 = vset.pattern.permute.xlu0 0
    %337 = vperm.xlu0 %336, %v110
    %v338 = vpop.permute.xlu0 %337
    %341 = vset.pattern.permute.xlu0 0
    %342 = vperm.xlu0 %341, %v111
    %v343 = vpop.permute.xlu0 %342
    %346 = vset.pattern.permute.xlu0 0
    %347 = vperm.xlu0 %346, %v112
    %v348 = vpop.permute.xlu0 %347
    %v350 = vadd.f32 %v314, %v323
    %v351 = vadd.f32 %v315, %v328
    %v352 = vadd.f32 %v316, %v333
    %v353 = vadd.f32 %v317, %v338
    %v354 = vadd.f32 %v318, %v343
    %v355 = vadd.f32 %v319, %v348
    %v356 = vld [vmem:[%s3] sm:$0xff]
    %v357 = vld [vmem:[%s3 + $0x8] sm:$0xff]
    %v358 = vld [vmem:[%s3 + $0x10] sm:$0xff]
    %v359 = vld [vmem:[%s3 + $0x18] sm:$0xff]
    %v360 = vld [vmem:[%s3 + $0x20] sm:$0xff]
    %v361 = vld [vmem:[%s3 + $0x28] sm:$0xff]
    %v362 = vld [vmem:[%s4] sm:$0xff]
    %v363 = vld [vmem:[%s4 + $0x8] sm:$0xff]
    %v364 = vld [vmem:[%s4 + $0x10] sm:$0xff]
    %v365 = vld [vmem:[%s4 + $0x18] sm:$0xff]
    %v366 = vld [vmem:[%s4 + $0x20] sm:$0xff]
    %v367 = vld [vmem:[%s4 + $0x28] sm:$0xff]
    %369 = vset.pattern.permute.xlu0 0
    %370 = vperm.xlu0 %369, %v362
    %v371 = vpop.permute.xlu0 %370
    %374 = vset.pattern.permute.xlu0 0
    %375 = vperm.xlu0 %374, %v363
    %v376 = vpop.permute.xlu0 %375
    %379 = vset.pattern.permute.xlu0 0
    %380 = vperm.xlu0 %379, %v364
    %v381 = vpop.permute.xlu0 %380
    %384 = vset.pattern.permute.xlu0 0
    %385 = vperm.xlu0 %384, %v365
    %v386 = vpop.permute.xlu0 %385
    %389 = vset.pattern.permute.xlu0 0
    %390 = vperm.xlu0 %389, %v366
    %v391 = vpop.permute.xlu0 %390
    %394 = vset.pattern.permute.xlu0 0
    %395 = vperm.xlu0 %394, %v367
    %v396 = vpop.permute.xlu0 %395
    %v399 = vsel %vm113, %v356, 0
    %v402 = vsel %vm113, %v357, 0
    %v405 = vsel %vm113, %v358, 0
    %v408 = vsel %vm113, %v359, 0
    %v411 = vsel %vm113, %v360, 0
    %v414 = vsel %vm113, %v361, 0
    %416 = vmatpush.msra.mxu0 0.0
    %417 = vmatpush.msra.mxu0 0.0
    %418 = vmatpush.msra.mxu0 0.0
    %419 = vmatpush.msra.mxu0 0.0
    %420 = vmatpush.msra.mxu0 0.0
    %421 = vmatpush.msra.mxu0 0.0
    %422 = vmatpush.msra.mxu0 0.0
    %423 = vmatpush.msra.mxu0 0.0
    %424 = vmatpush.msra.mxu0 0.0
    %425 = vmatpush.msra.mxu0 0.0
    %426 = vmatpush.msra.mxu0 %v355
    %427 = vmatpush.msra.mxu0 %v354
    %428 = vmatpush.msra.mxu0 %v353
    %429 = vmatpush.msra.mxu0 %v352
    %430 = vmatpush.msra.mxu0 %v351
    %431 = vmatpush.msra.mxu0 %v350
    %432 = vmatmul.f32.gmra.mxu0 %v399
    %v433 = vpop.f32.mrf.mxu0
    %v434 = vadd.f32 %v371, %v433
    %435 = vmatmul.f32.gmra.mxu0 %v402
    %v436 = vpop.f32.mrf.mxu0
    %v437 = vadd.f32 %v376, %v436
    %438 = vmatmul.f32.gmra.mxu0 %v405
    %v439 = vpop.f32.mrf.mxu0
    %v440 = vadd.f32 %v381, %v439
    %441 = vmatmul.f32.gmra.mxu0 %v408
    %v442 = vpop.f32.mrf.mxu0
    %v443 = vadd.f32 %v386, %v442
    %444 = vmatmul.f32.gmra.mxu0 %v411
    %v445 = vpop.f32.mrf.mxu0
    %v446 = vadd.f32 %v391, %v445
    %447 = vmatmul.f32.gmra.mxu0 %v414
    %v448 = vpop.f32.mrf.mxu0
    %v449 = vadd.f32 %v396, %v448
    %450 = vdwg.mxu0
    %v451 = vld [vmem:[%s5] sm:$0xff]
    %v452 = vld [vmem:[%s5 + $0x8] sm:$0xff]
    %v453 = vld [vmem:[%s5 + $0x10] sm:$0xff]
    %v454 = vld [vmem:[%s5 + $0x18] sm:$0xff]
    %v455 = vld [vmem:[%s5 + $0x20] sm:$0xff]
    %v456 = vld [vmem:[%s5 + $0x28] sm:$0xff]
    %v457 = vld [vmem:[%s6] sm:$0xff]
    %v458 = vld [vmem:[%s6 + $0x8] sm:$0xff]
    %v459 = vld [vmem:[%s6 + $0x10] sm:$0xff]
    %v460 = vld [vmem:[%s6 + $0x18] sm:$0xff]
    %v461 = vld [vmem:[%s6 + $0x20] sm:$0xff]
    %v462 = vld [vmem:[%s6 + $0x28] sm:$0xff]
    %464 = vset.pattern.permute.xlu0 0
    %465 = vperm.xlu0 %464, %v457
    %v466 = vpop.permute.xlu0 %465
    %469 = vset.pattern.permute.xlu0 0
    %470 = vperm.xlu0 %469, %v458
    %v471 = vpop.permute.xlu0 %470
    %474 = vset.pattern.permute.xlu0 0
    %475 = vperm.xlu0 %474, %v459
    %v476 = vpop.permute.xlu0 %475
    %479 = vset.pattern.permute.xlu0 0
    %480 = vperm.xlu0 %479, %v460
    %v481 = vpop.permute.xlu0 %480
    %484 = vset.pattern.permute.xlu0 0
    %485 = vperm.xlu0 %484, %v461
    %v486 = vpop.permute.xlu0 %485
    %489 = vset.pattern.permute.xlu0 0
    %490 = vperm.xlu0 %489, %v462
    %v491 = vpop.permute.xlu0 %490
    %v494 = vsel %vm113, %v451, 0
    %v497 = vsel %vm113, %v452, 0
    %v500 = vsel %vm113, %v453, 0
    %v503 = vsel %vm113, %v454, 0
    %v506 = vsel %vm113, %v455, 0
    %v509 = vsel %vm113, %v456, 0
    %511 = vmatpush.msra.mxu0 0.0
    %512 = vmatpush.msra.mxu0 0.0
    %513 = vmatpush.msra.mxu0 0.0
    %514 = vmatpush.msra.mxu0 0.0
    %515 = vmatpush.msra.mxu0 0.0
    %516 = vmatpush.msra.mxu0 0.0
    %517 = vmatpush.msra.mxu0 0.0
    %518 = vmatpush.msra.mxu0 0.0
    %519 = vmatpush.msra.mxu0 0.0
    %520 = vmatpush.msra.mxu0 0.0
    %521 = vmatpush.msra.mxu0 %v355
    %522 = vmatpush.msra.mxu0 %v354
    %523 = vmatpush.msra.mxu0 %v353
    %524 = vmatpush.msra.mxu0 %v352
    %525 = vmatpush.msra.mxu0 %v351
    %526 = vmatpush.msra.mxu0 %v350
    %527 = vmatmul.f32.gmra.mxu0 %v494
    %v528 = vpop.f32.mrf.mxu0
    %v529 = vadd.f32 %v466, %v528
    %530 = vmatmul.f32.gmra.mxu0 %v497
    %v531 = vpop.f32.mrf.mxu0
    %v532 = vadd.f32 %v471, %v531
    %533 = vmatmul.f32.gmra.mxu0 %v500
    %v534 = vpop.f32.mrf.mxu0
    %v535 = vadd.f32 %v476, %v534
    %536 = vmatmul.f32.gmra.mxu0 %v503
    %v537 = vpop.f32.mrf.mxu0
    %v538 = vadd.f32 %v481, %v537
    %539 = vmatmul.f32.gmra.mxu0 %v506
    %v540 = vpop.f32.mrf.mxu0
    %v541 = vadd.f32 %v486, %v540
    %542 = vmatmul.f32.gmra.mxu0 %v509
    %v543 = vpop.f32.mrf.mxu0
    %v544 = vadd.f32 %v491, %v543
    %545 = vdwg.mxu0
    %v546 = vmul.f32 %v434, %v529
    %v547 = vmul.f32 %v437, %v532
    %v548 = vmul.f32 %v440, %v535
    %v549 = vmul.f32 %v443, %v538
    %v550 = vmul.f32 %v446, %v541
    %v551 = vmul.f32 %v449, %v544
    %v553 = vsel %vm113, %v88, 0
    %555 = vmatpush.msra.mxu0 0.0
    %556 = vmatpush.msra.mxu0 0.0
    %557 = vmatpush.msra.mxu0 0.0
    %558 = vmatpush.msra.mxu0 0.0
    %559 = vmatpush.msra.mxu0 0.0
    %560 = vmatpush.msra.mxu0 0.0
    %561 = vmatpush.msra.mxu0 0.0
    %562 = vmatpush.msra.mxu0 0.0
    %563 = vmatpush.msra.mxu0 0.0
    %564 = vmatpush.msra.mxu0 0.0
    %565 = vmatpush.msra.mxu0 %v551
    %566 = vmatpush.msra.mxu0 %v550
    %567 = vmatpush.msra.mxu0 %v549
    %568 = vmatpush.msra.mxu0 %v548
    %569 = vmatpush.msra.mxu0 %v547
    %570 = vmatpush.msra.mxu0 %v546
    %571 = vmatmul.f32.gmra.mxu0 %v553
    %v572 = vpop.f32.mrf.mxu0
    %v573 = vadd.f32 0.0, %v572
    %574 = vdwg.mxu0
    %s575 = scalar_lea.vmem %s5, 48
    %v576 = vld [vmem:[%s575] sm:$0xff]
    %v577 = vld [vmem:[%s575 + $0x8] sm:$0xff]
    %v578 = vld [vmem:[%s575 + $0x10] sm:$0xff]
    %v579 = vld [vmem:[%s575 + $0x18] sm:$0xff]
    %v580 = vld [vmem:[%s575 + $0x20] sm:$0xff]
    %v581 = vld [vmem:[%s575 + $0x28] sm:$0xff]
    %v583 = vsel %vm113, %v576, 0
    %v586 = vsel %vm113, %v577, 0
    %v589 = vsel %vm113, %v578, 0
    %v592 = vsel %vm113, %v579, 0
    %v595 = vsel %vm113, %v580, 0
    %v598 = vsel %vm113, %v581, 0
    %600 = vmatpush.msra.mxu0 0.0
    %601 = vmatpush.msra.mxu0 0.0
    %602 = vmatpush.msra.mxu0 0.0
    %603 = vmatpush.msra.mxu0 0.0
    %604 = vmatpush.msra.mxu0 0.0
    %605 = vmatpush.msra.mxu0 0.0
    %606 = vmatpush.msra.mxu0 0.0
    %607 = vmatpush.msra.mxu0 0.0
    %608 = vmatpush.msra.mxu0 0.0
    %609 = vmatpush.msra.mxu0 0.0
    %610 = vmatpush.msra.mxu0 %v355
    %611 = vmatpush.msra.mxu0 %v354
    %612 = vmatpush.msra.mxu0 %v353
    %613 = vmatpush.msra.mxu0 %v352
    %614 = vmatpush.msra.mxu0 %v351
    %615 = vmatpush.msra.mxu0 %v350
    %616 = vmatmul.f32.gmra.mxu0 %v583
    %v617 = vpop.f32.mrf.mxu0
    %v618 = vadd.f32 %v466, %v617
    %619 = vmatmul.f32.gmra.mxu0 %v586
    %v620 = vpop.f32.mrf.mxu0
    %v621 = vadd.f32 %v471, %v620
    %622 = vmatmul.f32.gmra.mxu0 %v589
    %v623 = vpop.f32.mrf.mxu0
    %v624 = vadd.f32 %v476, %v623
    %625 = vmatmul.f32.gmra.mxu0 %v592
    %v626 = vpop.f32.mrf.mxu0
    %v627 = vadd.f32 %v481, %v626
    %628 = vmatmul.f32.gmra.mxu0 %v595
    %v629 = vpop.f32.mrf.mxu0
    %v630 = vadd.f32 %v486, %v629
    %631 = vmatmul.f32.gmra.mxu0 %v598
    %v632 = vpop.f32.mrf.mxu0
    %v633 = vadd.f32 %v491, %v632
    %634 = vdwg.mxu0
    %v635 = vmul.f32 %v434, %v618
    %v636 = vmul.f32 %v437, %v621
    %v637 = vmul.f32 %v440, %v624
    %v638 = vmul.f32 %v443, %v627
    %v639 = vmul.f32 %v446, %v630
    %v640 = vmul.f32 %v449, %v633
    %641 = vmatpush.msra.mxu0 0.0
    %642 = vmatpush.msra.mxu0 0.0
    %643 = vmatpush.msra.mxu0 0.0
    %644 = vmatpush.msra.mxu0 0.0
    %645 = vmatpush.msra.mxu0 0.0
    %646 = vmatpush.msra.mxu0 0.0
    %647 = vmatpush.msra.mxu0 0.0
    %648 = vmatpush.msra.mxu0 0.0
    %649 = vmatpush.msra.mxu0 0.0
    %650 = vmatpush.msra.mxu0 0.0
    %651 = vmatpush.msra.mxu0 %v640
    %652 = vmatpush.msra.mxu0 %v639
    %653 = vmatpush.msra.mxu0 %v638
    %654 = vmatpush.msra.mxu0 %v637
    %655 = vmatpush.msra.mxu0 %v636
    %656 = vmatpush.msra.mxu0 %v635
    %657 = vmatmul.f32.gmra.mxu0 %v553
    %v658 = vpop.f32.mrf.mxu0
    %v659 = vadd.f32 0.0, %v658
    %660 = vdwg.mxu0
    %s661 = scalar_lea.vmem %s5, 96
    %v662 = vld [vmem:[%s661] sm:$0xff]
    %v663 = vld [vmem:[%s661 + $0x8] sm:$0xff]
    %v664 = vld [vmem:[%s661 + $0x10] sm:$0xff]
    %v665 = vld [vmem:[%s661 + $0x18] sm:$0xff]
    %v666 = vld [vmem:[%s661 + $0x20] sm:$0xff]
    %v667 = vld [vmem:[%s661 + $0x28] sm:$0xff]
    %v669 = vsel %vm113, %v662, 0
    %v672 = vsel %vm113, %v663, 0
    %v675 = vsel %vm113, %v664, 0
    %v678 = vsel %vm113, %v665, 0
    %v681 = vsel %vm113, %v666, 0
    %v684 = vsel %vm113, %v667, 0
    %686 = vmatpush.msra.mxu0 0.0
    %687 = vmatpush.msra.mxu0 0.0
    %688 = vmatpush.msra.mxu0 0.0
    %689 = vmatpush.msra.mxu0 0.0
    %690 = vmatpush.msra.mxu0 0.0
    %691 = vmatpush.msra.mxu0 0.0
    %692 = vmatpush.msra.mxu0 0.0
    %693 = vmatpush.msra.mxu0 0.0
    %694 = vmatpush.msra.mxu0 0.0
    %695 = vmatpush.msra.mxu0 0.0
    %696 = vmatpush.msra.mxu0 %v355
    %697 = vmatpush.msra.mxu0 %v354
    %698 = vmatpush.msra.mxu0 %v353
    %699 = vmatpush.msra.mxu0 %v352
    %700 = vmatpush.msra.mxu0 %v351
    %701 = vmatpush.msra.mxu0 %v350
    %702 = vmatmul.f32.gmra.mxu0 %v669
    %v703 = vpop.f32.mrf.mxu0
    %v704 = vadd.f32 %v466, %v703
    %705 = vmatmul.f32.gmra.mxu0 %v672
    %v706 = vpop.f32.mrf.mxu0
    %v707 = vadd.f32 %v471, %v706
    %708 = vmatmul.f32.gmra.mxu0 %v675
    %v709 = vpop.f32.mrf.mxu0
    %v710 = vadd.f32 %v476, %v709
    %711 = vmatmul.f32.gmra.mxu0 %v678
    %v712 = vpop.f32.mrf.mxu0
    %v713 = vadd.f32 %v481, %v712
    %714 = vmatmul.f32.gmra.mxu0 %v681
    %v715 = vpop.f32.mrf.mxu0
    %v716 = vadd.f32 %v486, %v715
    %717 = vmatmul.f32.gmra.mxu0 %v684
    %v718 = vpop.f32.mrf.mxu0
    %v719 = vadd.f32 %v491, %v718
    %720 = vdwg.mxu0
    %v721 = vmul.f32 %v434, %v704
    %v722 = vmul.f32 %v437, %v707
    %v723 = vmul.f32 %v440, %v710
    %v724 = vmul.f32 %v443, %v713
    %v725 = vmul.f32 %v446, %v716
    %v726 = vmul.f32 %v449, %v719
    %727 = vmatpush.msra.mxu0 0.0
    %728 = vmatpush.msra.mxu0 0.0
    %729 = vmatpush.msra.mxu0 0.0
    %730 = vmatpush.msra.mxu0 0.0
    %731 = vmatpush.msra.mxu0 0.0
    %732 = vmatpush.msra.mxu0 0.0
    %733 = vmatpush.msra.mxu0 0.0
    %734 = vmatpush.msra.mxu0 0.0
    %735 = vmatpush.msra.mxu0 0.0
    %736 = vmatpush.msra.mxu0 0.0
    %737 = vmatpush.msra.mxu0 %v726
    %738 = vmatpush.msra.mxu0 %v725
    %739 = vmatpush.msra.mxu0 %v724
    %740 = vmatpush.msra.mxu0 %v723
    %741 = vmatpush.msra.mxu0 %v722
    %742 = vmatpush.msra.mxu0 %v721
    %743 = vmatmul.f32.gmra.mxu0 %v553
    %v744 = vpop.f32.mrf.mxu0
    %v745 = vadd.f32 0.0, %v744
    %746 = vdwg.mxu0
    %v747 = vmax.f32 %v573, %v659
    %v748 = vmax.f32 %v747, %v745
    %v749 = vsub.f32 %v573, %v748
    %v750 = vmul.f32 %v749, 1.442695
    %v751 = vpow.pop %v750
    %v752 = vsub.f32 %v659, %v748
    %v753 = vmul.f32 %v752, 1.442695
    %v754 = vpow.pop %v753
    %v755 = vsub.f32 %v745, %v748
    %v756 = vmul.f32 %v755, 1.442695
    %v757 = vpow.pop %v756
    %v758 = vadd.f32 %v751, %v754
    %v759 = vadd.f32 %v758, %v757
    %v760 = vrcp.pop %v759
    %v761 = vmul.f32 %v759, %v760
    %v762 = vsub.f32 1.0, %v761
    %v763 = vmul.f32 %v760, %v762
    %v764 = vadd.f32 %v760, %v763
    %vm765 = vweird.f32 %v759
    %vm766 = vweird.f32 %v760
    %vm767 = vmor %vm765, %vm766
    %v768 = vsel %vm767, %v760, %v764
    %v769 = vand.u32 2147483647, %v759
    %vm770 = vcmp.eq.f32.partialorder %v769, 8.507059e+37
    %v771 = vand.u32 %v759, 2147483648
    %v772 = vor.u32 1.1754944e-38, %v771
    %v773 = vsel %vm770, %v772, %v768
    %v774 = vmul.f32 1.0, %v773
    %v775 = vld [vmem:[%s7] sm:$0xff]
    %v776 = vld [vmem:[%s7 + $0x8] sm:$0xff]
    %v777 = vld [vmem:[%s7 + $0x10] sm:$0xff]
    %v778 = vld [vmem:[%s7 + $0x18] sm:$0xff]
    %v779 = vld [vmem:[%s7 + $0x20] sm:$0xff]
    %v780 = vld [vmem:[%s7 + $0x28] sm:$0xff]
    %v781 = vld [vmem:[%s8] sm:$0xff]
    %v782 = vld [vmem:[%s8 + $0x8] sm:$0xff]
    %v783 = vld [vmem:[%s8 + $0x10] sm:$0xff]
    %v784 = vld [vmem:[%s8 + $0x18] sm:$0xff]
    %v785 = vld [vmem:[%s8 + $0x20] sm:$0xff]
    %v786 = vld [vmem:[%s8 + $0x28] sm:$0xff]
    %788 = vset.pattern.permute.xlu0 0
    %789 = vperm.xlu0 %788, %v781
    %v790 = vpop.permute.xlu0 %789
    %793 = vset.pattern.permute.xlu0 0
    %794 = vperm.xlu0 %793, %v782
    %v795 = vpop.permute.xlu0 %794
    %798 = vset.pattern.permute.xlu0 0
    %799 = vperm.xlu0 %798, %v783
    %v800 = vpop.permute.xlu0 %799
    %803 = vset.pattern.permute.xlu0 0
    %804 = vperm.xlu0 %803, %v784
    %v805 = vpop.permute.xlu0 %804
    %808 = vset.pattern.permute.xlu0 0
    %809 = vperm.xlu0 %808, %v785
    %v810 = vpop.permute.xlu0 %809
    %813 = vset.pattern.permute.xlu0 0
    %814 = vperm.xlu0 %813, %v786
    %v815 = vpop.permute.xlu0 %814
    %v818 = vsel %vm113, %v775, 0
    %v821 = vsel %vm113, %v776, 0
    %v824 = vsel %vm113, %v777, 0
    %v827 = vsel %vm113, %v778, 0
    %v830 = vsel %vm113, %v779, 0
    %v833 = vsel %vm113, %v780, 0
    %835 = vmatpush.msra.mxu0 0.0
    %836 = vmatpush.msra.mxu0 0.0
    %837 = vmatpush.msra.mxu0 0.0
    %838 = vmatpush.msra.mxu0 0.0
    %839 = vmatpush.msra.mxu0 0.0
    %840 = vmatpush.msra.mxu0 0.0
    %841 = vmatpush.msra.mxu0 0.0
    %842 = vmatpush.msra.mxu0 0.0
    %843 = vmatpush.msra.mxu0 0.0
    %844 = vmatpush.msra.mxu0 0.0
    %845 = vmatpush.msra.mxu0 %v355
    %846 = vmatpush.msra.mxu0 %v354
    %847 = vmatpush.msra.mxu0 %v353
    %848 = vmatpush.msra.mxu0 %v352
    %849 = vmatpush.msra.mxu0 %v351
    %850 = vmatpush.msra.mxu0 %v350
    %851 = vmatmul.f32.gmra.mxu0 %v818
    %v852 = vpop.f32.mrf.mxu0
    %v853 = vadd.f32 %v790, %v852
    %854 = vmatmul.f32.gmra.mxu0 %v821
    %v855 = vpop.f32.mrf.mxu0
    %v856 = vadd.f32 %v795, %v855
    %857 = vmatmul.f32.gmra.mxu0 %v824
    %v858 = vpop.f32.mrf.mxu0
    %v859 = vadd.f32 %v800, %v858
    %860 = vmatmul.f32.gmra.mxu0 %v827
    %v861 = vpop.f32.mrf.mxu0
    %v862 = vadd.f32 %v805, %v861
    %863 = vmatmul.f32.gmra.mxu0 %v830
    %v864 = vpop.f32.mrf.mxu0
    %v865 = vadd.f32 %v810, %v864
    %866 = vmatmul.f32.gmra.mxu0 %v833
    %v867 = vpop.f32.mrf.mxu0
    %v868 = vadd.f32 %v815, %v867
    %869 = vdwg.mxu0
    %v870 = vmul.f32 %v751, %v774
    %vm871 = vcmask 48128
    %v873 = vsel %vm871, %v89, 0
    %v876 = vsel %vm871, %v90, 0
    %v879 = vsel %vm871, %v91, 0
    %v882 = vsel %vm871, %v92, 0
    %v885 = vsel %vm871, %v93, 0
    %v888 = vsel %vm871, %v94, 0
    %vm890 = vcmask 1045504
    %v892 = vsel %vm890, %v870, 0
    %894 = vmatpush.msra.mxu0 0.0
    %895 = vmatpush.msra.mxu0 0.0
    %896 = vmatpush.msra.mxu0 0.0
    %897 = vmatpush.msra.mxu0 0.0
    %898 = vmatpush.msra.mxu0 0.0
    %899 = vmatpush.msra.mxu0 0.0
    %900 = vmatpush.msra.mxu0 0.0
    %901 = vmatpush.msra.mxu0 0.0
    %902 = vmatpush.msra.mxu0 0.0
    %903 = vmatpush.msra.mxu0 0.0
    %904 = vmatpush.msra.mxu0 0.0
    %905 = vmatpush.msra.mxu0 0.0
    %906 = vmatpush.msra.mxu0 0.0
    %907 = vmatpush.msra.mxu0 0.0
    %908 = vmatpush.msra.mxu0 0.0
    %909 = vmatpush.msra.mxu0 %v892
    %910 = vmatmul.f32.gmra.mxu0 %v873
    %v911 = vpop.f32.mrf.mxu0
    %v912 = vadd.f32 0.0, %v911
    %913 = vmatmul.f32.gmra.mxu0 %v876
    %v914 = vpop.f32.mrf.mxu0
    %v915 = vadd.f32 0.0, %v914
    %916 = vmatmul.f32.gmra.mxu0 %v879
    %v917 = vpop.f32.mrf.mxu0
    %v918 = vadd.f32 0.0, %v917
    %919 = vmatmul.f32.gmra.mxu0 %v882
    %v920 = vpop.f32.mrf.mxu0
    %v921 = vadd.f32 0.0, %v920
    %922 = vmatmul.f32.gmra.mxu0 %v885
    %v923 = vpop.f32.mrf.mxu0
    %v924 = vadd.f32 0.0, %v923
    %925 = vmatmul.f32.gmra.mxu0 %v888
    %v926 = vpop.f32.mrf.mxu0
    %v927 = vadd.f32 0.0, %v926
    %928 = vdwg.mxu0
    %v929 = vmul.f32 %v912, %v853
    %v930 = vmul.f32 %v915, %v856
    %v931 = vmul.f32 %v918, %v859
    %v932 = vmul.f32 %v921, %v862
    %v933 = vmul.f32 %v924, %v865
    %v934 = vmul.f32 %v927, %v868
    %s935 = scalar_lea.vmem %s7, 48
    %v936 = vld [vmem:[%s935] sm:$0xff]
    %v937 = vld [vmem:[%s935 + $0x8] sm:$0xff]
    %v938 = vld [vmem:[%s935 + $0x10] sm:$0xff]
    %v939 = vld [vmem:[%s935 + $0x18] sm:$0xff]
    %v940 = vld [vmem:[%s935 + $0x20] sm:$0xff]
    %v941 = vld [vmem:[%s935 + $0x28] sm:$0xff]
    %v943 = vsel %vm113, %v936, 0
    %v946 = vsel %vm113, %v937, 0
    %v949 = vsel %vm113, %v938, 0
    %v952 = vsel %vm113, %v939, 0
    %v955 = vsel %vm113, %v940, 0
    %v958 = vsel %vm113, %v941, 0
    %960 = vmatpush.msra.mxu0 0.0
    %961 = vmatpush.msra.mxu0 0.0
    %962 = vmatpush.msra.mxu0 0.0
    %963 = vmatpush.msra.mxu0 0.0
    %964 = vmatpush.msra.mxu0 0.0
    %965 = vmatpush.msra.mxu0 0.0
    %966 = vmatpush.msra.mxu0 0.0
    %967 = vmatpush.msra.mxu0 0.0
    %968 = vmatpush.msra.mxu0 0.0
    %969 = vmatpush.msra.mxu0 0.0
    %970 = vmatpush.msra.mxu0 %v355
    %971 = vmatpush.msra.mxu0 %v354
    %972 = vmatpush.msra.mxu0 %v353
    %973 = vmatpush.msra.mxu0 %v352
    %974 = vmatpush.msra.mxu0 %v351
    %975 = vmatpush.msra.mxu0 %v350
    %976 = vmatmul.f32.gmra.mxu0 %v943
    %v977 = vpop.f32.mrf.mxu0
    %v978 = vadd.f32 %v790, %v977
    %979 = vmatmul.f32.gmra.mxu0 %v946
    %v980 = vpop.f32.mrf.mxu0
    %v981 = vadd.f32 %v795, %v980
    %982 = vmatmul.f32.gmra.mxu0 %v949
    %v983 = vpop.f32.mrf.mxu0
    %v984 = vadd.f32 %v800, %v983
    %985 = vmatmul.f32.gmra.mxu0 %v952
    %v986 = vpop.f32.mrf.mxu0
    %v987 = vadd.f32 %v805, %v986
    %988 = vmatmul.f32.gmra.mxu0 %v955
    %v989 = vpop.f32.mrf.mxu0
    %v990 = vadd.f32 %v810, %v989
    %991 = vmatmul.f32.gmra.mxu0 %v958
    %v992 = vpop.f32.mrf.mxu0
    %v993 = vadd.f32 %v815, %v992
    %994 = vdwg.mxu0
    %v995 = vmul.f32 %v754, %v774
    %v997 = vsel %vm890, %v995, 0
    %999 = vmatpush.msra.mxu0 0.0
    %1000 = vmatpush.msra.mxu0 0.0
    %1001 = vmatpush.msra.mxu0 0.0
    %1002 = vmatpush.msra.mxu0 0.0
    %1003 = vmatpush.msra.mxu0 0.0
    %1004 = vmatpush.msra.mxu0 0.0
    %1005 = vmatpush.msra.mxu0 0.0
    %1006 = vmatpush.msra.mxu0 0.0
    %1007 = vmatpush.msra.mxu0 0.0
    %1008 = vmatpush.msra.mxu0 0.0
    %1009 = vmatpush.msra.mxu0 0.0
    %1010 = vmatpush.msra.mxu0 0.0
    %1011 = vmatpush.msra.mxu0 0.0
    %1012 = vmatpush.msra.mxu0 0.0
    %1013 = vmatpush.msra.mxu0 0.0
    %1014 = vmatpush.msra.mxu0 %v997
    %1015 = vmatmul.f32.gmra.mxu0 %v873
    %v1016 = vpop.f32.mrf.mxu0
    %v1017 = vadd.f32 0.0, %v1016
    %1018 = vmatmul.f32.gmra.mxu0 %v876
    %v1019 = vpop.f32.mrf.mxu0
    %v1020 = vadd.f32 0.0, %v1019
    %1021 = vmatmul.f32.gmra.mxu0 %v879
    %v1022 = vpop.f32.mrf.mxu0
    %v1023 = vadd.f32 0.0, %v1022
    %1024 = vmatmul.f32.gmra.mxu0 %v882
    %v1025 = vpop.f32.mrf.mxu0
    %v1026 = vadd.f32 0.0, %v1025
    %1027 = vmatmul.f32.gmra.mxu0 %v885
    %v1028 = vpop.f32.mrf.mxu0
    %v1029 = vadd.f32 0.0, %v1028
    %1030 = vmatmul.f32.gmra.mxu0 %v888
    %v1031 = vpop.f32.mrf.mxu0
    %v1032 = vadd.f32 0.0, %v1031
    %1033 = vdwg.mxu0
    %v1034 = vmul.f32 %v1017, %v978
    %v1035 = vmul.f32 %v1020, %v981
    %v1036 = vmul.f32 %v1023, %v984
    %v1037 = vmul.f32 %v1026, %v987
    %v1038 = vmul.f32 %v1029, %v990
    %v1039 = vmul.f32 %v1032, %v993
    %v1040 = vadd.f32 %v929, %v1034
    %v1041 = vadd.f32 %v930, %v1035
    %v1042 = vadd.f32 %v931, %v1036
    %v1043 = vadd.f32 %v932, %v1037
    %v1044 = vadd.f32 %v933, %v1038
    %v1045 = vadd.f32 %v934, %v1039
    %s1046 = scalar_lea.vmem %s7, 96
    %v1047 = vld [vmem:[%s1046] sm:$0xff]
    %v1048 = vld [vmem:[%s1046 + $0x8] sm:$0xff]
    %v1049 = vld [vmem:[%s1046 + $0x10] sm:$0xff]
    %v1050 = vld [vmem:[%s1046 + $0x18] sm:$0xff]
    %v1051 = vld [vmem:[%s1046 + $0x20] sm:$0xff]
    %v1052 = vld [vmem:[%s1046 + $0x28] sm:$0xff]
    %v1054 = vsel %vm113, %v1047, 0
    %v1057 = vsel %vm113, %v1048, 0
    %v1060 = vsel %vm113, %v1049, 0
    %v1063 = vsel %vm113, %v1050, 0
    %v1066 = vsel %vm113, %v1051, 0
    %v1069 = vsel %vm113, %v1052, 0
    %1071 = vmatpush.msra.mxu0 0.0
    %1072 = vmatpush.msra.mxu0 0.0
    %1073 = vmatpush.msra.mxu0 0.0
    %1074 = vmatpush.msra.mxu0 0.0
    %1075 = vmatpush.msra.mxu0 0.0
    %1076 = vmatpush.msra.mxu0 0.0
    %1077 = vmatpush.msra.mxu0 0.0
    %1078 = vmatpush.msra.mxu0 0.0
    %1079 = vmatpush.msra.mxu0 0.0
    %1080 = vmatpush.msra.mxu0 0.0
    %1081 = vmatpush.msra.mxu0 %v355
    %1082 = vmatpush.msra.mxu0 %v354
    %1083 = vmatpush.msra.mxu0 %v353
    %1084 = vmatpush.msra.mxu0 %v352
    %1085 = vmatpush.msra.mxu0 %v351
    %1086 = vmatpush.msra.mxu0 %v350
    %1087 = vmatmul.f32.gmra.mxu0 %v1054
    %v1088 = vpop.f32.mrf.mxu0
    %v1089 = vadd.f32 %v790, %v1088
    %1090 = vmatmul.f32.gmra.mxu0 %v1057
    %v1091 = vpop.f32.mrf.mxu0
    %v1092 = vadd.f32 %v795, %v1091
    %1093 = vmatmul.f32.gmra.mxu0 %v1060
    %v1094 = vpop.f32.mrf.mxu0
    %v1095 = vadd.f32 %v800, %v1094
    %1096 = vmatmul.f32.gmra.mxu0 %v1063
    %v1097 = vpop.f32.mrf.mxu0
    %v1098 = vadd.f32 %v805, %v1097
    %1099 = vmatmul.f32.gmra.mxu0 %v1066
    %v1100 = vpop.f32.mrf.mxu0
    %v1101 = vadd.f32 %v810, %v1100
    %1102 = vmatmul.f32.gmra.mxu0 %v1069
    %v1103 = vpop.f32.mrf.mxu0
    %v1104 = vadd.f32 %v815, %v1103
    %1105 = vdwg.mxu0
    %v1106 = vmul.f32 %v757, %v774
    %v1108 = vsel %vm890, %v1106, 0
    %1110 = vmatpush.msra.mxu0 0.0
    %1111 = vmatpush.msra.mxu0 0.0
    %1112 = vmatpush.msra.mxu0 0.0
    %1113 = vmatpush.msra.mxu0 0.0
    %1114 = vmatpush.msra.mxu0 0.0
    %1115 = vmatpush.msra.mxu0 0.0
    %1116 = vmatpush.msra.mxu0 0.0
    %1117 = vmatpush.msra.mxu0 0.0
    %1118 = vmatpush.msra.mxu0 0.0
    %1119 = vmatpush.msra.mxu0 0.0
    %1120 = vmatpush.msra.mxu0 0.0
    %1121 = vmatpush.msra.mxu0 0.0
    %1122 = vmatpush.msra.mxu0 0.0
    %1123 = vmatpush.msra.mxu0 0.0
    %1124 = vmatpush.msra.mxu0 0.0
    %1125 = vmatpush.msra.mxu0 %v1108
    %1126 = vmatmul.f32.gmra.mxu0 %v873
    %v1127 = vpop.f32.mrf.mxu0
    %v1128 = vadd.f32 0.0, %v1127
    %1129 = vmatmul.f32.gmra.mxu0 %v876
    %v1130 = vpop.f32.mrf.mxu0
    %v1131 = vadd.f32 0.0, %v1130
    %1132 = vmatmul.f32.gmra.mxu0 %v879
    %v1133 = vpop.f32.mrf.mxu0
    %v1134 = vadd.f32 0.0, %v1133
    %1135 = vmatmul.f32.gmra.mxu0 %v882
    %v1136 = vpop.f32.mrf.mxu0
    %v1137 = vadd.f32 0.0, %v1136
    %1138 = vmatmul.f32.gmra.mxu0 %v885
    %v1139 = vpop.f32.mrf.mxu0
    %v1140 = vadd.f32 0.0, %v1139
    %1141 = vmatmul.f32.gmra.mxu0 %v888
    %v1142 = vpop.f32.mrf.mxu0
    %v1143 = vadd.f32 0.0, %v1142
    %1144 = vdwg.mxu0
    %v1145 = vmul.f32 %v1128, %v1089
    %v1146 = vmul.f32 %v1131, %v1092
    %v1147 = vmul.f32 %v1134, %v1095
    %v1148 = vmul.f32 %v1137, %v1098
    %v1149 = vmul.f32 %v1140, %v1101
    %v1150 = vmul.f32 %v1143, %v1104
    %v1151 = vadd.f32 %v1040, %v1145
    %v1152 = vadd.f32 %v1041, %v1146
    %v1153 = vadd.f32 %v1042, %v1147
    %v1154 = vadd.f32 %v1043, %v1148
    %v1155 = vadd.f32 %v1044, %v1149
    %v1156 = vadd.f32 %v1045, %v1150
    %v1157 = vld [vmem:[%s9] sm:$0xff]
    %v1158 = vld [vmem:[%s9 + $0x8] sm:$0xff]
    %v1159 = vld [vmem:[%s9 + $0x10] sm:$0xff]
    %v1160 = vld [vmem:[%s9 + $0x18] sm:$0xff]
    %v1161 = vld [vmem:[%s9 + $0x20] sm:$0xff]
    %v1162 = vld [vmem:[%s9 + $0x28] sm:$0xff]
    %v1163 = vld [vmem:[%s10] sm:$0xff]
    %v1164 = vld [vmem:[%s10 + $0x8] sm:$0xff]
    %v1165 = vld [vmem:[%s10 + $0x10] sm:$0xff]
    %v1166 = vld [vmem:[%s10 + $0x18] sm:$0xff]
    %v1167 = vld [vmem:[%s10 + $0x20] sm:$0xff]
    %v1168 = vld [vmem:[%s10 + $0x28] sm:$0xff]
    %1170 = vset.pattern.permute.xlu0 0
    %1171 = vperm.xlu0 %1170, %v1163
    %v1172 = vpop.permute.xlu0 %1171
    %1175 = vset.pattern.permute.xlu0 0
    %1176 = vperm.xlu0 %1175, %v1164
    %v1177 = vpop.permute.xlu0 %1176
    %1180 = vset.pattern.permute.xlu0 0
    %1181 = vperm.xlu0 %1180, %v1165
    %v1182 = vpop.permute.xlu0 %1181
    %1185 = vset.pattern.permute.xlu0 0
    %1186 = vperm.xlu0 %1185, %v1166
    %v1187 = vpop.permute.xlu0 %1186
    %1190 = vset.pattern.permute.xlu0 0
    %1191 = vperm.xlu0 %1190, %v1167
    %v1192 = vpop.permute.xlu0 %1191
    %1195 = vset.pattern.permute.xlu0 0
    %1196 = vperm.xlu0 %1195, %v1168
    %v1197 = vpop.permute.xlu0 %1196
    %v1200 = vsel %vm113, %v1157, 0
    %v1203 = vsel %vm113, %v1158, 0
    %v1206 = vsel %vm113, %v1159, 0
    %v1209 = vsel %vm113, %v1160, 0
    %v1212 = vsel %vm113, %v1161, 0
    %v1215 = vsel %vm113, %v1162, 0
    %1217 = vmatpush.msra.mxu0 0.0
    %1218 = vmatpush.msra.mxu0 0.0
    %1219 = vmatpush.msra.mxu0 0.0
    %1220 = vmatpush.msra.mxu0 0.0
    %1221 = vmatpush.msra.mxu0 0.0
    %1222 = vmatpush.msra.mxu0 0.0
    %1223 = vmatpush.msra.mxu0 0.0
    %1224 = vmatpush.msra.mxu0 0.0
    %1225 = vmatpush.msra.mxu0 0.0
    %1226 = vmatpush.msra.mxu0 0.0
    %1227 = vmatpush.msra.mxu0 %v1156
    %1228 = vmatpush.msra.mxu0 %v1155
    %1229 = vmatpush.msra.mxu0 %v1154
    %1230 = vmatpush.msra.mxu0 %v1153
    %1231 = vmatpush.msra.mxu0 %v1152
    %1232 = vmatpush.msra.mxu0 %v1151
    %1233 = vmatmul.f32.gmra.mxu0 %v1200
    %v1234 = vpop.f32.mrf.mxu0
    %v1235 = vadd.f32 %v1172, %v1234
    %1236 = vmatmul.f32.gmra.mxu0 %v1203
    %v1237 = vpop.f32.mrf.mxu0
    %v1238 = vadd.f32 %v1177, %v1237
    %1239 = vmatmul.f32.gmra.mxu0 %v1206
    %v1240 = vpop.f32.mrf.mxu0
    %v1241 = vadd.f32 %v1182, %v1240
    %1242 = vmatmul.f32.gmra.mxu0 %v1209
    %v1243 = vpop.f32.mrf.mxu0
    %v1244 = vadd.f32 %v1187, %v1243
    %1245 = vmatmul.f32.gmra.mxu0 %v1212
    %v1246 = vpop.f32.mrf.mxu0
    %v1247 = vadd.f32 %v1192, %v1246
    %1248 = vmatmul.f32.gmra.mxu0 %v1215
    %v1249 = vpop.f32.mrf.mxu0
    %v1250 = vadd.f32 %v1197, %v1249
    %1251 = vdwg.mxu0
    %v1252 = vadd.f32 %v1235, %v350
    %v1253 = vadd.f32 %v1238, %v351
    %v1254 = vadd.f32 %v1241, %v352
    %v1255 = vadd.f32 %v1244, %v353
    %v1256 = vadd.f32 %v1247, %v354
    %v1257 = vadd.f32 %v1250, %v355
    %v1258 = vld [vmem:[%s11] sm:$0xff]
    %v1259 = vld [vmem:[%s11 + $0x8] sm:$0xff]
    %v1260 = vld [vmem:[%s11 + $0x10] sm:$0xff]
    %v1261 = vld [vmem:[%s11 + $0x18] sm:$0xff]
    %v1262 = vld [vmem:[%s11 + $0x20] sm:$0xff]
    %v1263 = vld [vmem:[%s11 + $0x28] sm:$0xff]
    %v1264 = vld [vmem:[%s12] sm:$0xff]
    %v1265 = vld [vmem:[%s12 + $0x8] sm:$0xff]
    %v1266 = vld [vmem:[%s12 + $0x10] sm:$0xff]
    %v1267 = vld [vmem:[%s12 + $0x18] sm:$0xff]
    %v1268 = vld [vmem:[%s12 + $0x20] sm:$0xff]
    %v1269 = vld [vmem:[%s12 + $0x28] sm:$0xff]
    %1270 = vmatpush.msra.mxu0 0.0
    %1271 = vmatpush.msra.mxu0 0.0
    %1272 = vmatpush.msra.mxu0 0.0
    %1273 = vmatpush.msra.mxu0 0.0
    %1274 = vmatpush.msra.mxu0 0.0
    %1275 = vmatpush.msra.mxu0 0.0
    %1276 = vmatpush.msra.mxu0 0.0
    %1277 = vmatpush.msra.mxu0 0.0
    %1278 = vmatpush.msra.mxu0 0.0
    %1279 = vmatpush.msra.mxu0 0.0
    %1280 = vmatpush.msra.mxu0 %v1257
    %1281 = vmatpush.msra.mxu0 %v1256
    %1282 = vmatpush.msra.mxu0 %v1255
    %1283 = vmatpush.msra.mxu0 %v1254
    %1284 = vmatpush.msra.mxu0 %v1253
    %1285 = vmatpush.msra.mxu0 %v1252
    %1286 = vmatmul.f32.gmra.mxu0 %v115
    %v1287 = vpop.f32.mrf.mxu0
    %v1288 = vadd.f32 0.0, %v1287
    %1289 = vdwg.mxu0
    %v1290 = vmul.f32 %v1288, 0.0625
    %v1292 = vsel %vm157, %v1290, 0
    %1294 = vmatpush.msra.mxu0 0.0
    %1295 = vmatpush.msra.mxu0 0.0
    %1296 = vmatpush.msra.mxu0 0.0
    %1297 = vmatpush.msra.mxu0 0.0
    %1298 = vmatpush.msra.mxu0 0.0
    %1299 = vmatpush.msra.mxu0 0.0
    %1300 = vmatpush.msra.mxu0 0.0
    %1301 = vmatpush.msra.mxu0 0.0
    %1302 = vmatpush.msra.mxu0 0.0
    %1303 = vmatpush.msra.mxu0 0.0
    %1304 = vmatpush.msra.mxu0 0.0
    %1305 = vmatpush.msra.mxu0 0.0
    %1306 = vmatpush.msra.mxu0 0.0
    %1307 = vmatpush.msra.mxu0 0.0
    %1308 = vmatpush.msra.mxu0 0.0
    %1309 = vmatpush.msra.mxu0 %v1292
    %1310 = vmatmul.f32.gmra.mxu0 %v140
    %v1311 = vpop.f32.mrf.mxu0
    %v1312 = vadd.f32 0.0, %v1311
    %1313 = vmatmul.f32.gmra.mxu0 %v143
    %v1314 = vpop.f32.mrf.mxu0
    %v1315 = vadd.f32 0.0, %v1314
    %1316 = vmatmul.f32.gmra.mxu0 %v146
    %v1317 = vpop.f32.mrf.mxu0
    %v1318 = vadd.f32 0.0, %v1317
    %1319 = vmatmul.f32.gmra.mxu0 %v149
    %v1320 = vpop.f32.mrf.mxu0
    %v1321 = vadd.f32 0.0, %v1320
    %1322 = vmatmul.f32.gmra.mxu0 %v152
    %v1323 = vpop.f32.mrf.mxu0
    %v1324 = vadd.f32 0.0, %v1323
    %1325 = vmatmul.f32.gmra.mxu0 %v155
    %v1326 = vpop.f32.mrf.mxu0
    %v1327 = vadd.f32 0.0, %v1326
    %1328 = vdwg.mxu0
    %v1329 = vsub.f32 %v1252, %v1312
    %v1330 = vsub.f32 %v1253, %v1315
    %v1331 = vsub.f32 %v1254, %v1318
    %v1332 = vsub.f32 %v1255, %v1321
    %v1333 = vsub.f32 %v1256, %v1324
    %v1334 = vsub.f32 %v1257, %v1327
    %v1335 = vmul.f32 %v1329, %v1329
    %v1336 = vmul.f32 %v1330, %v1330
    %v1337 = vmul.f32 %v1331, %v1331
    %v1338 = vmul.f32 %v1332, %v1332
    %v1339 = vmul.f32 %v1333, %v1333
    %v1340 = vmul.f32 %v1334, %v1334
    %1341 = vmatpush.msra.mxu0 0.0
    %1342 = vmatpush.msra.mxu0 0.0
    %1343 = vmatpush.msra.mxu0 0.0
    %1344 = vmatpush.msra.mxu0 0.0
    %1345 = vmatpush.msra.mxu0 0.0
    %1346 = vmatpush.msra.mxu0 0.0
    %1347 = vmatpush.msra.mxu0 0.0
    %1348 = vmatpush.msra.mxu0 0.0
    %1349 = vmatpush.msra.mxu0 0.0
    %1350 = vmatpush.msra.mxu0 0.0
    %1351 = vmatpush.msra.mxu0 %v1340
    %1352 = vmatpush.msra.mxu0 %v1339
    %1353 = vmatpush.msra.mxu0 %v1338
    %1354 = vmatpush.msra.mxu0 %v1337
    %1355 = vmatpush.msra.mxu0 %v1336
    %1356 = vmatpush.msra.mxu0 %v1335
    %1357 = vmatmul.f32.gmra.mxu0 %v115
    %v1358 = vpop.f32.mrf.mxu0
    %v1359 = vadd.f32 0.0, %v1358
    %1360 = vdwg.mxu0
    %v1361 = vmul.f32 %v1359, 0.0625
    %v1362 = vadd.f32 %v1361, 1e-12
    %v1363 = vrsqrt.pop %v1362
    %v1364 = vmul.f32 %v1363, %v1362
    %v1365 = vmul.f32 %v1364, %v1363
    %v1366 = vmul.f32 0.5, %v1365
    %v1367 = vsub.f32 1.5, %v1366
    %v1368 = vmul.f32 %v1363, %v1367
    %vm1369 = vweird.f32 %v1362
    %vm1370 = vweird.f32 %v1363
    %vm1371 = vmor %vm1369, %vm1370
    %v1372 = vsel %vm1371, %v1363, %v1368
    %v1374 = vsel %vm157, %v1372, 0
    %1376 = vmatpush.msra.mxu0 0.0
    %1377 = vmatpush.msra.mxu0 0.0
    %1378 = vmatpush.msra.mxu0 0.0
    %1379 = vmatpush.msra.mxu0 0.0
    %1380 = vmatpush.msra.mxu0 0.0
    %1381 = vmatpush.msra.mxu0 0.0
    %1382 = vmatpush.msra.mxu0 0.0
    %1383 = vmatpush.msra.mxu0 0.0
    %1384 = vmatpush.msra.mxu0 0.0
    %1385 = vmatpush.msra.mxu0 0.0
    %1386 = vmatpush.msra.mxu0 0.0
    %1387 = vmatpush.msra.mxu0 0.0
    %1388 = vmatpush.msra.mxu0 0.0
    %1389 = vmatpush.msra.mxu0 0.0
    %1390 = vmatpush.msra.mxu0 0.0
    %1391 = vmatpush.msra.mxu0 %v1374
    %1392 = vmatmul.f32.gmra.mxu0 %v140
    %v1393 = vpop.f32.mrf.mxu0
    %v1394 = vadd.f32 0.0, %v1393
    %1395 = vmatmul.f32.gmra.mxu0 %v143
    %v1396 = vpop.f32.mrf.mxu0
    %v1397 = vadd.f32 0.0, %v1396
    %1398 = vmatmul.f32.gmra.mxu0 %v146
    %v1399 = vpop.f32.mrf.mxu0
    %v1400 = vadd.f32 0.0, %v1399
    %1401 = vmatmul.f32.gmra.mxu0 %v149
    %v1402 = vpop.f32.mrf.mxu0
    %v1403 = vadd.f32 0.0, %v1402
    %1404 = vmatmul.f32.gmra.mxu0 %v152
    %v1405 = vpop.f32.mrf.mxu0
    %v1406 = vadd.f32 0.0, %v1405
    %1407 = vmatmul.f32.gmra.mxu0 %v155
    %v1408 = vpop.f32.mrf.mxu0
    %v1409 = vadd.f32 0.0, %v1408
    %1410 = vdwg.mxu0
    %v1411 = vmul.f32 %v1329, %v1394
    %v1412 = vmul.f32 %v1330, %v1397
    %v1413 = vmul.f32 %v1331, %v1400
    %v1414 = vmul.f32 %v1332, %v1403
    %v1415 = vmul.f32 %v1333, %v1406
    %v1416 = vmul.f32 %v1334, %v1409
    %1418 = vset.pattern.permute.xlu0 0
    %1419 = vperm.xlu0 %1418, %v1258
    %v1420 = vpop.permute.xlu0 %1419
    %1423 = vset.pattern.permute.xlu0 0
    %1424 = vperm.xlu0 %1423, %v1259
    %v1425 = vpop.permute.xlu0 %1424
    %1428 = vset.pattern.permute.xlu0 0
    %1429 = vperm.xlu0 %1428, %v1260
    %v1430 = vpop.permute.xlu0 %1429
    %1433 = vset.pattern.permute.xlu0 0
    %1434 = vperm.xlu0 %1433, %v1261
    %v1435 = vpop.permute.xlu0 %1434
    %1438 = vset.pattern.permute.xlu0 0
    %1439 = vperm.xlu0 %1438, %v1262
    %v1440 = vpop.permute.xlu0 %1439
    %1443 = vset.pattern.permute.xlu0 0
    %1444 = vperm.xlu0 %1443, %v1263
    %v1445 = vpop.permute.xlu0 %1444
    %v1447 = vmul.f32 %v1411, %v1420
    %v1448 = vmul.f32 %v1412, %v1425
    %v1449 = vmul.f32 %v1413, %v1430
    %v1450 = vmul.f32 %v1414, %v1435
    %v1451 = vmul.f32 %v1415, %v1440
    %v1452 = vmul.f32 %v1416, %v1445
    %1454 = vset.pattern.permute.xlu0 0
    %1455 = vperm.xlu0 %1454, %v1264
    %v1456 = vpop.permute.xlu0 %1455
    %1459 = vset.pattern.permute.xlu0 0
    %1460 = vperm.xlu0 %1459, %v1265
    %v1461 = vpop.permute.xlu0 %1460
    %1464 = vset.pattern.permute.xlu0 0
    %1465 = vperm.xlu0 %1464, %v1266
    %v1466 = vpop.permute.xlu0 %1465
    %1469 = vset.pattern.permute.xlu0 0
    %1470 = vperm.xlu0 %1469, %v1267
    %v1471 = vpop.permute.xlu0 %1470
    %1474 = vset.pattern.permute.xlu0 0
    %1475 = vperm.xlu0 %1474, %v1268
    %v1476 = vpop.permute.xlu0 %1475
    %1479 = vset.pattern.permute.xlu0 0
    %1480 = vperm.xlu0 %1479, %v1269
    %v1481 = vpop.permute.xlu0 %1480
    %v1483 = vadd.f32 %v1447, %v1456
    %v1484 = vadd.f32 %v1448, %v1461
    %v1485 = vadd.f32 %v1449, %v1466
    %v1486 = vadd.f32 %v1450, %v1471
    %v1487 = vadd.f32 %v1451, %v1476
    %v1488 = vadd.f32 %v1452, %v1481
    %v1489 = vld [vmem:[%s13] sm:$0xff]
    %v1490 = vld [vmem:[%s13 + $0x8] sm:$0xff]
    %v1491 = vld [vmem:[%s13 + $0x10] sm:$0xff]
    %v1492 = vld [vmem:[%s13 + $0x18] sm:$0xff]
    %v1493 = vld [vmem:[%s13 + $0x20] sm:$0xff]
    %v1494 = vld [vmem:[%s13 + $0x28] sm:$0xff]
    %v1495 = vld [vmem:[%s13 + $0x30] sm:$0xff]
    %v1496 = vld [vmem:[%s13 + $0x38] sm:$0xff]
    %v1497 = vld [vmem:[%s13 + $0x40] sm:$0xff]
    %v1498 = vld [vmem:[%s13 + $0x48] sm:$0xff]
    %v1499 = vld [vmem:[%s13 + $0x50] sm:$0xff]
    %v1500 = vld [vmem:[%s13 + $0x58] sm:$0xff]
    %v1501 = vld [vmem:[%s14] sm:$0xff]
    %v1502 = vld [vmem:[%s14 + $0x8] sm:$0xff]
    %v1503 = vld [vmem:[%s14 + $0x10] sm:$0xff]
    %v1504 = vld [vmem:[%s14 + $0x18] sm:$0xff]
    %v1505 = vld [vmem:[%s14 + $0x20] sm:$0xff]
    %v1506 = vld [vmem:[%s14 + $0x28] sm:$0xff]
    %v1507 = vld [vmem:[%s14 + $0x30] sm:$0xff]
    %v1508 = vld [vmem:[%s14 + $0x38] sm:$0xff]
    %v1509 = vld [vmem:[%s14 + $0x40] sm:$0xff]
    %v1510 = vld [vmem:[%s14 + $0x48] sm:$0xff]
    %v1511 = vld [vmem:[%s14 + $0x50] sm:$0xff]
    %v1512 = vld [vmem:[%s14 + $0x58] sm:$0xff]
    %1514 = vset.pattern.permute.xlu0 0
    %1515 = vperm.xlu0 %1514, %v1501
    %v1516 = vpop.permute.xlu0 %1515
    %1519 = vset.pattern.permute.xlu0 0
    %1520 = vperm.xlu0 %1519, %v1502
    %v1521 = vpop.permute.xlu0 %1520
    %1524 = vset.pattern.permute.xlu0 0
    %1525 = vperm.xlu0 %1524, %v1503
    %v1526 = vpop.permute.xlu0 %1525
    %1529 = vset.pattern.permute.xlu0 0
    %1530 = vperm.xlu0 %1529, %v1504
    %v1531 = vpop.permute.xlu0 %1530
    %1534 = vset.pattern.permute.xlu0 0
    %1535 = vperm.xlu0 %1534, %v1505
    %v1536 = vpop.permute.xlu0 %1535
    %1539 = vset.pattern.permute.xlu0 0
    %1540 = vperm.xlu0 %1539, %v1506
    %v1541 = vpop.permute.xlu0 %1540
    %1544 = vset.pattern.permute.xlu0 0
    %1545 = vperm.xlu0 %1544, %v1507
    %v1546 = vpop.permute.xlu0 %1545
    %1549 = vset.pattern.permute.xlu0 0
    %1550 = vperm.xlu0 %1549, %v1508
    %v1551 = vpop.permute.xlu0 %1550
    %1554 = vset.pattern.permute.xlu0 0
    %1555 = vperm.xlu0 %1554, %v1509
    %v1556 = vpop.permute.xlu0 %1555
    %1559 = vset.pattern.permute.xlu0 0
    %1560 = vperm.xlu0 %1559, %v1510
    %v1561 = vpop.permute.xlu0 %1560
    %1564 = vset.pattern.permute.xlu0 0
    %1565 = vperm.xlu0 %1564, %v1511
    %v1566 = vpop.permute.xlu0 %1565
    %1569 = vset.pattern.permute.xlu0 0
    %1570 = vperm.xlu0 %1569, %v1512
    %v1571 = vpop.permute.xlu0 %1570
    %v1574 = vsel %vm113, %v1489, 0
    %v1577 = vsel %vm113, %v1490, 0
    %v1580 = vsel %vm113, %v1491, 0
    %v1583 = vsel %vm113, %v1492, 0
    %v1586 = vsel %vm113, %v1493, 0
    %v1589 = vsel %vm113, %v1494, 0
    %v1592 = vsel %vm113, %v1495, 0
    %v1595 = vsel %vm113, %v1496, 0
    %v1598 = vsel %vm113, %v1497, 0
    %v1601 = vsel %vm113, %v1498, 0
    %v1604 = vsel %vm113, %v1499, 0
    %v1607 = vsel %vm113, %v1500, 0
    %1609 = vmatpush.msra.mxu0 0.0
    %1610 = vmatpush.msra.mxu0 0.0
    %1611 = vmatpush.msra.mxu0 0.0
    %1612 = vmatpush.msra.mxu0 0.0
    %1613 = vmatpush.msra.mxu0 0.0
    %1614 = vmatpush.msra.mxu0 0.0
    %1615 = vmatpush.msra.mxu0 0.0
    %1616 = vmatpush.msra.mxu0 0.0
    %1617 = vmatpush.msra.mxu0 0.0
    %1618 = vmatpush.msra.mxu0 0.0
    %1619 = vmatpush.msra.mxu0 %v1488
    %1620 = vmatpush.msra.mxu0 %v1487
    %1621 = vmatpush.msra.mxu0 %v1486
    %1622 = vmatpush.msra.mxu0 %v1485
    %1623 = vmatpush.msra.mxu0 %v1484
    %1624 = vmatpush.msra.mxu0 %v1483
    %1625 = vmatmul.f32.gmra.mxu0 %v1574
    %v1626 = vpop.f32.mrf.mxu0
    %v1627 = vadd.f32 %v1516, %v1626
    %1628 = vmatmul.f32.gmra.mxu0 %v1577
    %v1629 = vpop.f32.mrf.mxu0
    %v1630 = vadd.f32 %v1521, %v1629
    %1631 = vmatmul.f32.gmra.mxu0 %v1580
    %v1632 = vpop.f32.mrf.mxu0
    %v1633 = vadd.f32 %v1526, %v1632
    %1634 = vmatmul.f32.gmra.mxu0 %v1583
    %v1635 = vpop.f32.mrf.mxu0
    %v1636 = vadd.f32 %v1531, %v1635
    %1637 = vmatmul.f32.gmra.mxu0 %v1586
    %v1638 = vpop.f32.mrf.mxu0
    %v1639 = vadd.f32 %v1536, %v1638
    %1640 = vmatmul.f32.gmra.mxu0 %v1589
    %v1641 = vpop.f32.mrf.mxu0
    %v1642 = vadd.f32 %v1541, %v1641
    %1643 = vmatmul.f32.gmra.mxu0 %v1592
    %v1644 = vpop.f32.mrf.mxu0
    %v1645 = vadd.f32 %v1546, %v1644
    %1646 = vmatmul.f32.gmra.mxu0 %v1595
    %v1647 = vpop.f32.mrf.mxu0
    %v1648 = vadd.f32 %v1551, %v1647
    %1649 = vmatmul.f32.gmra.mxu0 %v1598
    %v1650 = vpop.f32.mrf.mxu0
    %v1651 = vadd.f32 %v1556, %v1650
    %1652 = vmatmul.f32.gmra.mxu0 %v1601
    %v1653 = vpop.f32.mrf.mxu0
    %v1654 = vadd.f32 %v1561, %v1653
    %1655 = vmatmul.f32.gmra.mxu0 %v1604
    %v1656 = vpop.f32.mrf.mxu0
    %v1657 = vadd.f32 %v1566, %v1656
    %1658 = vmatmul.f32.gmra.mxu0 %v1607
    %v1659 = vpop.f32.mrf.mxu0
    %v1660 = vadd.f32 %v1571, %v1659
    %1661 = vdwg.mxu0
    %v1662 = vmul.f32 %v1627, 0.5
    %v1663 = vmul.f32 %v1630, 0.5
    %v1664 = vmul.f32 %v1633, 0.5
    %v1665 = vmul.f32 %v1636, 0.5
    %v1666 = vmul.f32 %v1639, 0.5
    %v1667 = vmul.f32 %v1642, 0.5
    %v1668 = vmul.f32 %v1645, 0.5
    %v1669 = vmul.f32 %v1648, 0.5
    %v1670 = vmul.f32 %v1651, 0.5
    %v1671 = vmul.f32 %v1654, 0.5
    %v1672 = vmul.f32 %v1657, 0.5
    %v1673 = vmul.f32 %v1660, 0.5
    %v1674 = vmul.f32 %v1627, 0.70710677
    %v1675 = vmul.f32 %v1630, 0.70710677
    %v1676 = vmul.f32 %v1633, 0.70710677
    %v1677 = vmul.f32 %v1636, 0.70710677
    %v1678 = vmul.f32 %v1639, 0.70710677
    %v1679 = vmul.f32 %v1642, 0.70710677
    %v1680 = vmul.f32 %v1645, 0.70710677
    %v1681 = vmul.f32 %v1648, 0.70710677
    %v1682 = vmul.f32 %v1651, 0.70710677
    %v1683 = vmul.f32 %v1654, 0.70710677
    %v1684 = vmul.f32 %v1657, 0.70710677
    %v1685 = vmul.f32 %v1660, 0.70710677
    %v1686 = vand.u32 2147483647, %v1674
    %v1687 = vand.u32 2147483647, %v1675
    %v1688 = vand.u32 2147483647, %v1676
    %v1689 = vand.u32 2147483647, %v1677
    %v1690 = vand.u32 2147483647, %v1678
    %v1691 = vand.u32 2147483647, %v1679
    %v1692 = vand.u32 2147483647, %v1680
    %v1693 = vand.u32 2147483647, %v1681
    %v1694 = vand.u32 2147483647, %v1682
    %v1695 = vand.u32 2147483647, %v1683
    %v1696 = vand.u32 2147483647, %v1684
    %v1697 = vand.u32 2147483647, %v1685
    %v1698 = vmul.f32 %v1686, 0.3275911
    %v1699 = vmul.f32 %v1687, 0.3275911
    %v1700 = vmul.f32 %v1688, 0.3275911
    %v1701 = vmul.f32 %v1689, 0.3275911
    %v1702 = vmul.f32 %v1690, 0.3275911
    %v1703 = vmul.f32 %v1691, 0.3275911
    %v1704 = vmul.f32 %v1692, 0.3275911
    %v1705 = vmul.f32 %v1693, 0.3275911
    %v1706 = vmul.f32 %v1694, 0.3275911
    %v1707 = vmul.f32 %v1695, 0.3275911
    %v1708 = vmul.f32 %v1696, 0.3275911
    %v1709 = vmul.f32 %v1697, 0.3275911
    %v1710 = vadd.f32 %v1698, 1.0
    %v1711 = vadd.f32 %v1699, 1.0
    %v1712 = vadd.f32 %v1700, 1.0
    %v1713 = vadd.f32 %v1701, 1.0
    %v1714 = vadd.f32 %v1702, 1.0
    %v1715 = vadd.f32 %v1703, 1.0
    %v1716 = vadd.f32 %v1704, 1.0
    %v1717 = vadd.f32 %v1705, 1.0
    %v1718 = vadd.f32 %v1706, 1.0
    %v1719 = vadd.f32 %v1707, 1.0
    %v1720 = vadd.f32 %v1708, 1.0
    %v1721 = vadd.f32 %v1709, 1.0
    %v1722 = vrcp.pop %v1710
    %v1723 = vmul.f32 %v1710, %v1722
    %v1724 = vsub.f32 1.0, %v1723
    %v1725 = vmul.f32 %v1722, %v1724
    %v1726 = vadd.f32 %v1722, %v1725
    %vm1727 = vweird.f32 %v1710
    %vm1728 = vweird.f32 %v1722
    %vm1729 = vmor %vm1727, %vm1728
    %v1730 = vsel %vm1729, %v1722, %v1726
    %v1731 = vand.u32 2147483647, %v1710
    %vm1732 = vcmp.eq.f32.partialorder %v1731, 8.507059e+37
    %v1733 = vand.u32 %v1710, 2147483648
    %v1734 = vor.u32 1.1754944e-38, %v1733
    %v1735 = vsel %vm1732, %v1734, %v1730
    %v1736 = vmul.f32 1.0, %v1735
    %v1737 = vrcp.pop %v1711
    %v1738 = vmul.f32 %v1711, %v1737
    %v1739 = vsub.f32 1.0, %v1738
    %v1740 = vmul.f32 %v1737, %v1739
    %v1741 = vadd.f32 %v1737, %v1740
    %vm1742 = vweird.f32 %v1711
    %vm1743 = vweird.f32 %v1737
    %vm1744 = vmor %vm1742, %vm1743
    %v1745 = vsel %vm1744, %v1737, %v1741
    %v1746 = vand.u32 2147483647, %v1711
    %vm1747 = vcmp.eq.f32.partialorder %v1746, 8.507059e+37
    %v1748 = vand.u32 %v1711, 2147483648
    %v1749 = vor.u32 1.1754944e-38, %v1748
    %v1750 = vsel %vm1747, %v1749, %v1745
    %v1751 = vmul.f32 1.0, %v1750
    %v1752 = vrcp.pop %v1712
    %v1753 = vmul.f32 %v1712, %v1752
    %v1754 = vsub.f32 1.0, %v1753
    %v1755 = vmul.f32 %v1752, %v1754
    %v1756 = vadd.f32 %v1752, %v1755
    %vm1757 = vweird.f32 %v1712
    %vm1758 = vweird.f32 %v1752
    %vm1759 = vmor %vm1757, %vm1758
    %v1760 = vsel %vm1759, %v1752, %v1756
    %v1761 = vand.u32 2147483647, %v1712
    %vm1762 = vcmp.eq.f32.partialorder %v1761, 8.507059e+37
    %v1763 = vand.u32 %v1712, 2147483648
    %v1764 = vor.u32 1.1754944e-38, %v1763
    %v1765 = vsel %vm1762, %v1764, %v1760
    %v1766 = vmul.f32 1.0, %v1765
    %v1767 = vrcp.pop %v1713
    %v1768 = vmul.f32 %v1713, %v1767
    %v1769 = vsub.f32 1.0, %v1768
    %v1770 = vmul.f32 %v1767, %v1769
    %v1771 = vadd.f32 %v1767, %v1770
    %vm1772 = vweird.f32 %v1713
    %vm1773 = vweird.f32 %v1767
    %vm1774 = vmor %vm1772, %vm1773
    %v1775 = vsel %vm1774, %v1767, %v1771
    %v1776 = vand.u32 2147483647, %v1713
    %vm1777 = vcmp.eq.f32.partialorder %v1776, 8.507059e+37
    %v1778 = vand.u32 %v1713, 2147483648
    %v1779 = vor.u32 1.1754944e-38, %v1778
    %v1780 = vsel %vm1777, %v1779, %v1775
    %v1781 = vmul.f32 1.0, %v1780
    %v1782 = vrcp.pop %v1714
    %v1783 = vmul.f32 %v1714, %v1782
    %v1784 = vsub.f32 1.0, %v1783
    %v1785 = vmul.f32 %v1782, %v1784
    %v1786 = vadd.f32 %v1782, %v1785
    %vm1787 = vweird.f32 %v1714
    %vm1788 = vweird.f32 %v1782
    %vm1789 = vmor %vm1787, %vm1788
    %v1790 = vsel %vm1789, %v1782, %v1786
    %v1791 = vand.u32 2147483647, %v1714
    %vm1792 = vcmp.eq.f32.partialorder %v1791, 8.507059e+37
    %v1793 = vand.u32 %v1714, 2147483648
    %v1794 = vor.u32 1.1754944e-38, %v1793
    %v1795 = vsel %vm1792, %v1794, %v1790
    %v1796 = vmul.f32 1.0, %v1795
    %v1797 = vrcp.pop %v1715
    %v1798 = vmul.f32 %v1715, %v1797
    %v1799 = vsub.f32 1.0, %v1798
    %v1800 = vmul.f32 %v1797, %v1799
    %v1801 = vadd.f32 %v1797, %v1800
    %vm1802 = vweird.f32 %v1715
    %vm1803 = vweird.f32 %v1797
    %vm1804 = vmor %vm1802, %vm1803
    %v1805 = vsel %vm1804, %v1797, %v1801
    %v1806 = vand.u32 2147483647, %v1715
    %vm1807 = vcmp.eq.f32.partialorder %v1806, 8.507059e+37
    %v1808 = vand.u32 %v1715, 2147483648
    %v1809 = vor.u32 1.1754944e-38, %v1808
    %v1810 = vsel %vm1807, %v1809, %v1805
    %v1811 = vmul.f32 1.0, %v1810
    %v1812 = vrcp.pop %v1716
    %v1813 = vmul.f32 %v1716, %v1812
    %v1814 = vsub.f32 1.0, %v1813
    %v1815 = vmul.f32 %v1812, %v1814
    %v1816 = vadd.f32 %v1812, %v1815
    %vm1817 = vweird.f32 %v1716
    %vm1818 = vweird.f32 %v1812
    %vm1819 = vmor %vm1817, %vm1818
    %v1820 = vsel %vm1819, %v1812, %v1816
    %v1821 = vand.u32 2147483647, %v1716
    %vm1822 = vcmp.eq.f32.partialorder %v1821, 8.507059e+37
    %v1823 = vand.u32 %v1716, 2147483648
    %v1824 = vor.u32 1.1754944e-38, %v1823
    %v1825 = vsel %vm1822, %v1824, %v1820
    %v1826 = vmul.f32 1.0, %v1825
    %v1827 = vrcp.pop %v1717
    %v1828 = vmul.f32 %v1717, %v1827
    %v1829 = vsub.f32 1.0, %v1828
    %v1830 = vmul.f32 %v1827, %v1829
    %v1831 = vadd.f32 %v1827, %v1830
    %vm1832 = vweird.f32 %v1717
    %vm1833 = vweird.f32 %v1827
    %vm1834 = vmor %vm1832, %vm1833
    %v1835 = vsel %vm1834, %v1827, %v1831
    %v1836 = vand.u32 2147483647, %v1717
    %vm1837 = vcmp.eq.f32.partialorder %v1836, 8.507059e+37
    %v1838 = vand.u32 %v1717, 2147483648
    %v1839 = vor.u32 1.1754944e-38, %v1838
    %v1840 = vsel %vm1837, %v1839, %v1835
    %v1841 = vmul.f32 1.0, %v1840
    %v1842 = vrcp.pop %v1718
    %v1843 = vmul.f32 %v1718, %v1842
    %v1844 = vsub.f32 1.0, %v1843
    %v1845 = vmul.f32 %v1842, %v1844
    %v1846 = vadd.f32 %v1842, %v1845
    %vm1847 = vweird.f32 %v1718
    %vm1848 = vweird.f32 %v1842
    %vm1849 = vmor %vm1847, %vm1848
    %v1850 = vsel %vm1849, %v1842, %v1846
    %v1851 = vand.u32 2147483647, %v1718
    %vm1852 = vcmp.eq.f32.partialorder %v1851, 8.507059e+37
    %v1853 = vand.u32 %v1718, 2147483648
    %v1854 = vor.u32 1.1754944e-38, %v1853
    %v1855 = vsel %vm1852, %v1854, %v1850
    %v1856 = vmul.f32 1.0, %v1855
    %v1857 = vrcp.pop %v1719
    %v1858 = vmul.f32 %v1719, %v1857
    %v1859 = vsub.f32 1.0, %v1858
    %v1860 = vmul.f32 %v1857, %v1859
    %v1861 = vadd.f32 %v1857, %v1860
    %vm1862 = vweird.f32 %v1719
    %vm1863 = vweird.f32 %v1857
    %vm1864 = vmor %vm1862, %vm1863
    %v1865 = vsel %vm1864, %v1857, %v1861
    %v1866 = vand.u32 2147483647, %v1719
    %vm1867 = vcmp.eq.f32.partialorder %v1866, 8.507059e+37
    %v1868 = vand.u32 %v1719, 2147483648
    %v1869 = vor.u32 1.1754944e-38, %v1868
    %v1870 = vsel %vm1867, %v1869, %v1865
    %v1871 = vmul.f32 1.0, %v1870
    %v1872 = vrcp.pop %v1720
    %v1873 = vmul.f32 %v1720, %v1872
    %v1874 = vsub.f32 1.0, %v1873
    %v1875 = vmul.f32 %v1872, %v1874
    %v1876 = vadd.f32 %v1872, %v1875
    %vm1877 = vweird.f32 %v1720
    %vm1878 = vweird.f32 %v1872
    %vm1879 = vmor %vm1877, %vm1878
    %v1880 = vsel %vm1879, %v1872, %v1876
    %v1881 = vand.u32 2147483647, %v1720
    %vm1882 = vcmp.eq.f32.partialorder %v1881, 8.507059e+37
    %v1883 = vand.u32 %v1720, 2147483648
    %v1884 = vor.u32 1.1754944e-38, %v1883
    %v1885 = vsel %vm1882, %v1884, %v1880
    %v1886 = vmul.f32 1.0, %v1885
    %v1887 = vrcp.pop %v1721
    %v1888 = vmul.f32 %v1721, %v1887
    %v1889 = vsub.f32 1.0, %v1888
    %v1890 = vmul.f32 %v1887, %v1889
    %v1891 = vadd.f32 %v1887, %v1890
    %vm1892 = vweird.f32 %v1721
    %vm1893 = vweird.f32 %v1887
    %vm1894 = vmor %vm1892, %vm1893
    %v1895 = vsel %vm1894, %v1887, %v1891
    %v1896 = vand.u32 2147483647, %v1721
    %vm1897 = vcmp.eq.f32.partialorder %v1896, 8.507059e+37
    %v1898 = vand.u32 %v1721, 2147483648
    %v1899 = vor.u32 1.1754944e-38, %v1898
    %v1900 = vsel %vm1897, %v1899, %v1895
    %v1901 = vmul.f32 1.0, %v1900
    %v1902 = vmul.f32 %v1736, 1.0614054
    %v1903 = vmul.f32 %v1751, 1.0614054
    %v1904 = vmul.f32 %v1766, 1.0614054
    %v1905 = vmul.f32 %v1781, 1.0614054
    %v1906 = vmul.f32 %v1796, 1.0614054
    %v1907 = vmul.f32 %v1811, 1.0614054
    %v1908 = vmul.f32 %v1826, 1.0614054
    %v1909 = vmul.f32 %v1841, 1.0614054
    %v1910 = vmul.f32 %v1856, 1.0614054
    %v1911 = vmul.f32 %v1871, 1.0614054
    %v1912 = vmul.f32 %v1886, 1.0614054
    %v1913 = vmul.f32 %v1901, 1.0614054
    %v1914 = vadd.f32 %v1902, -1.4531521
    %v1915 = vadd.f32 %v1903, -1.4531521
    %v1916 = vadd.f32 %v1904, -1.4531521
    %v1917 = vadd.f32 %v1905, -1.4531521
    %v1918 = vadd.f32 %v1906, -1.4531521
    %v1919 = vadd.f32 %v1907, -1.4531521
    %v1920 = vadd.f32 %v1908, -1.4531521
    %v1921 = vadd.f32 %v1909, -1.4531521
    %v1922 = vadd.f32 %v1910, -1.4531521
    %v1923 = vadd.f32 %v1911, -1.4531521
    %v1924 = vadd.f32 %v1912, -1.4531521
    %v1925 = vadd.f32 %v1913, -1.4531521
    %v1926 = vmul.f32 %v1914, %v1736
    %v1927 = vmul.f32 %v1915, %v1751
    %v1928 = vmul.f32 %v1916, %v1766
    %v1929 = vmul.f32 %v1917, %v1781
    %v1930 = vmul.f32 %v1918, %v1796
    %v1931 = vmul.f32 %v1919, %v1811
    %v1932 = vmul.f32 %v1920, %v1826
    %v1933 = vmul.f32 %v1921, %v1841
    %v1934 = vmul.f32 %v1922, %v1856
    %v1935 = vmul.f32 %v1923, %v1871
    %v1936 = vmul.f32 %v1924, %v1886
    %v1937 = vmul.f32 %v1925, %v1901
    %v1938 = vadd.f32 %v1926, 1.4214138
    %v1939 = vadd.f32 %v1927, 1.4214138
    %v1940 = vadd.f32 %v1928, 1.4214138
    %v1941 = vadd.f32 %v1929, 1.4214138
    %v1942 = vadd.f32 %v1930, 1.4214138
    %v1943 = vadd.f32 %v1931, 1.4214138
    %v1944 = vadd.f32 %v1932, 1.4214138
    %v1945 = vadd.f32 %v1933, 1.4214138
    %v1946 = vadd.f32 %v1934, 1.4214138
    %v1947 = vadd.f32 %v1935, 1.4214138
    %v1948 = vadd.f32 %v1936, 1.4214138
    %v1949 = vadd.f32 %v1937, 1.4214138
    %v1950 = vmul.f32 %v1938, %v1736
    %v1951 = vmul.f32 %v1939, %v1751
    %v1952 = vmul.f32 %v1940, %v1766
    %v1953 = vmul.f32 %v1941, %v1781
    %v1954 = vmul.f32 %v1942, %v1796
    %v1955 = vmul.f32 %v1943, %v1811
    %v1956 = vmul.f32 %v1944, %v1826
    %v1957 = vmul.f32 %v1945, %v1841
    %v1958 = vmul.f32 %v1946, %v1856
    %v1959 = vmul.f32 %v1947, %v1871
    %v1960 = vmul.f32 %v1948, %v1886
    %v1961 = vmul.f32 %v1949, %v1901
    %v1962 = vadd.f32 %v1950, -0.28449672
    %v1963 = vadd.f32 %v1951, -0.28449672
    %v1964 = vadd.f32 %v1952, -0.28449672
    %v1965 = vadd.f32 %v1953, -0.28449672
    %v1966 = vadd.f32 %v1954, -0.28449672
    %v1967 = vadd.f32 %v1955, -0.28449672
    %v1968 = vadd.f32 %v1956, -0.28449672
    %v1969 = vadd.f32 %v1957, -0.28449672
    %v1970 = vadd.f32 %v1958, -0.28449672
    %v1971 = vadd.f32 %v1959, -0.28449672
    %v1972 = vadd.f32 %v1960, -0.28449672
    %v1973 = vadd.f32 %v1961, -0.28449672
    %v1974 = vmul.f32 %v1962, %v1736
    %v1975 = vmul.f32 %v1963, %v1751
    %v1976 = vmul.f32 %v1964, %v1766
    %v1977 = vmul.f32 %v1965, %v1781
    %v1978 = vmul.f32 %v1966, %v1796
    %v1979 = vmul.f32 %v1967, %v1811
    %v1980 = vmul.f32 %v1968, %v1826
    %v1981 = vmul.f32 %v1969, %v1841
    %v1982 = vmul.f32 %v1970, %v1856
    %v1983 = vmul.f32 %v1971, %v1871
    %v1984 = vmul.f32 %v1972, %v1886
    %v1985 = vmul.f32 %v1973, %v1901
    %v1986 = vadd.f32 %v1974, 0.2548296
    %v1987 = vadd.f32 %v1975, 0.2548296
    %v1988 = vadd.f32 %v1976, 0.2548296
    %v1989 = vadd.f32 %v1977, 0.2548296
    %v1990 = vadd.f32 %v1978, 0.2548296
    %v1991 = vadd.f32 %v1979, 0.2548296
    %v1992 = vadd.f32 %v1980, 0.2548296
    %v1993 = vadd.f32 %v1981, 0.2548296
    %v1994 = vadd.f32 %v1982, 0.2548296
    %v1995 = vadd.f32 %v1983, 0.2548296
    %v1996 = vadd.f32 %v1984, 0.2548296
    %v1997 = vadd.f32 %v1985, 0.2548296
    %v1998 = vmul.f32 %v1986, %v1736
    %v1999 = vmul.f32 %v1987, %v1751
    %v2000 = vmul.f32 %v1988, %v1766
    %v2001 = vmul.f32 %v1989, %v1781
    %v2002 = vmul.f32 %v1990, %v1796
    %v2003 = vmul.f32 %v1991, %v1811
    %v2004 = vmul.f32 %v1992, %v1826
    %v2005 = vmul.f32 %v1993, %v1841
    %v2006 = vmul.f32 %v1994, %v1856
    %v2007 = vmul.f32 %v1995, %v1871
    %v2008 = vmul.f32 %v1996, %v1886
    %v2009 = vmul.f32 %v1997, %v1901
    %v2010 = vsub.f32 0.0, %v1686
    %v2011 = vsub.f32 0.0, %v1687
    %v2012 = vsub.f32 0.0, %v1688
    %v2013 = vsub.f32 0.0, %v1689
    %v2014 = vsub.f32 0.0, %v1690
    %v2015 = vsub.f32 0.0, %v1691
    %v2016 = vsub.f32 0.0, %v1692
    %v2017 = vsub.f32 0.0, %v1693
    %v2018 = vsub.f32 0.0, %v1694
    %v2019 = vsub.f32 0.0, %v1695
    %v2020 = vsub.f32 0.0, %v1696
    %v2021 = vsub.f32 0.0, %v1697
    %v2022 = vmul.f32 %v2010, %v1686
    %v2023 = vmul.f32 %v2011, %v1687
    %v2024 = vmul.f32 %v2012, %v1688
    %v2025 = vmul.f32 %v2013, %v1689
    %v2026 = vmul.f32 %v2014, %v1690
    %v2027 = vmul.f32 %v2015, %v1691
    %v2028 = vmul.f32 %v2016, %v1692
    %v2029 = vmul.f32 %v2017, %v1693
    %v2030 = vmul.f32 %v2018, %v1694
    %v2031 = vmul.f32 %v2019, %v1695
    %v2032 = vmul.f32 %v2020, %v1696
    %v2033 = vmul.f32 %v2021, %v1697
    %v2034 = vmul.f32 %v2022, 1.442695
    %v2035 = vpow.pop %v2034
    %v2036 = vmul.f32 %v2023, 1.442695
    %v2037 = vpow.pop %v2036
    %v2038 = vmul.f32 %v2024, 1.442695
    %v2039 = vpow.pop %v2038
    %v2040 = vmul.f32 %v2025, 1.442695
    %v2041 = vpow.pop %v2040
    %v2042 = vmul.f32 %v2026, 1.442695
    %v2043 = vpow.pop %v2042
    %v2044 = vmul.f32 %v2027, 1.442695
    %v2045 = vpow.pop %v2044
    %v2046 = vmul.f32 %v2028, 1.442695
    %v2047 = vpow.pop %v2046
    %v2048 = vmul.f32 %v2029, 1.442695
    %v2049 = vpow.pop %v2048
    %v2050 = vmul.f32 %v2030, 1.442695
    %v2051 = vpow.pop %v2050
    %v2052 = vmul.f32 %v2031, 1.442695
    %v2053 = vpow.pop %v2052
    %v2054 = vmul.f32 %v2032, 1.442695
    %v2055 = vpow.pop %v2054
    %v2056 = vmul.f32 %v2033, 1.442695
    %v2057 = vpow.pop %v2056
    %v2058 = vmul.f32 %v1998, %v2035
    %v2059 = vmul.f32 %v1999, %v2037
    %v2060 = vmul.f32 %v2000, %v2039
    %v2061 = vmul.f32 %v2001, %v2041
    %v2062 = vmul.f32 %v2002, %v2043
    %v2063 = vmul.f32 %v2003, %v2045
    %v2064 = vmul.f32 %v2004, %v2047
    %v2065 = vmul.f32 %v2005, %v2049
    %v2066 = vmul.f32 %v2006, %v2051
    %v2067 = vmul.f32 %v2007, %v2053
    %v2068 = vmul.f32 %v2008, %v2055
    %v2069 = vmul.f32 %v2009, %v2057
    %v2070 = vsub.f32 1.0, %v2058
    %v2071 = vsub.f32 1.0, %v2059
    %v2072 = vsub.f32 1.0, %v2060
    %v2073 = vsub.f32 1.0, %v2061
    %v2074 = vsub.f32 1.0, %v2062
    %v2075 = vsub.f32 1.0, %v2063
    %v2076 = vsub.f32 1.0, %v2064
    %v2077 = vsub.f32 1.0, %v2065
    %v2078 = vsub.f32 1.0, %v2066
    %v2079 = vsub.f32 1.0, %v2067
    %v2080 = vsub.f32 1.0, %v2068
    %v2081 = vsub.f32 1.0, %v2069
    %vm2082 = vcmp.lt.f32.partialorder %v1674, 0.0
    %vm2083 = vcmp.lt.f32.partialorder %v1675, 0.0
    %vm2084 = vcmp.lt.f32.partialorder %v1676, 0.0
    %vm2085 = vcmp.lt.f32.partialorder %v1677, 0.0
    %vm2086 = vcmp.lt.f32.partialorder %v1678, 0.0
    %vm2087 = vcmp.lt.f32.partialorder %v1679, 0.0
    %vm2088 = vcmp.lt.f32.partialorder %v1680, 0.0
    %vm2089 = vcmp.lt.f32.partialorder %v1681, 0.0
    %vm2090 = vcmp.lt.f32.partialorder %v1682, 0.0
    %vm2091 = vcmp.lt.f32.partialorder %v1683, 0.0
    %vm2092 = vcmp.lt.f32.partialorder %v1684, 0.0
    %vm2093 = vcmp.lt.f32.partialorder %v1685, 0.0
    %v2094 = vsub.f32 0.0, %v2070
    %v2095 = vsub.f32 0.0, %v2071
    %v2096 = vsub.f32 0.0, %v2072
    %v2097 = vsub.f32 0.0, %v2073
    %v2098 = vsub.f32 0.0, %v2074
    %v2099 = vsub.f32 0.0, %v2075
    %v2100 = vsub.f32 0.0, %v2076
    %v2101 = vsub.f32 0.0, %v2077
    %v2102 = vsub.f32 0.0, %v2078
    %v2103 = vsub.f32 0.0, %v2079
    %v2104 = vsub.f32 0.0, %v2080
    %v2105 = vsub.f32 0.0, %v2081
    %v2106 = vsel %vm2082, %v2094, %v2070
    %v2107 = vsel %vm2083, %v2095, %v2071
    %v2108 = vsel %vm2084, %v2096, %v2072
    %v2109 = vsel %vm2085, %v2097, %v2073
    %v2110 = vsel %vm2086, %v2098, %v2074
    %v2111 = vsel %vm2087, %v2099, %v2075
    %v2112 = vsel %vm2088, %v2100, %v2076
    %v2113 = vsel %vm2089, %v2101, %v2077
    %v2114 = vsel %vm2090, %v2102, %v2078
    %v2115 = vsel %vm2091, %v2103, %v2079
    %v2116 = vsel %vm2092, %v2104, %v2080
    %v2117 = vsel %vm2093, %v2105, %v2081
    %v2118 = vadd.f32 %v2106, 1.0
    %v2119 = vadd.f32 %v2107, 1.0
    %v2120 = vadd.f32 %v2108, 1.0
    %v2121 = vadd.f32 %v2109, 1.0
    %v2122 = vadd.f32 %v2110, 1.0
    %v2123 = vadd.f32 %v2111, 1.0
    %v2124 = vadd.f32 %v2112, 1.0
    %v2125 = vadd.f32 %v2113, 1.0
    %v2126 = vadd.f32 %v2114, 1.0
    %v2127 = vadd.f32 %v2115, 1.0
    %v2128 = vadd.f32 %v2116, 1.0
    %v2129 = vadd.f32 %v2117, 1.0
    %v2130 = vmul.f32 %v1662, %v2118
    %v2131 = vmul.f32 %v1663, %v2119
    %v2132 = vmul.f32 %v1664, %v2120
    %v2133 = vmul.f32 %v1665, %v2121
    %v2134 = vmul.f32 %v1666, %v2122
    %v2135 = vmul.f32 %v1667, %v2123
    %v2136 = vmul.f32 %v1668, %v2124
    %v2137 = vmul.f32 %v1669, %v2125
    %v2138 = vmul.f32 %v1670, %v2126
    %v2139 = vmul.f32 %v1671, %v2127
    %v2140 = vmul.f32 %v1672, %v2128
    %v2141 = vmul.f32 %v1673, %v2129
    %v2142 = vld [vmem:[%s15] sm:$0xff]
    %v2143 = vld [vmem:[%s15 + $0x8] sm:$0xff]
    %v2144 = vld [vmem:[%s15 + $0x10] sm:$0xff]
    %v2145 = vld [vmem:[%s15 + $0x18] sm:$0xff]
    %v2146 = vld [vmem:[%s15 + $0x20] sm:$0xff]
    %v2147 = vld [vmem:[%s15 + $0x28] sm:$0xff]
    %v2148 = vld [vmem:[%s16] sm:$0xff]
    %v2149 = vld [vmem:[%s16 + $0x8] sm:$0xff]
    %v2150 = vld [vmem:[%s16 + $0x10] sm:$0xff]
    %v2151 = vld [vmem:[%s16 + $0x18] sm:$0xff]
    %v2152 = vld [vmem:[%s16 + $0x20] sm:$0xff]
    %v2153 = vld [vmem:[%s16 + $0x28] sm:$0xff]
    %2155 = vset.pattern.permute.xlu0 0
    %2156 = vperm.xlu0 %2155, %v2148
    %v2157 = vpop.permute.xlu0 %2156
    %2160 = vset.pattern.permute.xlu0 0
    %2161 = vperm.xlu0 %2160, %v2149
    %v2162 = vpop.permute.xlu0 %2161
    %2165 = vset.pattern.permute.xlu0 0
    %2166 = vperm.xlu0 %2165, %v2150
    %v2167 = vpop.permute.xlu0 %2166
    %2170 = vset.pattern.permute.xlu0 0
    %2171 = vperm.xlu0 %2170, %v2151
    %v2172 = vpop.permute.xlu0 %2171
    %2175 = vset.pattern.permute.xlu0 0
    %2176 = vperm.xlu0 %2175, %v2152
    %v2177 = vpop.permute.xlu0 %2176
    %2180 = vset.pattern.permute.xlu0 0
    %2181 = vperm.xlu0 %2180, %v2153
    %v2182 = vpop.permute.xlu0 %2181
    %vm2184 = vcmask 785408
    %v2186 = vsel %vm2184, %v2142, 0
    %v2189 = vsel %vm2184, %v2143, 0
    %v2192 = vsel %vm2184, %v2144, 0
    %v2195 = vsel %vm2184, %v2145, 0
    %v2198 = vsel %vm2184, %v2146, 0
    %v2201 = vsel %vm2184, %v2147, 0
    %2203 = vmatpush.msra.mxu0 0.0
    %2204 = vmatpush.msra.mxu0 0.0
    %2205 = vmatpush.msra.mxu0 0.0
    %2206 = vmatpush.msra.mxu0 0.0
    %2207 = vmatpush.msra.mxu0 %v2141
    %2208 = vmatpush.msra.mxu0 %v2140
    %2209 = vmatpush.msra.mxu0 %v2139
    %2210 = vmatpush.msra.mxu0 %v2138
    %2211 = vmatpush.msra.mxu0 %v2137
    %2212 = vmatpush.msra.mxu0 %v2136
    %2213 = vmatpush.msra.mxu0 %v2135
    %2214 = vmatpush.msra.mxu0 %v2134
    %2215 = vmatpush.msra.mxu0 %v2133
    %2216 = vmatpush.msra.mxu0 %v2132
    %2217 = vmatpush.msra.mxu0 %v2131
    %2218 = vmatpush.msra.mxu0 %v2130
    %2219 = vmatmul.f32.gmra.mxu0 %v2186
    %v2220 = vpop.f32.mrf.mxu0
    %v2221 = vadd.f32 %v2157, %v2220
    %2222 = vmatmul.f32.gmra.mxu0 %v2189
    %v2223 = vpop.f32.mrf.mxu0
    %v2224 = vadd.f32 %v2162, %v2223
    %2225 = vmatmul.f32.gmra.mxu0 %v2192
    %v2226 = vpop.f32.mrf.mxu0
    %v2227 = vadd.f32 %v2167, %v2226
    %2228 = vmatmul.f32.gmra.mxu0 %v2195
    %v2229 = vpop.f32.mrf.mxu0
    %v2230 = vadd.f32 %v2172, %v2229
    %2231 = vmatmul.f32.gmra.mxu0 %v2198
    %v2232 = vpop.f32.mrf.mxu0
    %v2233 = vadd.f32 %v2177, %v2232
    %2234 = vmatmul.f32.gmra.mxu0 %v2201
    %v2235 = vpop.f32.mrf.mxu0
    %v2236 = vadd.f32 %v2182, %v2235
    %2237 = vdwg.mxu0
    %v2238 = vadd.f32 %v2221, %v1483
    %v2239 = vadd.f32 %v2224, %v1484
    %v2240 = vadd.f32 %v2227, %v1485
    %v2241 = vadd.f32 %v2230, %v1486
    %v2242 = vadd.f32 %v2233, %v1487
    %v2243 = vadd.f32 %v2236, %v1488
    %v2244 = vld [vmem:[%s17] sm:$0xff]
    %v2245 = vld [vmem:[%s17 + $0x8] sm:$0xff]
    %v2246 = vld [vmem:[%s17 + $0x10] sm:$0xff]
    %v2247 = vld [vmem:[%s17 + $0x18] sm:$0xff]
    %v2248 = vld [vmem:[%s17 + $0x20] sm:$0xff]
    %v2249 = vld [vmem:[%s17 + $0x28] sm:$0xff]
    %v2250 = vld [vmem:[%s18] sm:$0xff]
    %v2251 = vld [vmem:[%s18 + $0x8] sm:$0xff]
    %v2252 = vld [vmem:[%s18 + $0x10] sm:$0xff]
    %v2253 = vld [vmem:[%s18 + $0x18] sm:$0xff]
    %v2254 = vld [vmem:[%s18 + $0x20] sm:$0xff]
    %v2255 = vld [vmem:[%s18 + $0x28] sm:$0xff]
    %2256 = vmatpush.msra.mxu0 0.0
    %2257 = vmatpush.msra.mxu0 0.0
    %2258 = vmatpush.msra.mxu0 0.0
    %2259 = vmatpush.msra.mxu0 0.0
    %2260 = vmatpush.msra.mxu0 0.0
    %2261 = vmatpush.msra.mxu0 0.0
    %2262 = vmatpush.msra.mxu0 0.0
    %2263 = vmatpush.msra.mxu0 0.0
    %2264 = vmatpush.msra.mxu0 0.0
    %2265 = vmatpush.msra.mxu0 0.0
    %2266 = vmatpush.msra.mxu0 %v2243
    %2267 = vmatpush.msra.mxu0 %v2242
    %2268 = vmatpush.msra.mxu0 %v2241
    %2269 = vmatpush.msra.mxu0 %v2240
    %2270 = vmatpush.msra.mxu0 %v2239
    %2271 = vmatpush.msra.mxu0 %v2238
    %2272 = vmatmul.f32.gmra.mxu0 %v115
    %v2273 = vpop.f32.mrf.mxu0
    %v2274 = vadd.f32 0.0, %v2273
    %2275 = vdwg.mxu0
    %v2276 = vmul.f32 %v2274, 0.0625
    %v2278 = vsel %vm157, %v2276, 0
    %2280 = vmatpush.msra.mxu0 0.0
    %2281 = vmatpush.msra.mxu0 0.0
    %2282 = vmatpush.msra.mxu0 0.0
    %2283 = vmatpush.msra.mxu0 0.0
    %2284 = vmatpush.msra.mxu0 0.0
    %2285 = vmatpush.msra.mxu0 0.0
    %2286 = vmatpush.msra.mxu0 0.0
    %2287 = vmatpush.msra.mxu0 0.0
    %2288 = vmatpush.msra.mxu0 0.0
    %2289 = vmatpush.msra.mxu0 0.0
    %2290 = vmatpush.msra.mxu0 0.0
    %2291 = vmatpush.msra.mxu0 0.0
    %2292 = vmatpush.msra.mxu0 0.0
    %2293 = vmatpush.msra.mxu0 0.0
    %2294 = vmatpush.msra.mxu0 0.0
    %2295 = vmatpush.msra.mxu0 %v2278
    %2296 = vmatmul.f32.gmra.mxu0 %v140
    %v2297 = vpop.f32.mrf.mxu0
    %v2298 = vadd.f32 0.0, %v2297
    %2299 = vmatmul.f32.gmra.mxu0 %v143
    %v2300 = vpop.f32.mrf.mxu0
    %v2301 = vadd.f32 0.0, %v2300
    %2302 = vmatmul.f32.gmra.mxu0 %v146
    %v2303 = vpop.f32.mrf.mxu0
    %v2304 = vadd.f32 0.0, %v2303
    %2305 = vmatmul.f32.gmra.mxu0 %v149
    %v2306 = vpop.f32.mrf.mxu0
    %v2307 = vadd.f32 0.0, %v2306
    %2308 = vmatmul.f32.gmra.mxu0 %v152
    %v2309 = vpop.f32.mrf.mxu0
    %v2310 = vadd.f32 0.0, %v2309
    %2311 = vmatmul.f32.gmra.mxu0 %v155
    %v2312 = vpop.f32.mrf.mxu0
    %v2313 = vadd.f32 0.0, %v2312
    %2314 = vdwg.mxu0
    %v2315 = vsub.f32 %v2238, %v2298
    %v2316 = vsub.f32 %v2239, %v2301
    %v2317 = vsub.f32 %v2240, %v2304
    %v2318 = vsub.f32 %v2241, %v2307
    %v2319 = vsub.f32 %v2242, %v2310
    %v2320 = vsub.f32 %v2243, %v2313
    %v2321 = vmul.f32 %v2315, %v2315
    %v2322 = vmul.f32 %v2316, %v2316
    %v2323 = vmul.f32 %v2317, %v2317
    %v2324 = vmul.f32 %v2318, %v2318
    %v2325 = vmul.f32 %v2319, %v2319
    %v2326 = vmul.f32 %v2320, %v2320
    %2327 = vmatpush.msra.mxu0 0.0
    %2328 = vmatpush.msra.mxu0 0.0
    %2329 = vmatpush.msra.mxu0 0.0
    %2330 = vmatpush.msra.mxu0 0.0
    %2331 = vmatpush.msra.mxu0 0.0
    %2332 = vmatpush.msra.mxu0 0.0
    %2333 = vmatpush.msra.mxu0 0.0
    %2334 = vmatpush.msra.mxu0 0.0
    %2335 = vmatpush.msra.mxu0 0.0
    %2336 = vmatpush.msra.mxu0 0.0
    %2337 = vmatpush.msra.mxu0 %v2326
    %2338 = vmatpush.msra.mxu0 %v2325
    %2339 = vmatpush.msra.mxu0 %v2324
    %2340 = vmatpush.msra.mxu0 %v2323
    %2341 = vmatpush.msra.mxu0 %v2322
    %2342 = vmatpush.msra.mxu0 %v2321
    %2343 = vmatmul.f32.gmra.mxu0 %v115
    %v2344 = vpop.f32.mrf.mxu0
    %v2345 = vadd.f32 0.0, %v2344
    %2346 = vdwg.mxu0
    %v2347 = vmul.f32 %v2345, 0.0625
    %v2348 = vadd.f32 %v2347, 1e-12
    %v2349 = vrsqrt.pop %v2348
    %v2350 = vmul.f32 %v2349, %v2348
    %v2351 = vmul.f32 %v2350, %v2349
    %v2352 = vmul.f32 0.5, %v2351
    %v2353 = vsub.f32 1.5, %v2352
    %v2354 = vmul.f32 %v2349, %v2353
    %vm2355 = vweird.f32 %v2348
    %vm2356 = vweird.f32 %v2349
    %vm2357 = vmor %vm2355, %vm2356
    %v2358 = vsel %vm2357, %v2349, %v2354
    %v2360 = vsel %vm157, %v2358, 0
    %2362 = vmatpush.msra.mxu0 0.0
    %2363 = vmatpush.msra.mxu0 0.0
    %2364 = vmatpush.msra.mxu0 0.0
    %2365 = vmatpush.msra.mxu0 0.0
    %2366 = vmatpush.msra.mxu0 0.0
    %2367 = vmatpush.msra.mxu0 0.0
    %2368 = vmatpush.msra.mxu0 0.0
    %2369 = vmatpush.msra.mxu0 0.0
    %2370 = vmatpush.msra.mxu0 0.0
    %2371 = vmatpush.msra.mxu0 0.0
    %2372 = vmatpush.msra.mxu0 0.0
    %2373 = vmatpush.msra.mxu0 0.0
    %2374 = vmatpush.msra.mxu0 0.0
    %2375 = vmatpush.msra.mxu0 0.0
    %2376 = vmatpush.msra.mxu0 0.0
    %2377 = vmatpush.msra.mxu0 %v2360
    %2378 = vmatmul.f32.gmra.mxu0 %v140
    %v2379 = vpop.f32.mrf.mxu0
    %v2380 = vadd.f32 0.0, %v2379
    %2381 = vmatmul.f32.gmra.mxu0 %v143
    %v2382 = vpop.f32.mrf.mxu0
    %v2383 = vadd.f32 0.0, %v2382
    %2384 = vmatmul.f32.gmra.mxu0 %v146
    %v2385 = vpop.f32.mrf.mxu0
    %v2386 = vadd.f32 0.0, %v2385
    %2387 = vmatmul.f32.gmra.mxu0 %v149
    %v2388 = vpop.f32.mrf.mxu0
    %v2389 = vadd.f32 0.0, %v2388
    %2390 = vmatmul.f32.gmra.mxu0 %v152
    %v2391 = vpop.f32.mrf.mxu0
    %v2392 = vadd.f32 0.0, %v2391
    %2393 = vmatmul.f32.gmra.mxu0 %v155
    %v2394 = vpop.f32.mrf.mxu0
    %v2395 = vadd.f32 0.0, %v2394
    %2396 = vdwg.mxu0
    %v2397 = vmul.f32 %v2315, %v2380
    %v2398 = vmul.f32 %v2316, %v2383
    %v2399 = vmul.f32 %v2317, %v2386
    %v2400 = vmul.f32 %v2318, %v2389
    %v2401 = vmul.f32 %v2319, %v2392
    %v2402 = vmul.f32 %v2320, %v2395
    %2404 = vset.pattern.permute.xlu0 0
    %2405 = vperm.xlu0 %2404, %v2244
    %v2406 = vpop.permute.xlu0 %2405
    %2409 = vset.pattern.permute.xlu0 0
    %2410 = vperm.xlu0 %2409, %v2245
    %v2411 = vpop.permute.xlu0 %2410
    %2414 = vset.pattern.permute.xlu0 0
    %2415 = vperm.xlu0 %2414, %v2246
    %v2416 = vpop.permute.xlu0 %2415
    %2419 = vset.pattern.permute.xlu0 0
    %2420 = vperm.xlu0 %2419, %v2247
    %v2421 = vpop.permute.xlu0 %2420
    %2424 = vset.pattern.permute.xlu0 0
    %2425 = vperm.xlu0 %2424, %v2248
    %v2426 = vpop.permute.xlu0 %2425
    %2429 = vset.pattern.permute.xlu0 0
    %2430 = vperm.xlu0 %2429, %v2249
    %v2431 = vpop.permute.xlu0 %2430
    %v2433 = vmul.f32 %v2397, %v2406
    %v2434 = vmul.f32 %v2398, %v2411
    %v2435 = vmul.f32 %v2399, %v2416
    %v2436 = vmul.f32 %v2400, %v2421
    %v2437 = vmul.f32 %v2401, %v2426
    %v2438 = vmul.f32 %v2402, %v2431
    %2440 = vset.pattern.permute.xlu0 0
    %2441 = vperm.xlu0 %2440, %v2250
    %v2442 = vpop.permute.xlu0 %2441
    %2445 = vset.pattern.permute.xlu0 0
    %2446 = vperm.xlu0 %2445, %v2251
    %v2447 = vpop.permute.xlu0 %2446
    %2450 = vset.pattern.permute.xlu0 0
    %2451 = vperm.xlu0 %2450, %v2252
    %v2452 = vpop.permute.xlu0 %2451
    %2455 = vset.pattern.permute.xlu0 0
    %2456 = vperm.xlu0 %2455, %v2253
    %v2457 = vpop.permute.xlu0 %2456
    %2460 = vset.pattern.permute.xlu0 0
    %2461 = vperm.xlu0 %2460, %v2254
    %v2462 = vpop.permute.xlu0 %2461
    %2465 = vset.pattern.permute.xlu0 0
    %2466 = vperm.xlu0 %2465, %v2255
    %v2467 = vpop.permute.xlu0 %2466
    %v2469 = vadd.f32 %v2433, %v2442
    %v2470 = vadd.f32 %v2434, %v2447
    %v2471 = vadd.f32 %v2435, %v2452
    %v2472 = vadd.f32 %v2436, %v2457
    %v2473 = vadd.f32 %v2437, %v2462
    %v2474 = vadd.f32 %v2438, %v2467
    %s2475 = scalar_lea.vmem %s3, 48
    %v2476 = vld [vmem:[%s2475] sm:$0xff]
    %v2477 = vld [vmem:[%s2475 + $0x8] sm:$0xff]
    %v2478 = vld [vmem:[%s2475 + $0x10] sm:$0xff]
    %v2479 = vld [vmem:[%s2475 + $0x18] sm:$0xff]
    %v2480 = vld [vmem:[%s2475 + $0x20] sm:$0xff]
    %v2481 = vld [vmem:[%s2475 + $0x28] sm:$0xff]
    %s2482 = scalar_lea.vmem %s4, 48
    %v2483 = vld [vmem:[%s2482] sm:$0xff]
    %v2484 = vld [vmem:[%s2482 + $0x8] sm:$0xff]
    %v2485 = vld [vmem:[%s2482 + $0x10] sm:$0xff]
    %v2486 = vld [vmem:[%s2482 + $0x18] sm:$0xff]
    %v2487 = vld [vmem:[%s2482 + $0x20] sm:$0xff]
    %v2488 = vld [vmem:[%s2482 + $0x28] sm:$0xff]
    %2490 = vset.pattern.permute.xlu0 0
    %2491 = vperm.xlu0 %2490, %v2483
    %v2492 = vpop.permute.xlu0 %2491
    %2495 = vset.pattern.permute.xlu0 0
    %2496 = vperm.xlu0 %2495, %v2484
    %v2497 = vpop.permute.xlu0 %2496
    %2500 = vset.pattern.permute.xlu0 0
    %2501 = vperm.xlu0 %2500, %v2485
    %v2502 = vpop.permute.xlu0 %2501
    %2505 = vset.pattern.permute.xlu0 0
    %2506 = vperm.xlu0 %2505, %v2486
    %v2507 = vpop.permute.xlu0 %2506
    %2510 = vset.pattern.permute.xlu0 0
    %2511 = vperm.xlu0 %2510, %v2487
    %v2512 = vpop.permute.xlu0 %2511
    %2515 = vset.pattern.permute.xlu0 0
    %2516 = vperm.xlu0 %2515, %v2488
    %v2517 = vpop.permute.xlu0 %2516
    %v2520 = vsel %vm113, %v2476, 0
    %v2523 = vsel %vm113, %v2477, 0
    %v2526 = vsel %vm113, %v2478, 0
    %v2529 = vsel %vm113, %v2479, 0
    %v2532 = vsel %vm113, %v2480, 0
    %v2535 = vsel %vm113, %v2481, 0
    %2537 = vmatpush.msra.mxu0 0.0
    %2538 = vmatpush.msra.mxu0 0.0
    %2539 = vmatpush.msra.mxu0 0.0
    %2540 = vmatpush.msra.mxu0 0.0
    %2541 = vmatpush.msra.mxu0 0.0
    %2542 = vmatpush.msra.mxu0 0.0
    %2543 = vmatpush.msra.mxu0 0.0
    %2544 = vmatpush.msra.mxu0 0.0
    %2545 = vmatpush.msra.mxu0 0.0
    %2546 = vmatpush.msra.mxu0 0.0
    %2547 = vmatpush.msra.mxu0 %v2474
    %2548 = vmatpush.msra.mxu0 %v2473
    %2549 = vmatpush.msra.mxu0 %v2472
    %2550 = vmatpush.msra.mxu0 %v2471
    %2551 = vmatpush.msra.mxu0 %v2470
    %2552 = vmatpush.msra.mxu0 %v2469
    %2553 = vmatmul.f32.gmra.mxu0 %v2520
    %v2554 = vpop.f32.mrf.mxu0
    %v2555 = vadd.f32 %v2492, %v2554
    %2556 = vmatmul.f32.gmra.mxu0 %v2523
    %v2557 = vpop.f32.mrf.mxu0
    %v2558 = vadd.f32 %v2497, %v2557
    %2559 = vmatmul.f32.gmra.mxu0 %v2526
    %v2560 = vpop.f32.mrf.mxu0
    %v2561 = vadd.f32 %v2502, %v2560
    %2562 = vmatmul.f32.gmra.mxu0 %v2529
    %v2563 = vpop.f32.mrf.mxu0
    %v2564 = vadd.f32 %v2507, %v2563
    %2565 = vmatmul.f32.gmra.mxu0 %v2532
    %v2566 = vpop.f32.mrf.mxu0
    %v2567 = vadd.f32 %v2512, %v2566
    %2568 = vmatmul.f32.gmra.mxu0 %v2535
    %v2569 = vpop.f32.mrf.mxu0
    %v2570 = vadd.f32 %v2517, %v2569
    %2571 = vdwg.mxu0
    %s2572 = scalar_lea.vmem %s5, 144
    %v2573 = vld [vmem:[%s2572] sm:$0xff]
    %v2574 = vld [vmem:[%s2572 + $0x8] sm:$0xff]
    %v2575 = vld [vmem:[%s2572 + $0x10] sm:$0xff]
    %v2576 = vld [vmem:[%s2572 + $0x18] sm:$0xff]
    %v2577 = vld [vmem:[%s2572 + $0x20] sm:$0xff]
    %v2578 = vld [vmem:[%s2572 + $0x28] sm:$0xff]
    %s2579 = scalar_lea.vmem %s6, 48
    %v2580 = vld [vmem:[%s2579] sm:$0xff]
    %v2581 = vld [vmem:[%s2579 + $0x8] sm:$0xff]
    %v2582 = vld [vmem:[%s2579 + $0x10] sm:$0xff]
    %v2583 = vld [vmem:[%s2579 + $0x18] sm:$0xff]
    %v2584 = vld [vmem:[%s2579 + $0x20] sm:$0xff]
    %v2585 = vld [vmem:[%s2579 + $0x28] sm:$0xff]
    %2587 = vset.pattern.permute.xlu0 0
    %2588 = vperm.xlu0 %2587, %v2580
    %v2589 = vpop.permute.xlu0 %2588
    %2592 = vset.pattern.permute.xlu0 0
    %2593 = vperm.xlu0 %2592, %v2581
    %v2594 = vpop.permute.xlu0 %2593
    %2597 = vset.pattern.permute.xlu0 0
    %2598 = vperm.xlu0 %2597, %v2582
    %v2599 = vpop.permute.xlu0 %2598
    %2602 = vset.pattern.permute.xlu0 0
    %2603 = vperm.xlu0 %2602, %v2583
    %v2604 = vpop.permute.xlu0 %2603
    %2607 = vset.pattern.permute.xlu0 0
    %2608 = vperm.xlu0 %2607, %v2584
    %v2609 = vpop.permute.xlu0 %2608
    %2612 = vset.pattern.permute.xlu0 0
    %2613 = vperm.xlu0 %2612, %v2585
    %v2614 = vpop.permute.xlu0 %2613
    %v2617 = vsel %vm113, %v2573, 0
    %v2620 = vsel %vm113, %v2574, 0
    %v2623 = vsel %vm113, %v2575, 0
    %v2626 = vsel %vm113, %v2576, 0
    %v2629 = vsel %vm113, %v2577, 0
    %v2632 = vsel %vm113, %v2578, 0
    %2634 = vmatpush.msra.mxu0 0.0
    %2635 = vmatpush.msra.mxu0 0.0
    %2636 = vmatpush.msra.mxu0 0.0
    %2637 = vmatpush.msra.mxu0 0.0
    %2638 = vmatpush.msra.mxu0 0.0
    %2639 = vmatpush.msra.mxu0 0.0
    %2640 = vmatpush.msra.mxu0 0.0
    %2641 = vmatpush.msra.mxu0 0.0
    %2642 = vmatpush.msra.mxu0 0.0
    %2643 = vmatpush.msra.mxu0 0.0
    %2644 = vmatpush.msra.mxu0 %v2474
    %2645 = vmatpush.msra.mxu0 %v2473
    %2646 = vmatpush.msra.mxu0 %v2472
    %2647 = vmatpush.msra.mxu0 %v2471
    %2648 = vmatpush.msra.mxu0 %v2470
    %2649 = vmatpush.msra.mxu0 %v2469
    %2650 = vmatmul.f32.gmra.mxu0 %v2617
    %v2651 = vpop.f32.mrf.mxu0
    %v2652 = vadd.f32 %v2589, %v2651
    %2653 = vmatmul.f32.gmra.mxu0 %v2620
    %v2654 = vpop.f32.mrf.mxu0
    %v2655 = vadd.f32 %v2594, %v2654
    %2656 = vmatmul.f32.gmra.mxu0 %v2623
    %v2657 = vpop.f32.mrf.mxu0
    %v2658 = vadd.f32 %v2599, %v2657
    %2659 = vmatmul.f32.gmra.mxu0 %v2626
    %v2660 = vpop.f32.mrf.mxu0
    %v2661 = vadd.f32 %v2604, %v2660
    %2662 = vmatmul.f32.gmra.mxu0 %v2629
    %v2663 = vpop.f32.mrf.mxu0
    %v2664 = vadd.f32 %v2609, %v2663
    %2665 = vmatmul.f32.gmra.mxu0 %v2632
    %v2666 = vpop.f32.mrf.mxu0
    %v2667 = vadd.f32 %v2614, %v2666
    %2668 = vdwg.mxu0
    %v2669 = vmul.f32 %v2555, %v2652
    %v2670 = vmul.f32 %v2558, %v2655
    %v2671 = vmul.f32 %v2561, %v2658
    %v2672 = vmul.f32 %v2564, %v2661
    %v2673 = vmul.f32 %v2567, %v2664
    %v2674 = vmul.f32 %v2570, %v2667
    %2675 = vmatpush.msra.mxu0 0.0
    %2676 = vmatpush.msra.mxu0 0.0
    %2677 = vmatpush.msra.mxu0 0.0
    %2678 = vmatpush.msra.mxu0 0.0
    %2679 = vmatpush.msra.mxu0 0.0
    %2680 = vmatpush.msra.mxu0 0.0
    %2681 = vmatpush.msra.mxu0 0.0
    %2682 = vmatpush.msra.mxu0 0.0
    %2683 = vmatpush.msra.mxu0 0.0
    %2684 = vmatpush.msra.mxu0 0.0
    %2685 = vmatpush.msra.mxu0 %v2674
    %2686 = vmatpush.msra.mxu0 %v2673
    %2687 = vmatpush.msra.mxu0 %v2672
    %2688 = vmatpush.msra.mxu0 %v2671
    %2689 = vmatpush.msra.mxu0 %v2670
    %2690 = vmatpush.msra.mxu0 %v2669
    %2691 = vmatmul.f32.gmra.mxu0 %v553
    %v2692 = vpop.f32.mrf.mxu0
    %v2693 = vadd.f32 0.0, %v2692
    %2694 = vdwg.mxu0
    %s2695 = scalar_lea.vmem %s5, 192
    %v2696 = vld [vmem:[%s2695] sm:$0xff]
    %v2697 = vld [vmem:[%s2695 + $0x8] sm:$0xff]
    %v2698 = vld [vmem:[%s2695 + $0x10] sm:$0xff]
    %v2699 = vld [vmem:[%s2695 + $0x18] sm:$0xff]
    %v2700 = vld [vmem:[%s2695 + $0x20] sm:$0xff]
    %v2701 = vld [vmem:[%s2695 + $0x28] sm:$0xff]
    %v2703 = vsel %vm113, %v2696, 0
    %v2706 = vsel %vm113, %v2697, 0
    %v2709 = vsel %vm113, %v2698, 0
    %v2712 = vsel %vm113, %v2699, 0
    %v2715 = vsel %vm113, %v2700, 0
    %v2718 = vsel %vm113, %v2701, 0
    %2720 = vmatpush.msra.mxu0 0.0
    %2721 = vmatpush.msra.mxu0 0.0
    %2722 = vmatpush.msra.mxu0 0.0
    %2723 = vmatpush.msra.mxu0 0.0
    %2724 = vmatpush.msra.mxu0 0.0
    %2725 = vmatpush.msra.mxu0 0.0
    %2726 = vmatpush.msra.mxu0 0.0
    %2727 = vmatpush.msra.mxu0 0.0
    %2728 = vmatpush.msra.mxu0 0.0
    %2729 = vmatpush.msra.mxu0 0.0
    %2730 = vmatpush.msra.mxu0 %v2474
    %2731 = vmatpush.msra.mxu0 %v2473
    %2732 = vmatpush.msra.mxu0 %v2472
    %2733 = vmatpush.msra.mxu0 %v2471
    %2734 = vmatpush.msra.mxu0 %v2470
    %2735 = vmatpush.msra.mxu0 %v2469
    %2736 = vmatmul.f32.gmra.mxu0 %v2703
    %v2737 = vpop.f32.mrf.mxu0
    %v2738 = vadd.f32 %v2589, %v2737
    %2739 = vmatmul.f32.gmra.mxu0 %v2706
    %v2740 = vpop.f32.mrf.mxu0
    %v2741 = vadd.f32 %v2594, %v2740
    %2742 = vmatmul.f32.gmra.mxu0 %v2709
    %v2743 = vpop.f32.mrf.mxu0
    %v2744 = vadd.f32 %v2599, %v2743
    %2745 = vmatmul.f32.gmra.mxu0 %v2712
    %v2746 = vpop.f32.mrf.mxu0
    %v2747 = vadd.f32 %v2604, %v2746
    %2748 = vmatmul.f32.gmra.mxu0 %v2715
    %v2749 = vpop.f32.mrf.mxu0
    %v2750 = vadd.f32 %v2609, %v2749
    %2751 = vmatmul.f32.gmra.mxu0 %v2718
    %v2752 = vpop.f32.mrf.mxu0
    %v2753 = vadd.f32 %v2614, %v2752
    %2754 = vdwg.mxu0
    %v2755 = vmul.f32 %v2555, %v2738
    %v2756 = vmul.f32 %v2558, %v2741
    %v2757 = vmul.f32 %v2561, %v2744
    %v2758 = vmul.f32 %v2564, %v2747
    %v2759 = vmul.f32 %v2567, %v2750
    %v2760 = vmul.f32 %v2570, %v2753
    %2761 = vmatpush.msra.mxu0 0.0
    %2762 = vmatpush.msra.mxu0 0.0
    %2763 = vmatpush.msra.mxu0 0.0
    %2764 = vmatpush.msra.mxu0 0.0
    %2765 = vmatpush.msra.mxu0 0.0
    %2766 = vmatpush.msra.mxu0 0.0
    %2767 = vmatpush.msra.mxu0 0.0
    %2768 = vmatpush.msra.mxu0 0.0
    %2769 = vmatpush.msra.mxu0 0.0
    %2770 = vmatpush.msra.mxu0 0.0
    %2771 = vmatpush.msra.mxu0 %v2760
    %2772 = vmatpush.msra.mxu0 %v2759
    %2773 = vmatpush.msra.mxu0 %v2758
    %2774 = vmatpush.msra.mxu0 %v2757
    %2775 = vmatpush.msra.mxu0 %v2756
    %2776 = vmatpush.msra.mxu0 %v2755
    %2777 = vmatmul.f32.gmra.mxu0 %v553
    %v2778 = vpop.f32.mrf.mxu0
    %v2779 = vadd.f32 0.0, %v2778
    %2780 = vdwg.mxu0
    %s2781 = scalar_lea.vmem %s5, 240
    %v2782 = vld [vmem:[%s2781] sm:$0xff]
    %v2783 = vld [vmem:[%s2781 + $0x8] sm:$0xff]
    %v2784 = vld [vmem:[%s2781 + $0x10] sm:$0xff]
    %v2785 = vld [vmem:[%s2781 + $0x18] sm:$0xff]
    %v2786 = vld [vmem:[%s2781 + $0x20] sm:$0xff]
    %v2787 = vld [vmem:[%s2781 + $0x28] sm:$0xff]
    %v2789 = vsel %vm113, %v2782, 0
    %v2792 = vsel %vm113, %v2783, 0
    %v2795 = vsel %vm113, %v2784, 0
    %v2798 = vsel %vm113, %v2785, 0
    %v2801 = vsel %vm113, %v2786, 0
    %v2804 = vsel %vm113, %v2787, 0
    %2806 = vmatpush.msra.mxu0 0.0
    %2807 = vmatpush.msra.mxu0 0.0
    %2808 = vmatpush.msra.mxu0 0.0
    %2809 = vmatpush.msra.mxu0 0.0
    %2810 = vmatpush.msra.mxu0 0.0
    %2811 = vmatpush.msra.mxu0 0.0
    %2812 = vmatpush.msra.mxu0 0.0
    %2813 = vmatpush.msra.mxu0 0.0
    %2814 = vmatpush.msra.mxu0 0.0
    %2815 = vmatpush.msra.mxu0 0.0
    %2816 = vmatpush.msra.mxu0 %v2474
    %2817 = vmatpush.msra.mxu0 %v2473
    %2818 = vmatpush.msra.mxu0 %v2472
    %2819 = vmatpush.msra.mxu0 %v2471
    %2820 = vmatpush.msra.mxu0 %v2470
    %2821 = vmatpush.msra.mxu0 %v2469
    %2822 = vmatmul.f32.gmra.mxu0 %v2789
    %v2823 = vpop.f32.mrf.mxu0
    %v2824 = vadd.f32 %v2589, %v2823
    %2825 = vmatmul.f32.gmra.mxu0 %v2792
    %v2826 = vpop.f32.mrf.mxu0
    %v2827 = vadd.f32 %v2594, %v2826
    %2828 = vmatmul.f32.gmra.mxu0 %v2795
    %v2829 = vpop.f32.mrf.mxu0
    %v2830 = vadd.f32 %v2599, %v2829
    %2831 = vmatmul.f32.gmra.mxu0 %v2798
    %v2832 = vpop.f32.mrf.mxu0
    %v2833 = vadd.f32 %v2604, %v2832
    %2834 = vmatmul.f32.gmra.mxu0 %v2801
    %v2835 = vpop.f32.mrf.mxu0
    %v2836 = vadd.f32 %v2609, %v2835
    %2837 = vmatmul.f32.gmra.mxu0 %v2804
    %v2838 = vpop.f32.mrf.mxu0
    %v2839 = vadd.f32 %v2614, %v2838
    %2840 = vdwg.mxu0
    %v2841 = vmul.f32 %v2555, %v2824
    %v2842 = vmul.f32 %v2558, %v2827
    %v2843 = vmul.f32 %v2561, %v2830
    %v2844 = vmul.f32 %v2564, %v2833
    %v2845 = vmul.f32 %v2567, %v2836
    %v2846 = vmul.f32 %v2570, %v2839
    %2847 = vmatpush.msra.mxu0 0.0
    %2848 = vmatpush.msra.mxu0 0.0
    %2849 = vmatpush.msra.mxu0 0.0
    %2850 = vmatpush.msra.mxu0 0.0
    %2851 = vmatpush.msra.mxu0 0.0
    %2852 = vmatpush.msra.mxu0 0.0
    %2853 = vmatpush.msra.mxu0 0.0
    %2854 = vmatpush.msra.mxu0 0.0
    %2855 = vmatpush.msra.mxu0 0.0
    %2856 = vmatpush.msra.mxu0 0.0
    %2857 = vmatpush.msra.mxu0 %v2846
    %2858 = vmatpush.msra.mxu0 %v2845
    %2859 = vmatpush.msra.mxu0 %v2844
    %2860 = vmatpush.msra.mxu0 %v2843
    %2861 = vmatpush.msra.mxu0 %v2842
    %2862 = vmatpush.msra.mxu0 %v2841
    %2863 = vmatmul.f32.gmra.mxu0 %v553
    %v2864 = vpop.f32.mrf.mxu0
    %v2865 = vadd.f32 0.0, %v2864
    %2866 = vdwg.mxu0
    %v2867 = vmax.f32 %v2693, %v2779
    %v2868 = vmax.f32 %v2867, %v2865
    %v2869 = vsub.f32 %v2693, %v2868
    %v2870 = vmul.f32 %v2869, 1.442695
    %v2871 = vpow.pop %v2870
    %v2872 = vsub.f32 %v2779, %v2868
    %v2873 = vmul.f32 %v2872, 1.442695
    %v2874 = vpow.pop %v2873
    %v2875 = vsub.f32 %v2865, %v2868
    %v2876 = vmul.f32 %v2875, 1.442695
    %v2877 = vpow.pop %v2876
    %v2878 = vadd.f32 %v2871, %v2874
    %v2879 = vadd.f32 %v2878, %v2877
    %v2880 = vrcp.pop %v2879
    %v2881 = vmul.f32 %v2879, %v2880
    %v2882 = vsub.f32 1.0, %v2881
    %v2883 = vmul.f32 %v2880, %v2882
    %v2884 = vadd.f32 %v2880, %v2883
    %vm2885 = vweird.f32 %v2879
    %vm2886 = vweird.f32 %v2880
    %vm2887 = vmor %vm2885, %vm2886
    %v2888 = vsel %vm2887, %v2880, %v2884
    %v2889 = vand.u32 2147483647, %v2879
    %vm2890 = vcmp.eq.f32.partialorder %v2889, 8.507059e+37
    %v2891 = vand.u32 %v2879, 2147483648
    %v2892 = vor.u32 1.1754944e-38, %v2891
    %v2893 = vsel %vm2890, %v2892, %v2888
    %v2894 = vmul.f32 1.0, %v2893
    %s2895 = scalar_lea.vmem %s7, 144
    %v2896 = vld [vmem:[%s2895] sm:$0xff]
    %v2897 = vld [vmem:[%s2895 + $0x8] sm:$0xff]
    %v2898 = vld [vmem:[%s2895 + $0x10] sm:$0xff]
    %v2899 = vld [vmem:[%s2895 + $0x18] sm:$0xff]
    %v2900 = vld [vmem:[%s2895 + $0x20] sm:$0xff]
    %v2901 = vld [vmem:[%s2895 + $0x28] sm:$0xff]
    %s2902 = scalar_lea.vmem %s8, 48
    %v2903 = vld [vmem:[%s2902] sm:$0xff]
    %v2904 = vld [vmem:[%s2902 + $0x8] sm:$0xff]
    %v2905 = vld [vmem:[%s2902 + $0x10] sm:$0xff]
    %v2906 = vld [vmem:[%s2902 + $0x18] sm:$0xff]
    %v2907 = vld [vmem:[%s2902 + $0x20] sm:$0xff]
    %v2908 = vld [vmem:[%s2902 + $0x28] sm:$0xff]
    %2910 = vset.pattern.permute.xlu0 0
    %2911 = vperm.xlu0 %2910, %v2903
    %v2912 = vpop.permute.xlu0 %2911
    %2915 = vset.pattern.permute.xlu0 0
    %2916 = vperm.xlu0 %2915, %v2904
    %v2917 = vpop.permute.xlu0 %2916
    %2920 = vset.pattern.permute.xlu0 0
    %2921 = vperm.xlu0 %2920, %v2905
    %v2922 = vpop.permute.xlu0 %2921
    %2925 = vset.pattern.permute.xlu0 0
    %2926 = vperm.xlu0 %2925, %v2906
    %v2927 = vpop.permute.xlu0 %2926
    %2930 = vset.pattern.permute.xlu0 0
    %2931 = vperm.xlu0 %2930, %v2907
    %v2932 = vpop.permute.xlu0 %2931
    %2935 = vset.pattern.permute.xlu0 0
    %2936 = vperm.xlu0 %2935, %v2908
    %v2937 = vpop.permute.xlu0 %2936
    %v2940 = vsel %vm113, %v2896, 0
    %v2943 = vsel %vm113, %v2897, 0
    %v2946 = vsel %vm113, %v2898, 0
    %v2949 = vsel %vm113, %v2899, 0
    %v2952 = vsel %vm113, %v2900, 0
    %v2955 = vsel %vm113, %v2901, 0
    %2957 = vmatpush.msra.mxu0 0.0
    %2958 = vmatpush.msra.mxu0 0.0
    %2959 = vmatpush.msra.mxu0 0.0
    %2960 = vmatpush.msra.mxu0 0.0
    %2961 = vmatpush.msra.mxu0 0.0
    %2962 = vmatpush.msra.mxu0 0.0
    %2963 = vmatpush.msra.mxu0 0.0
    %2964 = vmatpush.msra.mxu0 0.0
    %2965 = vmatpush.msra.mxu0 0.0
    %2966 = vmatpush.msra.mxu0 0.0
    %2967 = vmatpush.msra.mxu0 %v2474
    %2968 = vmatpush.msra.mxu0 %v2473
    %2969 = vmatpush.msra.mxu0 %v2472
    %2970 = vmatpush.msra.mxu0 %v2471
    %2971 = vmatpush.msra.mxu0 %v2470
    %2972 = vmatpush.msra.mxu0 %v2469
    %2973 = vmatmul.f32.gmra.mxu0 %v2940
    %v2974 = vpop.f32.mrf.mxu0
    %v2975 = vadd.f32 %v2912, %v2974
    %2976 = vmatmul.f32.gmra.mxu0 %v2943
    %v2977 = vpop.f32.mrf.mxu0
    %v2978 = vadd.f32 %v2917, %v2977
    %2979 = vmatmul.f32.gmra.mxu0 %v2946
    %v2980 = vpop.f32.mrf.mxu0
    %v2981 = vadd.f32 %v2922, %v2980
    %2982 = vmatmul.f32.gmra.mxu0 %v2949
    %v2983 = vpop.f32.mrf.mxu0
    %v2984 = vadd.f32 %v2927, %v2983
    %2985 = vmatmul.f32.gmra.mxu0 %v2952
    %v2986 = vpop.f32.mrf.mxu0
    %v2987 = vadd.f32 %v2932, %v2986
    %2988 = vmatmul.f32.gmra.mxu0 %v2955
    %v2989 = vpop.f32.mrf.mxu0
    %v2990 = vadd.f32 %v2937, %v2989
    %2991 = vdwg.mxu0
    %v2992 = vmul.f32 %v2871, %v2894
    %v2994 = vsel %vm890, %v2992, 0
    %2996 = vmatpush.msra.mxu0 0.0
    %2997 = vmatpush.msra.mxu0 0.0
    %2998 = vmatpush.msra.mxu0 0.0
    %2999 = vmatpush.msra.mxu0 0.0
    %3000 = vmatpush.msra.mxu0 0.0
    %3001 = vmatpush.msra.mxu0 0.0
    %3002 = vmatpush.msra.mxu0 0.0
    %3003 = vmatpush.msra.mxu0 0.0
    %3004 = vmatpush.msra.mxu0 0.0
    %3005 = vmatpush.msra.mxu0 0.0
    %3006 = vmatpush.msra.mxu0 0.0
    %3007 = vmatpush.msra.mxu0 0.0
    %3008 = vmatpush.msra.mxu0 0.0
    %3009 = vmatpush.msra.mxu0 0.0
    %3010 = vmatpush.msra.mxu0 0.0
    %3011 = vmatpush.msra.mxu0 %v2994
    %3012 = vmatmul.f32.gmra.mxu0 %v873
    %v3013 = vpop.f32.mrf.mxu0
    %v3014 = vadd.f32 0.0, %v3013
    %3015 = vmatmul.f32.gmra.mxu0 %v876
    %v3016 = vpop.f32.mrf.mxu0
    %v3017 = vadd.f32 0.0, %v3016
    %3018 = vmatmul.f32.gmra.mxu0 %v879
    %v3019 = vpop.f32.mrf.mxu0
    %v3020 = vadd.f32 0.0, %v3019
    %3021 = vmatmul.f32.gmra.mxu0 %v882
    %v3022 = vpop.f32.mrf.mxu0
    %v3023 = vadd.f32 0.0, %v3022
    %3024 = vmatmul.f32.gmra.mxu0 %v885
    %v3025 = vpop.f32.mrf.mxu0
    %v3026 = vadd.f32 0.0, %v3025
    %3027 = vmatmul.f32.gmra.mxu0 %v888
    %v3028 = vpop.f32.mrf.mxu0
    %v3029 = vadd.f32 0.0, %v3028
    %3030 = vdwg.mxu0
    %v3031 = vmul.f32 %v3014, %v2975
    %v3032 = vmul.f32 %v3017, %v2978
    %v3033 = vmul.f32 %v3020, %v2981
    %v3034 = vmul.f32 %v3023, %v2984
    %v3035 = vmul.f32 %v3026, %v2987
    %v3036 = vmul.f32 %v3029, %v2990
    %s3037 = scalar_lea.vmem %s7, 192
    %v3038 = vld [vmem:[%s3037] sm:$0xff]
    %v3039 = vld [vmem:[%s3037 + $0x8] sm:$0xff]
    %v3040 = vld [vmem:[%s3037 + $0x10] sm:$0xff]
    %v3041 = vld [vmem:[%s3037 + $0x18] sm:$0xff]
    %v3042 = vld [vmem:[%s3037 + $0x20] sm:$0xff]
    %v3043 = vld [vmem:[%s3037 + $0x28] sm:$0xff]
    %v3045 = vsel %vm113, %v3038, 0
    %v3048 = vsel %vm113, %v3039, 0
    %v3051 = vsel %vm113, %v3040, 0
    %v3054 = vsel %vm113, %v3041, 0
    %v3057 = vsel %vm113, %v3042, 0
    %v3060 = vsel %vm113, %v3043, 0
    %3062 = vmatpush.msra.mxu0 0.0
    %3063 = vmatpush.msra.mxu0 0.0
    %3064 = vmatpush.msra.mxu0 0.0
    %3065 = vmatpush.msra.mxu0 0.0
    %3066 = vmatpush.msra.mxu0 0.0
    %3067 = vmatpush.msra.mxu0 0.0
    %3068 = vmatpush.msra.mxu0 0.0
    %3069 = vmatpush.msra.mxu0 0.0
    %3070 = vmatpush.msra.mxu0 0.0
    %3071 = vmatpush.msra.mxu0 0.0
    %3072 = vmatpush.msra.mxu0 %v2474
    %3073 = vmatpush.msra.mxu0 %v2473
    %3074 = vmatpush.msra.mxu0 %v2472
    %3075 = vmatpush.msra.mxu0 %v2471
    %3076 = vmatpush.msra.mxu0 %v2470
    %3077 = vmatpush.msra.mxu0 %v2469
    %3078 = vmatmul.f32.gmra.mxu0 %v3045
    %v3079 = vpop.f32.mrf.mxu0
    %v3080 = vadd.f32 %v2912, %v3079
    %3081 = vmatmul.f32.gmra.mxu0 %v3048
    %v3082 = vpop.f32.mrf.mxu0
    %v3083 = vadd.f32 %v2917, %v3082
    %3084 = vmatmul.f32.gmra.mxu0 %v3051
    %v3085 = vpop.f32.mrf.mxu0
    %v3086 = vadd.f32 %v2922, %v3085
    %3087 = vmatmul.f32.gmra.mxu0 %v3054
    %v3088 = vpop.f32.mrf.mxu0
    %v3089 = vadd.f32 %v2927, %v3088
    %3090 = vmatmul.f32.gmra.mxu0 %v3057
    %v3091 = vpop.f32.mrf.mxu0
    %v3092 = vadd.f32 %v2932, %v3091
    %3093 = vmatmul.f32.gmra.mxu0 %v3060
    %v3094 = vpop.f32.mrf.mxu0
    %v3095 = vadd.f32 %v2937, %v3094
    %3096 = vdwg.mxu0
    %v3097 = vmul.f32 %v2874, %v2894
    %v3099 = vsel %vm890, %v3097, 0
    %3101 = vmatpush.msra.mxu0 0.0
    %3102 = vmatpush.msra.mxu0 0.0
    %3103 = vmatpush.msra.mxu0 0.0
    %3104 = vmatpush.msra.mxu0 0.0
    %3105 = vmatpush.msra.mxu0 0.0
    %3106 = vmatpush.msra.mxu0 0.0
    %3107 = vmatpush.msra.mxu0 0.0
    %3108 = vmatpush.msra.mxu0 0.0
    %3109 = vmatpush.msra.mxu0 0.0
    %3110 = vmatpush.msra.mxu0 0.0
    %3111 = vmatpush.msra.mxu0 0.0
    %3112 = vmatpush.msra.mxu0 0.0
    %3113 = vmatpush.msra.mxu0 0.0
    %3114 = vmatpush.msra.mxu0 0.0
    %3115 = vmatpush.msra.mxu0 0.0
    %3116 = vmatpush.msra.mxu0 %v3099
    %3117 = vmatmul.f32.gmra.mxu0 %v873
    %v3118 = vpop.f32.mrf.mxu0
    %v3119 = vadd.f32 0.0, %v3118
    %3120 = vmatmul.f32.gmra.mxu0 %v876
    %v3121 = vpop.f32.mrf.mxu0
    %v3122 = vadd.f32 0.0, %v3121
    %3123 = vmatmul.f32.gmra.mxu0 %v879
    %v3124 = vpop.f32.mrf.mxu0
    %v3125 = vadd.f32 0.0, %v3124
    %3126 = vmatmul.f32.gmra.mxu0 %v882
    %v3127 = vpop.f32.mrf.mxu0
    %v3128 = vadd.f32 0.0, %v3127
    %3129 = vmatmul.f32.gmra.mxu0 %v885
    %v3130 = vpop.f32.mrf.mxu0
    %v3131 = vadd.f32 0.0, %v3130
    %3132 = vmatmul.f32.gmra.mxu0 %v888
    %v3133 = vpop.f32.mrf.mxu0
    %v3134 = vadd.f32 0.0, %v3133
    %3135 = vdwg.mxu0
    %v3136 = vmul.f32 %v3119, %v3080
    %v3137 = vmul.f32 %v3122, %v3083
    %v3138 = vmul.f32 %v3125, %v3086
    %v3139 = vmul.f32 %v3128, %v3089
    %v3140 = vmul.f32 %v3131, %v3092
    %v3141 = vmul.f32 %v3134, %v3095
    %v3142 = vadd.f32 %v3031, %v3136
    %v3143 = vadd.f32 %v3032, %v3137
    %v3144 = vadd.f32 %v3033, %v3138
    %v3145 = vadd.f32 %v3034, %v3139
    %v3146 = vadd.f32 %v3035, %v3140
    %v3147 = vadd.f32 %v3036, %v3141
    %s3148 = scalar_lea.vmem %s7, 240
    %v3149 = vld [vmem:[%s3148] sm:$0xff]
    %v3150 = vld [vmem:[%s3148 + $0x8] sm:$0xff]
    %v3151 = vld [vmem:[%s3148 + $0x10] sm:$0xff]
    %v3152 = vld [vmem:[%s3148 + $0x18] sm:$0xff]
    %v3153 = vld [vmem:[%s3148 + $0x20] sm:$0xff]
    %v3154 = vld [vmem:[%s3148 + $0x28] sm:$0xff]
    %v3156 = vsel %vm113, %v3149, 0
    %v3159 = vsel %vm113, %v3150, 0
    %v3162 = vsel %vm113, %v3151, 0
    %v3165 = vsel %vm113, %v3152, 0
    %v3168 = vsel %vm113, %v3153, 0
    %v3171 = vsel %vm113, %v3154, 0
    %3173 = vmatpush.msra.mxu0 0.0
    %3174 = vmatpush.msra.mxu0 0.0
    %3175 = vmatpush.msra.mxu0 0.0
    %3176 = vmatpush.msra.mxu0 0.0
    %3177 = vmatpush.msra.mxu0 0.0
    %3178 = vmatpush.msra.mxu0 0.0
    %3179 = vmatpush.msra.mxu0 0.0
    %3180 = vmatpush.msra.mxu0 0.0
    %3181 = vmatpush.msra.mxu0 0.0
    %3182 = vmatpush.msra.mxu0 0.0
    %3183 = vmatpush.msra.mxu0 %v2474
    %3184 = vmatpush.msra.mxu0 %v2473
    %3185 = vmatpush.msra.mxu0 %v2472
    %3186 = vmatpush.msra.mxu0 %v2471
    %3187 = vmatpush.msra.mxu0 %v2470
    %3188 = vmatpush.msra.mxu0 %v2469
    %3189 = vmatmul.f32.gmra.mxu0 %v3156
    %v3190 = vpop.f32.mrf.mxu0
    %v3191 = vadd.f32 %v2912, %v3190
    %3192 = vmatmul.f32.gmra.mxu0 %v3159
    %v3193 = vpop.f32.mrf.mxu0
    %v3194 = vadd.f32 %v2917, %v3193
    %3195 = vmatmul.f32.gmra.mxu0 %v3162
    %v3196 = vpop.f32.mrf.mxu0
    %v3197 = vadd.f32 %v2922, %v3196
    %3198 = vmatmul.f32.gmra.mxu0 %v3165
    %v3199 = vpop.f32.mrf.mxu0
    %v3200 = vadd.f32 %v2927, %v3199
    %3201 = vmatmul.f32.gmra.mxu0 %v3168
    %v3202 = vpop.f32.mrf.mxu0
    %v3203 = vadd.f32 %v2932, %v3202
    %3204 = vmatmul.f32.gmra.mxu0 %v3171
    %v3205 = vpop.f32.mrf.mxu0
    %v3206 = vadd.f32 %v2937, %v3205
    %3207 = vdwg.mxu0
    %v3208 = vmul.f32 %v2877, %v2894
    %v3210 = vsel %vm890, %v3208, 0
    %3212 = vmatpush.msra.mxu0 0.0
    %3213 = vmatpush.msra.mxu0 0.0
    %3214 = vmatpush.msra.mxu0 0.0
    %3215 = vmatpush.msra.mxu0 0.0
    %3216 = vmatpush.msra.mxu0 0.0
    %3217 = vmatpush.msra.mxu0 0.0
    %3218 = vmatpush.msra.mxu0 0.0
    %3219 = vmatpush.msra.mxu0 0.0
    %3220 = vmatpush.msra.mxu0 0.0
    %3221 = vmatpush.msra.mxu0 0.0
    %3222 = vmatpush.msra.mxu0 0.0
    %3223 = vmatpush.msra.mxu0 0.0
    %3224 = vmatpush.msra.mxu0 0.0
    %3225 = vmatpush.msra.mxu0 0.0
    %3226 = vmatpush.msra.mxu0 0.0
    %3227 = vmatpush.msra.mxu0 %v3210
    %3228 = vmatmul.f32.gmra.mxu0 %v873
    %v3229 = vpop.f32.mrf.mxu0
    %v3230 = vadd.f32 0.0, %v3229
    %3231 = vmatmul.f32.gmra.mxu0 %v876
    %v3232 = vpop.f32.mrf.mxu0
    %v3233 = vadd.f32 0.0, %v3232
    %3234 = vmatmul.f32.gmra.mxu0 %v879
    %v3235 = vpop.f32.mrf.mxu0
    %v3236 = vadd.f32 0.0, %v3235
    %3237 = vmatmul.f32.gmra.mxu0 %v882
    %v3238 = vpop.f32.mrf.mxu0
    %v3239 = vadd.f32 0.0, %v3238
    %3240 = vmatmul.f32.gmra.mxu0 %v885
    %v3241 = vpop.f32.mrf.mxu0
    %v3242 = vadd.f32 0.0, %v3241
    %3243 = vmatmul.f32.gmra.mxu0 %v888
    %v3244 = vpop.f32.mrf.mxu0
    %v3245 = vadd.f32 0.0, %v3244
    %3246 = vdwg.mxu0
    %v3247 = vmul.f32 %v3230, %v3191
    %v3248 = vmul.f32 %v3233, %v3194
    %v3249 = vmul.f32 %v3236, %v3197
    %v3250 = vmul.f32 %v3239, %v3200
    %v3251 = vmul.f32 %v3242, %v3203
    %v3252 = vmul.f32 %v3245, %v3206
    %v3253 = vadd.f32 %v3142, %v3247
    %v3254 = vadd.f32 %v3143, %v3248
    %v3255 = vadd.f32 %v3144, %v3249
    %v3256 = vadd.f32 %v3145, %v3250
    %v3257 = vadd.f32 %v3146, %v3251
    %v3258 = vadd.f32 %v3147, %v3252
    %s3259 = scalar_lea.vmem %s9, 48
    %v3260 = vld [vmem:[%s3259] sm:$0xff]
    %v3261 = vld [vmem:[%s3259 + $0x8] sm:$0xff]
    %v3262 = vld [vmem:[%s3259 + $0x10] sm:$0xff]
    %v3263 = vld [vmem:[%s3259 + $0x18] sm:$0xff]
    %v3264 = vld [vmem:[%s3259 + $0x20] sm:$0xff]
    %v3265 = vld [vmem:[%s3259 + $0x28] sm:$0xff]
    %s3266 = scalar_lea.vmem %s10, 48
    %v3267 = vld [vmem:[%s3266] sm:$0xff]
    %v3268 = vld [vmem:[%s3266 + $0x8] sm:$0xff]
    %v3269 = vld [vmem:[%s3266 + $0x10] sm:$0xff]
    %v3270 = vld [vmem:[%s3266 + $0x18] sm:$0xff]
    %v3271 = vld [vmem:[%s3266 + $0x20] sm:$0xff]
    %v3272 = vld [vmem:[%s3266 + $0x28] sm:$0xff]
    %3274 = vset.pattern.permute.xlu0 0
    %3275 = vperm.xlu0 %3274, %v3267
    %v3276 = vpop.permute.xlu0 %3275
    %3279 = vset.pattern.permute.xlu0 0
    %3280 = vperm.xlu0 %3279, %v3268
    %v3281 = vpop.permute.xlu0 %3280
    %3284 = vset.pattern.permute.xlu0 0
    %3285 = vperm.xlu0 %3284, %v3269
    %v3286 = vpop.permute.xlu0 %3285
    %3289 = vset.pattern.permute.xlu0 0
    %3290 = vperm.xlu0 %3289, %v3270
    %v3291 = vpop.permute.xlu0 %3290
    %3294 = vset.pattern.permute.xlu0 0
    %3295 = vperm.xlu0 %3294, %v3271
    %v3296 = vpop.permute.xlu0 %3295
    %3299 = vset.pattern.permute.xlu0 0
    %3300 = vperm.xlu0 %3299, %v3272
    %v3301 = vpop.permute.xlu0 %3300
    %v3304 = vsel %vm113, %v3260, 0
    %v3307 = vsel %vm113, %v3261, 0
    %v3310 = vsel %vm113, %v3262, 0
    %v3313 = vsel %vm113, %v3263, 0
    %v3316 = vsel %vm113, %v3264, 0
    %v3319 = vsel %vm113, %v3265, 0
    %3321 = vmatpush.msra.mxu0 0.0
    %3322 = vmatpush.msra.mxu0 0.0
    %3323 = vmatpush.msra.mxu0 0.0
    %3324 = vmatpush.msra.mxu0 0.0
    %3325 = vmatpush.msra.mxu0 0.0
    %3326 = vmatpush.msra.mxu0 0.0
    %3327 = vmatpush.msra.mxu0 0.0
    %3328 = vmatpush.msra.mxu0 0.0
    %3329 = vmatpush.msra.mxu0 0.0
    %3330 = vmatpush.msra.mxu0 0.0
    %3331 = vmatpush.msra.mxu0 %v3258
    %3332 = vmatpush.msra.mxu0 %v3257
    %3333 = vmatpush.msra.mxu0 %v3256
    %3334 = vmatpush.msra.mxu0 %v3255
    %3335 = vmatpush.msra.mxu0 %v3254
    %3336 = vmatpush.msra.mxu0 %v3253
    %3337 = vmatmul.f32.gmra.mxu0 %v3304
    %v3338 = vpop.f32.mrf.mxu0
    %v3339 = vadd.f32 %v3276, %v3338
    %3340 = vmatmul.f32.gmra.mxu0 %v3307
    %v3341 = vpop.f32.mrf.mxu0
    %v3342 = vadd.f32 %v3281, %v3341
    %3343 = vmatmul.f32.gmra.mxu0 %v3310
    %v3344 = vpop.f32.mrf.mxu0
    %v3345 = vadd.f32 %v3286, %v3344
    %3346 = vmatmul.f32.gmra.mxu0 %v3313
    %v3347 = vpop.f32.mrf.mxu0
    %v3348 = vadd.f32 %v3291, %v3347
    %3349 = vmatmul.f32.gmra.mxu0 %v3316
    %v3350 = vpop.f32.mrf.mxu0
    %v3351 = vadd.f32 %v3296, %v3350
    %3352 = vmatmul.f32.gmra.mxu0 %v3319
    %v3353 = vpop.f32.mrf.mxu0
    %v3354 = vadd.f32 %v3301, %v3353
    %3355 = vdwg.mxu0
    %v3356 = vadd.f32 %v3339, %v2469
    %v3357 = vadd.f32 %v3342, %v2470
    %v3358 = vadd.f32 %v3345, %v2471
    %v3359 = vadd.f32 %v3348, %v2472
    %v3360 = vadd.f32 %v3351, %v2473
    %v3361 = vadd.f32 %v3354, %v2474
    %s3362 = scalar_lea.vmem %s11, 48
    %v3363 = vld [vmem:[%s3362] sm:$0xff]
    %v3364 = vld [vmem:[%s3362 + $0x8] sm:$0xff]
    %v3365 = vld [vmem:[%s3362 + $0x10] sm:$0xff]
    %v3366 = vld [vmem:[%s3362 + $0x18] sm:$0xff]
    %v3367 = vld [vmem:[%s3362 + $0x20] sm:$0xff]
    %v3368 = vld [vmem:[%s3362 + $0x28] sm:$0xff]
    %s3369 = scalar_lea.vmem %s12, 48
    %v3370 = vld [vmem:[%s3369] sm:$0xff]
    %v3371 = vld [vmem:[%s3369 + $0x8] sm:$0xff]
    %v3372 = vld [vmem:[%s3369 + $0x10] sm:$0xff]
    %v3373 = vld [vmem:[%s3369 + $0x18] sm:$0xff]
    %v3374 = vld [vmem:[%s3369 + $0x20] sm:$0xff]
    %v3375 = vld [vmem:[%s3369 + $0x28] sm:$0xff]
    %3376 = vmatpush.msra.mxu0 0.0
    %3377 = vmatpush.msra.mxu0 0.0
    %3378 = vmatpush.msra.mxu0 0.0
    %3379 = vmatpush.msra.mxu0 0.0
    %3380 = vmatpush.msra.mxu0 0.0
    %3381 = vmatpush.msra.mxu0 0.0
    %3382 = vmatpush.msra.mxu0 0.0
    %3383 = vmatpush.msra.mxu0 0.0
    %3384 = vmatpush.msra.mxu0 0.0
    %3385 = vmatpush.msra.mxu0 0.0
    %3386 = vmatpush.msra.mxu0 %v3361
    %3387 = vmatpush.msra.mxu0 %v3360
    %3388 = vmatpush.msra.mxu0 %v3359
    %3389 = vmatpush.msra.mxu0 %v3358
    %3390 = vmatpush.msra.mxu0 %v3357
    %3391 = vmatpush.msra.mxu0 %v3356
    %3392 = vmatmul.f32.gmra.mxu0 %v115
    %v3393 = vpop.f32.mrf.mxu0
    %v3394 = vadd.f32 0.0, %v3393
    %3395 = vdwg.mxu0
    %v3396 = vmul.f32 %v3394, 0.0625
    %v3398 = vsel %vm157, %v3396, 0
    %3400 = vmatpush.msra.mxu0 0.0
    %3401 = vmatpush.msra.mxu0 0.0
    %3402 = vmatpush.msra.mxu0 0.0
    %3403 = vmatpush.msra.mxu0 0.0
    %3404 = vmatpush.msra.mxu0 0.0
    %3405 = vmatpush.msra.mxu0 0.0
    %3406 = vmatpush.msra.mxu0 0.0
    %3407 = vmatpush.msra.mxu0 0.0
    %3408 = vmatpush.msra.mxu0 0.0
    %3409 = vmatpush.msra.mxu0 0.0
    %3410 = vmatpush.msra.mxu0 0.0
    %3411 = vmatpush.msra.mxu0 0.0
    %3412 = vmatpush.msra.mxu0 0.0
    %3413 = vmatpush.msra.mxu0 0.0
    %3414 = vmatpush.msra.mxu0 0.0
    %3415 = vmatpush.msra.mxu0 %v3398
    %3416 = vmatmul.f32.gmra.mxu0 %v140
    %v3417 = vpop.f32.mrf.mxu0
    %v3418 = vadd.f32 0.0, %v3417
    %3419 = vmatmul.f32.gmra.mxu0 %v143
    %v3420 = vpop.f32.mrf.mxu0
    %v3421 = vadd.f32 0.0, %v3420
    %3422 = vmatmul.f32.gmra.mxu0 %v146
    %v3423 = vpop.f32.mrf.mxu0
    %v3424 = vadd.f32 0.0, %v3423
    %3425 = vmatmul.f32.gmra.mxu0 %v149
    %v3426 = vpop.f32.mrf.mxu0
    %v3427 = vadd.f32 0.0, %v3426
    %3428 = vmatmul.f32.gmra.mxu0 %v152
    %v3429 = vpop.f32.mrf.mxu0
    %v3430 = vadd.f32 0.0, %v3429
    %3431 = vmatmul.f32.gmra.mxu0 %v155
    %v3432 = vpop.f32.mrf.mxu0
    %v3433 = vadd.f32 0.0, %v3432
    %3434 = vdwg.mxu0
    %v3435 = vsub.f32 %v3356, %v3418
    %v3436 = vsub.f32 %v3357, %v3421
    %v3437 = vsub.f32 %v3358, %v3424
    %v3438 = vsub.f32 %v3359, %v3427
    %v3439 = vsub.f32 %v3360, %v3430
    %v3440 = vsub.f32 %v3361, %v3433
    %v3441 = vmul.f32 %v3435, %v3435
    %v3442 = vmul.f32 %v3436, %v3436
    %v3443 = vmul.f32 %v3437, %v3437
    %v3444 = vmul.f32 %v3438, %v3438
    %v3445 = vmul.f32 %v3439, %v3439
    %v3446 = vmul.f32 %v3440, %v3440
    %3447 = vmatpush.msra.mxu0 0.0
    %3448 = vmatpush.msra.mxu0 0.0
    %3449 = vmatpush.msra.mxu0 0.0
    %3450 = vmatpush.msra.mxu0 0.0
    %3451 = vmatpush.msra.mxu0 0.0
    %3452 = vmatpush.msra.mxu0 0.0
    %3453 = vmatpush.msra.mxu0 0.0
    %3454 = vmatpush.msra.mxu0 0.0
    %3455 = vmatpush.msra.mxu0 0.0
    %3456 = vmatpush.msra.mxu0 0.0
    %3457 = vmatpush.msra.mxu0 %v3446
    %3458 = vmatpush.msra.mxu0 %v3445
    %3459 = vmatpush.msra.mxu0 %v3444
    %3460 = vmatpush.msra.mxu0 %v3443
    %3461 = vmatpush.msra.mxu0 %v3442
    %3462 = vmatpush.msra.mxu0 %v3441
    %3463 = vmatmul.f32.gmra.mxu0 %v115
    %v3464 = vpop.f32.mrf.mxu0
    %v3465 = vadd.f32 0.0, %v3464
    %3466 = vdwg.mxu0
    %v3467 = vmul.f32 %v3465, 0.0625
    %v3468 = vadd.f32 %v3467, 1e-12
    %v3469 = vrsqrt.pop %v3468
    %v3470 = vmul.f32 %v3469, %v3468
    %v3471 = vmul.f32 %v3470, %v3469
    %v3472 = vmul.f32 0.5, %v3471
    %v3473 = vsub.f32 1.5, %v3472
    %v3474 = vmul.f32 %v3469, %v3473
    %vm3475 = vweird.f32 %v3468
    %vm3476 = vweird.f32 %v3469
    %vm3477 = vmor %vm3475, %vm3476
    %v3478 = vsel %vm3477, %v3469, %v3474
    %v3480 = vsel %vm157, %v3478, 0
    %3482 = vmatpush.msra.mxu0 0.0
    %3483 = vmatpush.msra.mxu0 0.0
    %3484 = vmatpush.msra.mxu0 0.0
    %3485 = vmatpush.msra.mxu0 0.0
    %3486 = vmatpush.msra.mxu0 0.0
    %3487 = vmatpush.msra.mxu0 0.0
    %3488 = vmatpush.msra.mxu0 0.0
    %3489 = vmatpush.msra.mxu0 0.0
    %3490 = vmatpush.msra.mxu0 0.0
    %3491 = vmatpush.msra.mxu0 0.0
    %3492 = vmatpush.msra.mxu0 0.0
    %3493 = vmatpush.msra.mxu0 0.0
    %3494 = vmatpush.msra.mxu0 0.0
    %3495 = vmatpush.msra.mxu0 0.0
    %3496 = vmatpush.msra.mxu0 0.0
    %3497 = vmatpush.msra.mxu0 %v3480
    %3498 = vmatmul.f32.gmra.mxu0 %v140
    %v3499 = vpop.f32.mrf.mxu0
    %v3500 = vadd.f32 0.0, %v3499
    %3501 = vmatmul.f32.gmra.mxu0 %v143
    %v3502 = vpop.f32.mrf.mxu0
    %v3503 = vadd.f32 0.0, %v3502
    %3504 = vmatmul.f32.gmra.mxu0 %v146
    %v3505 = vpop.f32.mrf.mxu0
    %v3506 = vadd.f32 0.0, %v3505
    %3507 = vmatmul.f32.gmra.mxu0 %v149
    %v3508 = vpop.f32.mrf.mxu0
    %v3509 = vadd.f32 0.0, %v3508
    %3510 = vmatmul.f32.gmra.mxu0 %v152
    %v3511 = vpop.f32.mrf.mxu0
    %v3512 = vadd.f32 0.0, %v3511
    %3513 = vmatmul.f32.gmra.mxu0 %v155
    %v3514 = vpop.f32.mrf.mxu0
    %v3515 = vadd.f32 0.0, %v3514
    %3516 = vdwg.mxu0
    %v3517 = vmul.f32 %v3435, %v3500
    %v3518 = vmul.f32 %v3436, %v3503
    %v3519 = vmul.f32 %v3437, %v3506
    %v3520 = vmul.f32 %v3438, %v3509
    %v3521 = vmul.f32 %v3439, %v3512
    %v3522 = vmul.f32 %v3440, %v3515
    %3524 = vset.pattern.permute.xlu0 0
    %3525 = vperm.xlu0 %3524, %v3363
    %v3526 = vpop.permute.xlu0 %3525
    %3529 = vset.pattern.permute.xlu0 0
    %3530 = vperm.xlu0 %3529, %v3364
    %v3531 = vpop.permute.xlu0 %3530
    %3534 = vset.pattern.permute.xlu0 0
    %3535 = vperm.xlu0 %3534, %v3365
    %v3536 = vpop.permute.xlu0 %3535
    %3539 = vset.pattern.permute.xlu0 0
    %3540 = vperm.xlu0 %3539, %v3366
    %v3541 = vpop.permute.xlu0 %3540
    %3544 = vset.pattern.permute.xlu0 0
    %3545 = vperm.xlu0 %3544, %v3367
    %v3546 = vpop.permute.xlu0 %3545
    %3549 = vset.pattern.permute.xlu0 0
    %3550 = vperm.xlu0 %3549, %v3368
    %v3551 = vpop.permute.xlu0 %3550
    %v3553 = vmul.f32 %v3517, %v3526
    %v3554 = vmul.f32 %v3518, %v3531
    %v3555 = vmul.f32 %v3519, %v3536
    %v3556 = vmul.f32 %v3520, %v3541
    %v3557 = vmul.f32 %v3521, %v3546
    %v3558 = vmul.f32 %v3522, %v3551
    %3560 = vset.pattern.permute.xlu0 0
    %3561 = vperm.xlu0 %3560, %v3370
    %v3562 = vpop.permute.xlu0 %3561
    %3565 = vset.pattern.permute.xlu0 0
    %3566 = vperm.xlu0 %3565, %v3371
    %v3567 = vpop.permute.xlu0 %3566
    %3570 = vset.pattern.permute.xlu0 0
    %3571 = vperm.xlu0 %3570, %v3372
    %v3572 = vpop.permute.xlu0 %3571
    %3575 = vset.pattern.permute.xlu0 0
    %3576 = vperm.xlu0 %3575, %v3373
    %v3577 = vpop.permute.xlu0 %3576
    %3580 = vset.pattern.permute.xlu0 0
    %3581 = vperm.xlu0 %3580, %v3374
    %v3582 = vpop.permute.xlu0 %3581
    %3585 = vset.pattern.permute.xlu0 0
    %3586 = vperm.xlu0 %3585, %v3375
    %v3587 = vpop.permute.xlu0 %3586
    %v3589 = vadd.f32 %v3553, %v3562
    %v3590 = vadd.f32 %v3554, %v3567
    %v3591 = vadd.f32 %v3555, %v3572
    %v3592 = vadd.f32 %v3556, %v3577
    %v3593 = vadd.f32 %v3557, %v3582
    %v3594 = vadd.f32 %v3558, %v3587
    %s3595 = scalar_lea.vmem %s13, 96
    %v3596 = vld [vmem:[%s3595] sm:$0xff]
    %v3597 = vld [vmem:[%s3595 + $0x8] sm:$0xff]
    %v3598 = vld [vmem:[%s3595 + $0x10] sm:$0xff]
    %v3599 = vld [vmem:[%s3595 + $0x18] sm:$0xff]
    %v3600 = vld [vmem:[%s3595 + $0x20] sm:$0xff]
    %v3601 = vld [vmem:[%s3595 + $0x28] sm:$0xff]
    %v3602 = vld [vmem:[%s3595 + $0x30] sm:$0xff]
    %v3603 = vld [vmem:[%s3595 + $0x38] sm:$0xff]
    %v3604 = vld [vmem:[%s3595 + $0x40] sm:$0xff]
    %v3605 = vld [vmem:[%s3595 + $0x48] sm:$0xff]
    %v3606 = vld [vmem:[%s3595 + $0x50] sm:$0xff]
    %v3607 = vld [vmem:[%s3595 + $0x58] sm:$0xff]
    %s3608 = scalar_lea.vmem %s14, 96
    %v3609 = vld [vmem:[%s3608] sm:$0xff]
    %v3610 = vld [vmem:[%s3608 + $0x8] sm:$0xff]
    %v3611 = vld [vmem:[%s3608 + $0x10] sm:$0xff]
    %v3612 = vld [vmem:[%s3608 + $0x18] sm:$0xff]
    %v3613 = vld [vmem:[%s3608 + $0x20] sm:$0xff]
    %v3614 = vld [vmem:[%s3608 + $0x28] sm:$0xff]
    %v3615 = vld [vmem:[%s3608 + $0x30] sm:$0xff]
    %v3616 = vld [vmem:[%s3608 + $0x38] sm:$0xff]
    %v3617 = vld [vmem:[%s3608 + $0x40] sm:$0xff]
    %v3618 = vld [vmem:[%s3608 + $0x48] sm:$0xff]
    %v3619 = vld [vmem:[%s3608 + $0x50] sm:$0xff]
    %v3620 = vld [vmem:[%s3608 + $0x58] sm:$0xff]
    %3622 = vset.pattern.permute.xlu0 0
    %3623 = vperm.xlu0 %3622, %v3609
    %v3624 = vpop.permute.xlu0 %3623
    %3627 = vset.pattern.permute.xlu0 0
    %3628 = vperm.xlu0 %3627, %v3610
    %v3629 = vpop.permute.xlu0 %3628
    %3632 = vset.pattern.permute.xlu0 0
    %3633 = vperm.xlu0 %3632, %v3611
    %v3634 = vpop.permute.xlu0 %3633
    %3637 = vset.pattern.permute.xlu0 0
    %3638 = vperm.xlu0 %3637, %v3612
    %v3639 = vpop.permute.xlu0 %3638
    %3642 = vset.pattern.permute.xlu0 0
    %3643 = vperm.xlu0 %3642, %v3613
    %v3644 = vpop.permute.xlu0 %3643
    %3647 = vset.pattern.permute.xlu0 0
    %3648 = vperm.xlu0 %3647, %v3614
    %v3649 = vpop.permute.xlu0 %3648
    %3652 = vset.pattern.permute.xlu0 0
    %3653 = vperm.xlu0 %3652, %v3615
    %v3654 = vpop.permute.xlu0 %3653
    %3657 = vset.pattern.permute.xlu0 0
    %3658 = vperm.xlu0 %3657, %v3616
    %v3659 = vpop.permute.xlu0 %3658
    %3662 = vset.pattern.permute.xlu0 0
    %3663 = vperm.xlu0 %3662, %v3617
    %v3664 = vpop.permute.xlu0 %3663
    %3667 = vset.pattern.permute.xlu0 0
    %3668 = vperm.xlu0 %3667, %v3618
    %v3669 = vpop.permute.xlu0 %3668
    %3672 = vset.pattern.permute.xlu0 0
    %3673 = vperm.xlu0 %3672, %v3619
    %v3674 = vpop.permute.xlu0 %3673
    %3677 = vset.pattern.permute.xlu0 0
    %3678 = vperm.xlu0 %3677, %v3620
    %v3679 = vpop.permute.xlu0 %3678
    %v3682 = vsel %vm113, %v3596, 0
    %v3685 = vsel %vm113, %v3597, 0
    %v3688 = vsel %vm113, %v3598, 0
    %v3691 = vsel %vm113, %v3599, 0
    %v3694 = vsel %vm113, %v3600, 0
    %v3697 = vsel %vm113, %v3601, 0
    %v3700 = vsel %vm113, %v3602, 0
    %v3703 = vsel %vm113, %v3603, 0
    %v3706 = vsel %vm113, %v3604, 0
    %v3709 = vsel %vm113, %v3605, 0
    %v3712 = vsel %vm113, %v3606, 0
    %v3715 = vsel %vm113, %v3607, 0
    %3717 = vmatpush.msra.mxu0 0.0
    %3718 = vmatpush.msra.mxu0 0.0
    %3719 = vmatpush.msra.mxu0 0.0
    %3720 = vmatpush.msra.mxu0 0.0
    %3721 = vmatpush.msra.mxu0 0.0
    %3722 = vmatpush.msra.mxu0 0.0
    %3723 = vmatpush.msra.mxu0 0.0
    %3724 = vmatpush.msra.mxu0 0.0
    %3725 = vmatpush.msra.mxu0 0.0
    %3726 = vmatpush.msra.mxu0 0.0
    %3727 = vmatpush.msra.mxu0 %v3594
    %3728 = vmatpush.msra.mxu0 %v3593
    %3729 = vmatpush.msra.mxu0 %v3592
    %3730 = vmatpush.msra.mxu0 %v3591
    %3731 = vmatpush.msra.mxu0 %v3590
    %3732 = vmatpush.msra.mxu0 %v3589
    %3733 = vmatmul.f32.gmra.mxu0 %v3682
    %v3734 = vpop.f32.mrf.mxu0
    %v3735 = vadd.f32 %v3624, %v3734
    %3736 = vmatmul.f32.gmra.mxu0 %v3685
    %v3737 = vpop.f32.mrf.mxu0
    %v3738 = vadd.f32 %v3629, %v3737
    %3739 = vmatmul.f32.gmra.mxu0 %v3688
    %v3740 = vpop.f32.mrf.mxu0
    %v3741 = vadd.f32 %v3634, %v3740
    %3742 = vmatmul.f32.gmra.mxu0 %v3691
    %v3743 = vpop.f32.mrf.mxu0
    %v3744 = vadd.f32 %v3639, %v3743
    %3745 = vmatmul.f32.gmra.mxu0 %v3694
    %v3746 = vpop.f32.mrf.mxu0
    %v3747 = vadd.f32 %v3644, %v3746
    %3748 = vmatmul.f32.gmra.mxu0 %v3697
    %v3749 = vpop.f32.mrf.mxu0
    %v3750 = vadd.f32 %v3649, %v3749
    %3751 = vmatmul.f32.gmra.mxu0 %v3700
    %v3752 = vpop.f32.mrf.mxu0
    %v3753 = vadd.f32 %v3654, %v3752
    %3754 = vmatmul.f32.gmra.mxu0 %v3703
    %v3755 = vpop.f32.mrf.mxu0
    %v3756 = vadd.f32 %v3659, %v3755
    %3757 = vmatmul.f32.gmra.mxu0 %v3706
    %v3758 = vpop.f32.mrf.mxu0
    %v3759 = vadd.f32 %v3664, %v3758
    %3760 = vmatmul.f32.gmra.mxu0 %v3709
    %v3761 = vpop.f32.mrf.mxu0
    %v3762 = vadd.f32 %v3669, %v3761
    %3763 = vmatmul.f32.gmra.mxu0 %v3712
    %v3764 = vpop.f32.mrf.mxu0
    %v3765 = vadd.f32 %v3674, %v3764
    %3766 = vmatmul.f32.gmra.mxu0 %v3715
    %v3767 = vpop.f32.mrf.mxu0
    %v3768 = vadd.f32 %v3679, %v3767
    %3769 = vdwg.mxu0
    %v3770 = vmul.f32 %v3735, 0.5
    %v3771 = vmul.f32 %v3738, 0.5
    %v3772 = vmul.f32 %v3741, 0.5
    %v3773 = vmul.f32 %v3744, 0.5
    %v3774 = vmul.f32 %v3747, 0.5
    %v3775 = vmul.f32 %v3750, 0.5
    %v3776 = vmul.f32 %v3753, 0.5
    %v3777 = vmul.f32 %v3756, 0.5
    %v3778 = vmul.f32 %v3759, 0.5
    %v3779 = vmul.f32 %v3762, 0.5
    %v3780 = vmul.f32 %v3765, 0.5
    %v3781 = vmul.f32 %v3768, 0.5
    %v3782 = vmul.f32 %v3735, 0.70710677
    %v3783 = vmul.f32 %v3738, 0.70710677
    %v3784 = vmul.f32 %v3741, 0.70710677
    %v3785 = vmul.f32 %v3744, 0.70710677
    %v3786 = vmul.f32 %v3747, 0.70710677
    %v3787 = vmul.f32 %v3750, 0.70710677
    %v3788 = vmul.f32 %v3753, 0.70710677
    %v3789 = vmul.f32 %v3756, 0.70710677
    %v3790 = vmul.f32 %v3759, 0.70710677
    %v3791 = vmul.f32 %v3762, 0.70710677
    %v3792 = vmul.f32 %v3765, 0.70710677
    %v3793 = vmul.f32 %v3768, 0.70710677
    %v3794 = vand.u32 2147483647, %v3782
    %v3795 = vand.u32 2147483647, %v3783
    %v3796 = vand.u32 2147483647, %v3784
    %v3797 = vand.u32 2147483647, %v3785
    %v3798 = vand.u32 2147483647, %v3786
    %v3799 = vand.u32 2147483647, %v3787
    %v3800 = vand.u32 2147483647, %v3788
    %v3801 = vand.u32 2147483647, %v3789
    %v3802 = vand.u32 2147483647, %v3790
    %v3803 = vand.u32 2147483647, %v3791
    %v3804 = vand.u32 2147483647, %v3792
    %v3805 = vand.u32 2147483647, %v3793
    %v3806 = vmul.f32 %v3794, 0.3275911
    %v3807 = vmul.f32 %v3795, 0.3275911
    %v3808 = vmul.f32 %v3796, 0.3275911
    %v3809 = vmul.f32 %v3797, 0.3275911
    %v3810 = vmul.f32 %v3798, 0.3275911
    %v3811 = vmul.f32 %v3799, 0.3275911
    %v3812 = vmul.f32 %v3800, 0.3275911
    %v3813 = vmul.f32 %v3801, 0.3275911
    %v3814 = vmul.f32 %v3802, 0.3275911
    %v3815 = vmul.f32 %v3803, 0.3275911
    %v3816 = vmul.f32 %v3804, 0.3275911
    %v3817 = vmul.f32 %v3805, 0.3275911
    %v3818 = vadd.f32 %v3806, 1.0
    %v3819 = vadd.f32 %v3807, 1.0
    %v3820 = vadd.f32 %v3808, 1.0
    %v3821 = vadd.f32 %v3809, 1.0
    %v3822 = vadd.f32 %v3810, 1.0
    %v3823 = vadd.f32 %v3811, 1.0
    %v3824 = vadd.f32 %v3812, 1.0
    %v3825 = vadd.f32 %v3813, 1.0
    %v3826 = vadd.f32 %v3814, 1.0
    %v3827 = vadd.f32 %v3815, 1.0
    %v3828 = vadd.f32 %v3816, 1.0
    %v3829 = vadd.f32 %v3817, 1.0
    %v3830 = vrcp.pop %v3818
    %v3831 = vmul.f32 %v3818, %v3830
    %v3832 = vsub.f32 1.0, %v3831
    %v3833 = vmul.f32 %v3830, %v3832
    %v3834 = vadd.f32 %v3830, %v3833
    %vm3835 = vweird.f32 %v3818
    %vm3836 = vweird.f32 %v3830
    %vm3837 = vmor %vm3835, %vm3836
    %v3838 = vsel %vm3837, %v3830, %v3834
    %v3839 = vand.u32 2147483647, %v3818
    %vm3840 = vcmp.eq.f32.partialorder %v3839, 8.507059e+37
    %v3841 = vand.u32 %v3818, 2147483648
    %v3842 = vor.u32 1.1754944e-38, %v3841
    %v3843 = vsel %vm3840, %v3842, %v3838
    %v3844 = vmul.f32 1.0, %v3843
    %v3845 = vrcp.pop %v3819
    %v3846 = vmul.f32 %v3819, %v3845
    %v3847 = vsub.f32 1.0, %v3846
    %v3848 = vmul.f32 %v3845, %v3847
    %v3849 = vadd.f32 %v3845, %v3848
    %vm3850 = vweird.f32 %v3819
    %vm3851 = vweird.f32 %v3845
    %vm3852 = vmor %vm3850, %vm3851
    %v3853 = vsel %vm3852, %v3845, %v3849
    %v3854 = vand.u32 2147483647, %v3819
    %vm3855 = vcmp.eq.f32.partialorder %v3854, 8.507059e+37
    %v3856 = vand.u32 %v3819, 2147483648
    %v3857 = vor.u32 1.1754944e-38, %v3856
    %v3858 = vsel %vm3855, %v3857, %v3853
    %v3859 = vmul.f32 1.0, %v3858
    %v3860 = vrcp.pop %v3820
    %v3861 = vmul.f32 %v3820, %v3860
    %v3862 = vsub.f32 1.0, %v3861
    %v3863 = vmul.f32 %v3860, %v3862
    %v3864 = vadd.f32 %v3860, %v3863
    %vm3865 = vweird.f32 %v3820
    %vm3866 = vweird.f32 %v3860
    %vm3867 = vmor %vm3865, %vm3866
    %v3868 = vsel %vm3867, %v3860, %v3864
    %v3869 = vand.u32 2147483647, %v3820
    %vm3870 = vcmp.eq.f32.partialorder %v3869, 8.507059e+37
    %v3871 = vand.u32 %v3820, 2147483648
    %v3872 = vor.u32 1.1754944e-38, %v3871
    %v3873 = vsel %vm3870, %v3872, %v3868
    %v3874 = vmul.f32 1.0, %v3873
    %v3875 = vrcp.pop %v3821
    %v3876 = vmul.f32 %v3821, %v3875
    %v3877 = vsub.f32 1.0, %v3876
    %v3878 = vmul.f32 %v3875, %v3877
    %v3879 = vadd.f32 %v3875, %v3878
    %vm3880 = vweird.f32 %v3821
    %vm3881 = vweird.f32 %v3875
    %vm3882 = vmor %vm3880, %vm3881
    %v3883 = vsel %vm3882, %v3875, %v3879
    %v3884 = vand.u32 2147483647, %v3821
    %vm3885 = vcmp.eq.f32.partialorder %v3884, 8.507059e+37
    %v3886 = vand.u32 %v3821, 2147483648
    %v3887 = vor.u32 1.1754944e-38, %v3886
    %v3888 = vsel %vm3885, %v3887, %v3883
    %v3889 = vmul.f32 1.0, %v3888
    %v3890 = vrcp.pop %v3822
    %v3891 = vmul.f32 %v3822, %v3890
    %v3892 = vsub.f32 1.0, %v3891
    %v3893 = vmul.f32 %v3890, %v3892
    %v3894 = vadd.f32 %v3890, %v3893
    %vm3895 = vweird.f32 %v3822
    %vm3896 = vweird.f32 %v3890
    %vm3897 = vmor %vm3895, %vm3896
    %v3898 = vsel %vm3897, %v3890, %v3894
    %v3899 = vand.u32 2147483647, %v3822
    %vm3900 = vcmp.eq.f32.partialorder %v3899, 8.507059e+37
    %v3901 = vand.u32 %v3822, 2147483648
    %v3902 = vor.u32 1.1754944e-38, %v3901
    %v3903 = vsel %vm3900, %v3902, %v3898
    %v3904 = vmul.f32 1.0, %v3903
    %v3905 = vrcp.pop %v3823
    %v3906 = vmul.f32 %v3823, %v3905
    %v3907 = vsub.f32 1.0, %v3906
    %v3908 = vmul.f32 %v3905, %v3907
    %v3909 = vadd.f32 %v3905, %v3908
    %vm3910 = vweird.f32 %v3823
    %vm3911 = vweird.f32 %v3905
    %vm3912 = vmor %vm3910, %vm3911
    %v3913 = vsel %vm3912, %v3905, %v3909
    %v3914 = vand.u32 2147483647, %v3823
    %vm3915 = vcmp.eq.f32.partialorder %v3914, 8.507059e+37
    %v3916 = vand.u32 %v3823, 2147483648
    %v3917 = vor.u32 1.1754944e-38, %v3916
    %v3918 = vsel %vm3915, %v3917, %v3913
    %v3919 = vmul.f32 1.0, %v3918
    %v3920 = vrcp.pop %v3824
    %v3921 = vmul.f32 %v3824, %v3920
    %v3922 = vsub.f32 1.0, %v3921
    %v3923 = vmul.f32 %v3920, %v3922
    %v3924 = vadd.f32 %v3920, %v3923
    %vm3925 = vweird.f32 %v3824
    %vm3926 = vweird.f32 %v3920
    %vm3927 = vmor %vm3925, %vm3926
    %v3928 = vsel %vm3927, %v3920, %v3924
    %v3929 = vand.u32 2147483647, %v3824
    %vm3930 = vcmp.eq.f32.partialorder %v3929, 8.507059e+37
    %v3931 = vand.u32 %v3824, 2147483648
    %v3932 = vor.u32 1.1754944e-38, %v3931
    %v3933 = vsel %vm3930, %v3932, %v3928
    %v3934 = vmul.f32 1.0, %v3933
    %v3935 = vrcp.pop %v3825
    %v3936 = vmul.f32 %v3825, %v3935
    %v3937 = vsub.f32 1.0, %v3936
    %v3938 = vmul.f32 %v3935, %v3937
    %v3939 = vadd.f32 %v3935, %v3938
    %vm3940 = vweird.f32 %v3825
    %vm3941 = vweird.f32 %v3935
    %vm3942 = vmor %vm3940, %vm3941
    %v3943 = vsel %vm3942, %v3935, %v3939
    %v3944 = vand.u32 2147483647, %v3825
    %vm3945 = vcmp.eq.f32.partialorder %v3944, 8.507059e+37
    %v3946 = vand.u32 %v3825, 2147483648
    %v3947 = vor.u32 1.1754944e-38, %v3946
    %v3948 = vsel %vm3945, %v3947, %v3943
    %v3949 = vmul.f32 1.0, %v3948
    %v3950 = vrcp.pop %v3826
    %v3951 = vmul.f32 %v3826, %v3950
    %v3952 = vsub.f32 1.0, %v3951
    %v3953 = vmul.f32 %v3950, %v3952
    %v3954 = vadd.f32 %v3950, %v3953
    %vm3955 = vweird.f32 %v3826
    %vm3956 = vweird.f32 %v3950
    %vm3957 = vmor %vm3955, %vm3956
    %v3958 = vsel %vm3957, %v3950, %v3954
    %v3959 = vand.u32 2147483647, %v3826
    %vm3960 = vcmp.eq.f32.partialorder %v3959, 8.507059e+37
    %v3961 = vand.u32 %v3826, 2147483648
    %v3962 = vor.u32 1.1754944e-38, %v3961
    %v3963 = vsel %vm3960, %v3962, %v3958
    %v3964 = vmul.f32 1.0, %v3963
    %v3965 = vrcp.pop %v3827
    %v3966 = vmul.f32 %v3827, %v3965
    %v3967 = vsub.f32 1.0, %v3966
    %v3968 = vmul.f32 %v3965, %v3967
    %v3969 = vadd.f32 %v3965, %v3968
    %vm3970 = vweird.f32 %v3827
    %vm3971 = vweird.f32 %v3965
    %vm3972 = vmor %vm3970, %vm3971
    %v3973 = vsel %vm3972, %v3965, %v3969
    %v3974 = vand.u32 2147483647, %v3827
    %vm3975 = vcmp.eq.f32.partialorder %v3974, 8.507059e+37
    %v3976 = vand.u32 %v3827, 2147483648
    %v3977 = vor.u32 1.1754944e-38, %v3976
    %v3978 = vsel %vm3975, %v3977, %v3973
    %v3979 = vmul.f32 1.0, %v3978
    %v3980 = vrcp.pop %v3828
    %v3981 = vmul.f32 %v3828, %v3980
    %v3982 = vsub.f32 1.0, %v3981
    %v3983 = vmul.f32 %v3980, %v3982
    %v3984 = vadd.f32 %v3980, %v3983
    %vm3985 = vweird.f32 %v3828
    %vm3986 = vweird.f32 %v3980
    %vm3987 = vmor %vm3985, %vm3986
    %v3988 = vsel %vm3987, %v3980, %v3984
    %v3989 = vand.u32 2147483647, %v3828
    %vm3990 = vcmp.eq.f32.partialorder %v3989, 8.507059e+37
    %v3991 = vand.u32 %v3828, 2147483648
    %v3992 = vor.u32 1.1754944e-38, %v3991
    %v3993 = vsel %vm3990, %v3992, %v3988
    %v3994 = vmul.f32 1.0, %v3993
    %v3995 = vrcp.pop %v3829
    %v3996 = vmul.f32 %v3829, %v3995
    %v3997 = vsub.f32 1.0, %v3996
    %v3998 = vmul.f32 %v3995, %v3997
    %v3999 = vadd.f32 %v3995, %v3998
    %vm4000 = vweird.f32 %v3829
    %vm4001 = vweird.f32 %v3995
    %vm4002 = vmor %vm4000, %vm4001
    %v4003 = vsel %vm4002, %v3995, %v3999
    %v4004 = vand.u32 2147483647, %v3829
    %vm4005 = vcmp.eq.f32.partialorder %v4004, 8.507059e+37
    %v4006 = vand.u32 %v3829, 2147483648
    %v4007 = vor.u32 1.1754944e-38, %v4006
    %v4008 = vsel %vm4005, %v4007, %v4003
    %v4009 = vmul.f32 1.0, %v4008
    %v4010 = vmul.f32 %v3844, 1.0614054
    %v4011 = vmul.f32 %v3859, 1.0614054
    %v4012 = vmul.f32 %v3874, 1.0614054
    %v4013 = vmul.f32 %v3889, 1.0614054
    %v4014 = vmul.f32 %v3904, 1.0614054
    %v4015 = vmul.f32 %v3919, 1.0614054
    %v4016 = vmul.f32 %v3934, 1.0614054
    %v4017 = vmul.f32 %v3949, 1.0614054
    %v4018 = vmul.f32 %v3964, 1.0614054
    %v4019 = vmul.f32 %v3979, 1.0614054
    %v4020 = vmul.f32 %v3994, 1.0614054
    %v4021 = vmul.f32 %v4009, 1.0614054
    %v4022 = vadd.f32 %v4010, -1.4531521
    %v4023 = vadd.f32 %v4011, -1.4531521
    %v4024 = vadd.f32 %v4012, -1.4531521
    %v4025 = vadd.f32 %v4013, -1.4531521
    %v4026 = vadd.f32 %v4014, -1.4531521
    %v4027 = vadd.f32 %v4015, -1.4531521
    %v4028 = vadd.f32 %v4016, -1.4531521
    %v4029 = vadd.f32 %v4017, -1.4531521
    %v4030 = vadd.f32 %v4018, -1.4531521
    %v4031 = vadd.f32 %v4019, -1.4531521
    %v4032 = vadd.f32 %v4020, -1.4531521
    %v4033 = vadd.f32 %v4021, -1.4531521
    %v4034 = vmul.f32 %v4022, %v3844
    %v4035 = vmul.f32 %v4023, %v3859
    %v4036 = vmul.f32 %v4024, %v3874
    %v4037 = vmul.f32 %v4025, %v3889
    %v4038 = vmul.f32 %v4026, %v3904
    %v4039 = vmul.f32 %v4027, %v3919
    %v4040 = vmul.f32 %v4028, %v3934
    %v4041 = vmul.f32 %v4029, %v3949
    %v4042 = vmul.f32 %v4030, %v3964
    %v4043 = vmul.f32 %v4031, %v3979
    %v4044 = vmul.f32 %v4032, %v3994
    %v4045 = vmul.f32 %v4033, %v4009
    %v4046 = vadd.f32 %v4034, 1.4214138
    %v4047 = vadd.f32 %v4035, 1.4214138
    %v4048 = vadd.f32 %v4036, 1.4214138
    %v4049 = vadd.f32 %v4037, 1.4214138
    %v4050 = vadd.f32 %v4038, 1.4214138
    %v4051 = vadd.f32 %v4039, 1.4214138
    %v4052 = vadd.f32 %v4040, 1.4214138
    %v4053 = vadd.f32 %v4041, 1.4214138
    %v4054 = vadd.f32 %v4042, 1.4214138
    %v4055 = vadd.f32 %v4043, 1.4214138
    %v4056 = vadd.f32 %v4044, 1.4214138
    %v4057 = vadd.f32 %v4045, 1.4214138
    %v4058 = vmul.f32 %v4046, %v3844
    %v4059 = vmul.f32 %v4047, %v3859
    %v4060 = vmul.f32 %v4048, %v3874
    %v4061 = vmul.f32 %v4049, %v3889
    %v4062 = vmul.f32 %v4050, %v3904
    %v4063 = vmul.f32 %v4051, %v3919
    %v4064 = vmul.f32 %v4052, %v3934
    %v4065 = vmul.f32 %v4053, %v3949
    %v4066 = vmul.f32 %v4054, %v3964
    %v4067 = vmul.f32 %v4055, %v3979
    %v4068 = vmul.f32 %v4056, %v3994
    %v4069 = vmul.f32 %v4057, %v4009
    %v4070 = vadd.f32 %v4058, -0.28449672
    %v4071 = vadd.f32 %v4059, -0.28449672
    %v4072 = vadd.f32 %v4060, -0.28449672
    %v4073 = vadd.f32 %v4061, -0.28449672
    %v4074 = vadd.f32 %v4062, -0.28449672
    %v4075 = vadd.f32 %v4063, -0.28449672
    %v4076 = vadd.f32 %v4064, -0.28449672
    %v4077 = vadd.f32 %v4065, -0.28449672
    %v4078 = vadd.f32 %v4066, -0.28449672
    %v4079 = vadd.f32 %v4067, -0.28449672
    %v4080 = vadd.f32 %v4068, -0.28449672
    %v4081 = vadd.f32 %v4069, -0.28449672
    %v4082 = vmul.f32 %v4070, %v3844
    %v4083 = vmul.f32 %v4071, %v3859
    %v4084 = vmul.f32 %v4072, %v3874
    %v4085 = vmul.f32 %v4073, %v3889
    %v4086 = vmul.f32 %v4074, %v3904
    %v4087 = vmul.f32 %v4075, %v3919
    %v4088 = vmul.f32 %v4076, %v3934
    %v4089 = vmul.f32 %v4077, %v3949
    %v4090 = vmul.f32 %v4078, %v3964
    %v4091 = vmul.f32 %v4079, %v3979
    %v4092 = vmul.f32 %v4080, %v3994
    %v4093 = vmul.f32 %v4081, %v4009
    %v4094 = vadd.f32 %v4082, 0.2548296
    %v4095 = vadd.f32 %v4083, 0.2548296
    %v4096 = vadd.f32 %v4084, 0.2548296
    %v4097 = vadd.f32 %v4085, 0.2548296
    %v4098 = vadd.f32 %v4086, 0.2548296
    %v4099 = vadd.f32 %v4087, 0.2548296
    %v4100 = vadd.f32 %v4088, 0.2548296
    %v4101 = vadd.f32 %v4089, 0.2548296
    %v4102 = vadd.f32 %v4090, 0.2548296
    %v4103 = vadd.f32 %v4091, 0.2548296
    %v4104 = vadd.f32 %v4092, 0.2548296
    %v4105 = vadd.f32 %v4093, 0.2548296
    %v4106 = vmul.f32 %v4094, %v3844
    %v4107 = vmul.f32 %v4095, %v3859
    %v4108 = vmul.f32 %v4096, %v3874
    %v4109 = vmul.f32 %v4097, %v3889
    %v4110 = vmul.f32 %v4098, %v3904
    %v4111 = vmul.f32 %v4099, %v3919
    %v4112 = vmul.f32 %v4100, %v3934
    %v4113 = vmul.f32 %v4101, %v3949
    %v4114 = vmul.f32 %v4102, %v3964
    %v4115 = vmul.f32 %v4103, %v3979
    %v4116 = vmul.f32 %v4104, %v3994
    %v4117 = vmul.f32 %v4105, %v4009
    %v4118 = vsub.f32 0.0, %v3794
    %v4119 = vsub.f32 0.0, %v3795
    %v4120 = vsub.f32 0.0, %v3796
    %v4121 = vsub.f32 0.0, %v3797
    %v4122 = vsub.f32 0.0, %v3798
    %v4123 = vsub.f32 0.0, %v3799
    %v4124 = vsub.f32 0.0, %v3800
    %v4125 = vsub.f32 0.0, %v3801
    %v4126 = vsub.f32 0.0, %v3802
    %v4127 = vsub.f32 0.0, %v3803
    %v4128 = vsub.f32 0.0, %v3804
    %v4129 = vsub.f32 0.0, %v3805
    %v4130 = vmul.f32 %v4118, %v3794
    %v4131 = vmul.f32 %v4119, %v3795
    %v4132 = vmul.f32 %v4120, %v3796
    %v4133 = vmul.f32 %v4121, %v3797
    %v4134 = vmul.f32 %v4122, %v3798
    %v4135 = vmul.f32 %v4123, %v3799
    %v4136 = vmul.f32 %v4124, %v3800
    %v4137 = vmul.f32 %v4125, %v3801
    %v4138 = vmul.f32 %v4126, %v3802
    %v4139 = vmul.f32 %v4127, %v3803
    %v4140 = vmul.f32 %v4128, %v3804
    %v4141 = vmul.f32 %v4129, %v3805
    %v4142 = vmul.f32 %v4130, 1.442695
    %v4143 = vpow.pop %v4142
    %v4144 = vmul.f32 %v4131, 1.442695
    %v4145 = vpow.pop %v4144
    %v4146 = vmul.f32 %v4132, 1.442695
    %v4147 = vpow.pop %v4146
    %v4148 = vmul.f32 %v4133, 1.442695
    %v4149 = vpow.pop %v4148
    %v4150 = vmul.f32 %v4134, 1.442695
    %v4151 = vpow.pop %v4150
    %v4152 = vmul.f32 %v4135, 1.442695
    %v4153 = vpow.pop %v4152
    %v4154 = vmul.f32 %v4136, 1.442695
    %v4155 = vpow.pop %v4154
    %v4156 = vmul.f32 %v4137, 1.442695
    %v4157 = vpow.pop %v4156
    %v4158 = vmul.f32 %v4138, 1.442695
    %v4159 = vpow.pop %v4158
    %v4160 = vmul.f32 %v4139, 1.442695
    %v4161 = vpow.pop %v4160
    %v4162 = vmul.f32 %v4140, 1.442695
    %v4163 = vpow.pop %v4162
    %v4164 = vmul.f32 %v4141, 1.442695
    %v4165 = vpow.pop %v4164
    %v4166 = vmul.f32 %v4106, %v4143
    %v4167 = vmul.f32 %v4107, %v4145
    %v4168 = vmul.f32 %v4108, %v4147
    %v4169 = vmul.f32 %v4109, %v4149
    %v4170 = vmul.f32 %v4110, %v4151
    %v4171 = vmul.f32 %v4111, %v4153
    %v4172 = vmul.f32 %v4112, %v4155
    %v4173 = vmul.f32 %v4113, %v4157
    %v4174 = vmul.f32 %v4114, %v4159
    %v4175 = vmul.f32 %v4115, %v4161
    %v4176 = vmul.f32 %v4116, %v4163
    %v4177 = vmul.f32 %v4117, %v4165
    %v4178 = vsub.f32 1.0, %v4166
    %v4179 = vsub.f32 1.0, %v4167
    %v4180 = vsub.f32 1.0, %v4168
    %v4181 = vsub.f32 1.0, %v4169
    %v4182 = vsub.f32 1.0, %v4170
    %v4183 = vsub.f32 1.0, %v4171
    %v4184 = vsub.f32 1.0, %v4172
    %v4185 = vsub.f32 1.0, %v4173
    %v4186 = vsub.f32 1.0, %v4174
    %v4187 = vsub.f32 1.0, %v4175
    %v4188 = vsub.f32 1.0, %v4176
    %v4189 = vsub.f32 1.0, %v4177
    %vm4190 = vcmp.lt.f32.partialorder %v3782, 0.0
    %vm4191 = vcmp.lt.f32.partialorder %v3783, 0.0
    %vm4192 = vcmp.lt.f32.partialorder %v3784, 0.0
    %vm4193 = vcmp.lt.f32.partialorder %v3785, 0.0
    %vm4194 = vcmp.lt.f32.partialorder %v3786, 0.0
    %vm4195 = vcmp.lt.f32.partialorder %v3787, 0.0
    %vm4196 = vcmp.lt.f32.partialorder %v3788, 0.0
    %vm4197 = vcmp.lt.f32.partialorder %v3789, 0.0
    %vm4198 = vcmp.lt.f32.partialorder %v3790, 0.0
    %vm4199 = vcmp.lt.f32.partialorder %v3791, 0.0
    %vm4200 = vcmp.lt.f32.partialorder %v3792, 0.0
    %vm4201 = vcmp.lt.f32.partialorder %v3793, 0.0
    %v4202 = vsub.f32 0.0, %v4178
    %v4203 = vsub.f32 0.0, %v4179
    %v4204 = vsub.f32 0.0, %v4180
    %v4205 = vsub.f32 0.0, %v4181
    %v4206 = vsub.f32 0.0, %v4182
    %v4207 = vsub.f32 0.0, %v4183
    %v4208 = vsub.f32 0.0, %v4184
    %v4209 = vsub.f32 0.0, %v4185
    %v4210 = vsub.f32 0.0, %v4186
    %v4211 = vsub.f32 0.0, %v4187
    %v4212 = vsub.f32 0.0, %v4188
    %v4213 = vsub.f32 0.0, %v4189
    %v4214 = vsel %vm4190, %v4202, %v4178
    %v4215 = vsel %vm4191, %v4203, %v4179
    %v4216 = vsel %vm4192, %v4204, %v4180
    %v4217 = vsel %vm4193, %v4205, %v4181
    %v4218 = vsel %vm4194, %v4206, %v4182
    %v4219 = vsel %vm4195, %v4207, %v4183
    %v4220 = vsel %vm4196, %v4208, %v4184
    %v4221 = vsel %vm4197, %v4209, %v4185
    %v4222 = vsel %vm4198, %v4210, %v4186
    %v4223 = vsel %vm4199, %v4211, %v4187
    %v4224 = vsel %vm4200, %v4212, %v4188
    %v4225 = vsel %vm4201, %v4213, %v4189
    %v4226 = vadd.f32 %v4214, 1.0
    %v4227 = vadd.f32 %v4215, 1.0
    %v4228 = vadd.f32 %v4216, 1.0
    %v4229 = vadd.f32 %v4217, 1.0
    %v4230 = vadd.f32 %v4218, 1.0
    %v4231 = vadd.f32 %v4219, 1.0
    %v4232 = vadd.f32 %v4220, 1.0
    %v4233 = vadd.f32 %v4221, 1.0
    %v4234 = vadd.f32 %v4222, 1.0
    %v4235 = vadd.f32 %v4223, 1.0
    %v4236 = vadd.f32 %v4224, 1.0
    %v4237 = vadd.f32 %v4225, 1.0
    %v4238 = vmul.f32 %v3770, %v4226
    %v4239 = vmul.f32 %v3771, %v4227
    %v4240 = vmul.f32 %v3772, %v4228
    %v4241 = vmul.f32 %v3773, %v4229
    %v4242 = vmul.f32 %v3774, %v4230
    %v4243 = vmul.f32 %v3775, %v4231
    %v4244 = vmul.f32 %v3776, %v4232
    %v4245 = vmul.f32 %v3777, %v4233
    %v4246 = vmul.f32 %v3778, %v4234
    %v4247 = vmul.f32 %v3779, %v4235
    %v4248 = vmul.f32 %v3780, %v4236
    %v4249 = vmul.f32 %v3781, %v4237
    %s4250 = scalar_lea.vmem %s15, 48
    %v4251 = vld [vmem:[%s4250] sm:$0xff]
    %v4252 = vld [vmem:[%s4250 + $0x8] sm:$0xff]
    %v4253 = vld [vmem:[%s4250 + $0x10] sm:$0xff]
    %v4254 = vld [vmem:[%s4250 + $0x18] sm:$0xff]
    %v4255 = vld [vmem:[%s4250 + $0x20] sm:$0xff]
    %v4256 = vld [vmem:[%s4250 + $0x28] sm:$0xff]
    %s4257 = scalar_lea.vmem %s16, 48
    %v4258 = vld [vmem:[%s4257] sm:$0xff]
    %v4259 = vld [vmem:[%s4257 + $0x8] sm:$0xff]
    %v4260 = vld [vmem:[%s4257 + $0x10] sm:$0xff]
    %v4261 = vld [vmem:[%s4257 + $0x18] sm:$0xff]
    %v4262 = vld [vmem:[%s4257 + $0x20] sm:$0xff]
    %v4263 = vld [vmem:[%s4257 + $0x28] sm:$0xff]
    %4265 = vset.pattern.permute.xlu0 0
    %4266 = vperm.xlu0 %4265, %v4258
    %v4267 = vpop.permute.xlu0 %4266
    %4270 = vset.pattern.permute.xlu0 0
    %4271 = vperm.xlu0 %4270, %v4259
    %v4272 = vpop.permute.xlu0 %4271
    %4275 = vset.pattern.permute.xlu0 0
    %4276 = vperm.xlu0 %4275, %v4260
    %v4277 = vpop.permute.xlu0 %4276
    %4280 = vset.pattern.permute.xlu0 0
    %4281 = vperm.xlu0 %4280, %v4261
    %v4282 = vpop.permute.xlu0 %4281
    %4285 = vset.pattern.permute.xlu0 0
    %4286 = vperm.xlu0 %4285, %v4262
    %v4287 = vpop.permute.xlu0 %4286
    %4290 = vset.pattern.permute.xlu0 0
    %4291 = vperm.xlu0 %4290, %v4263
    %v4292 = vpop.permute.xlu0 %4291
    %v4295 = vsel %vm2184, %v4251, 0
    %v4298 = vsel %vm2184, %v4252, 0
    %v4301 = vsel %vm2184, %v4253, 0
    %v4304 = vsel %vm2184, %v4254, 0
    %v4307 = vsel %vm2184, %v4255, 0
    %v4310 = vsel %vm2184, %v4256, 0
    %4312 = vmatpush.msra.mxu0 0.0
    %4313 = vmatpush.msra.mxu0 0.0
    %4314 = vmatpush.msra.mxu0 0.0
    %4315 = vmatpush.msra.mxu0 0.0
    %4316 = vmatpush.msra.mxu0 %v4249
    %4317 = vmatpush.msra.mxu0 %v4248
    %4318 = vmatpush.msra.mxu0 %v4247
    %4319 = vmatpush.msra.mxu0 %v4246
    %4320 = vmatpush.msra.mxu0 %v4245
    %4321 = vmatpush.msra.mxu0 %v4244
    %4322 = vmatpush.msra.mxu0 %v4243
    %4323 = vmatpush.msra.mxu0 %v4242
    %4324 = vmatpush.msra.mxu0 %v4241
    %4325 = vmatpush.msra.mxu0 %v4240
    %4326 = vmatpush.msra.mxu0 %v4239
    %4327 = vmatpush.msra.mxu0 %v4238
    %4328 = vmatmul.f32.gmra.mxu0 %v4295
    %v4329 = vpop.f32.mrf.mxu0
    %v4330 = vadd.f32 %v4267, %v4329
    %4331 = vmatmul.f32.gmra.mxu0 %v4298
    %v4332 = vpop.f32.mrf.mxu0
    %v4333 = vadd.f32 %v4272, %v4332
    %4334 = vmatmul.f32.gmra.mxu0 %v4301
    %v4335 = vpop.f32.mrf.mxu0
    %v4336 = vadd.f32 %v4277, %v4335
    %4337 = vmatmul.f32.gmra.mxu0 %v4304
    %v4338 = vpop.f32.mrf.mxu0
    %v4339 = vadd.f32 %v4282, %v4338
    %4340 = vmatmul.f32.gmra.mxu0 %v4307
    %v4341 = vpop.f32.mrf.mxu0
    %v4342 = vadd.f32 %v4287, %v4341
    %4343 = vmatmul.f32.gmra.mxu0 %v4310
    %v4344 = vpop.f32.mrf.mxu0
    %v4345 = vadd.f32 %v4292, %v4344
    %4346 = vdwg.mxu0
    %v4347 = vadd.f32 %v4330, %v3589
    %v4348 = vadd.f32 %v4333, %v3590
    %v4349 = vadd.f32 %v4336, %v3591
    %v4350 = vadd.f32 %v4339, %v3592
    %v4351 = vadd.f32 %v4342, %v3593
    %v4352 = vadd.f32 %v4345, %v3594
    %s4353 = scalar_lea.vmem %s17, 48
    %v4354 = vld [vmem:[%s4353] sm:$0xff]
    %v4355 = vld [vmem:[%s4353 + $0x8] sm:$0xff]
    %v4356 = vld [vmem:[%s4353 + $0x10] sm:$0xff]
    %v4357 = vld [vmem:[%s4353 + $0x18] sm:$0xff]
    %v4358 = vld [vmem:[%s4353 + $0x20] sm:$0xff]
    %v4359 = vld [vmem:[%s4353 + $0x28] sm:$0xff]
    %s4360 = scalar_lea.vmem %s18, 48
    %v4361 = vld [vmem:[%s4360] sm:$0xff]
    %v4362 = vld [vmem:[%s4360 + $0x8] sm:$0xff]
    %v4363 = vld [vmem:[%s4360 + $0x10] sm:$0xff]
    %v4364 = vld [vmem:[%s4360 + $0x18] sm:$0xff]
    %v4365 = vld [vmem:[%s4360 + $0x20] sm:$0xff]
    %v4366 = vld [vmem:[%s4360 + $0x28] sm:$0xff]
    %4367 = vmatpush.msra.mxu0 0.0
    %4368 = vmatpush.msra.mxu0 0.0
    %4369 = vmatpush.msra.mxu0 0.0
    %4370 = vmatpush.msra.mxu0 0.0
    %4371 = vmatpush.msra.mxu0 0.0
    %4372 = vmatpush.msra.mxu0 0.0
    %4373 = vmatpush.msra.mxu0 0.0
    %4374 = vmatpush.msra.mxu0 0.0
    %4375 = vmatpush.msra.mxu0 0.0
    %4376 = vmatpush.msra.mxu0 0.0
    %4377 = vmatpush.msra.mxu0 %v4352
    %4378 = vmatpush.msra.mxu0 %v4351
    %4379 = vmatpush.msra.mxu0 %v4350
    %4380 = vmatpush.msra.mxu0 %v4349
    %4381 = vmatpush.msra.mxu0 %v4348
    %4382 = vmatpush.msra.mxu0 %v4347
    %4383 = vmatmul.f32.gmra.mxu0 %v115
    %v4384 = vpop.f32.mrf.mxu0
    %v4385 = vadd.f32 0.0, %v4384
    %4386 = vdwg.mxu0
    %v4387 = vmul.f32 %v4385, 0.0625
    %v4389 = vsel %vm157, %v4387, 0
    %4391 = vmatpush.msra.mxu0 0.0
    %4392 = vmatpush.msra.mxu0 0.0
    %4393 = vmatpush.msra.mxu0 0.0
    %4394 = vmatpush.msra.mxu0 0.0
    %4395 = vmatpush.msra.mxu0 0.0
    %4396 = vmatpush.msra.mxu0 0.0
    %4397 = vmatpush.msra.mxu0 0.0
    %4398 = vmatpush.msra.mxu0 0.0
    %4399 = vmatpush.msra.mxu0 0.0
    %4400 = vmatpush.msra.mxu0 0.0
    %4401 = vmatpush.msra.mxu0 0.0
    %4402 = vmatpush.msra.mxu0 0.0
    %4403 = vmatpush.msra.mxu0 0.0
    %4404 = vmatpush.msra.mxu0 0.0
    %4405 = vmatpush.msra.mxu0 0.0
    %4406 = vmatpush.msra.mxu0 %v4389
    %4407 = vmatmul.f32.gmra.mxu0 %v140
    %v4408 = vpop.f32.mrf.mxu0
    %v4409 = vadd.f32 0.0, %v4408
    %4410 = vmatmul.f32.gmra.mxu0 %v143
    %v4411 = vpop.f32.mrf.mxu0
    %v4412 = vadd.f32 0.0, %v4411
    %4413 = vmatmul.f32.gmra.mxu0 %v146
    %v4414 = vpop.f32.mrf.mxu0
    %v4415 = vadd.f32 0.0, %v4414
    %4416 = vmatmul.f32.gmra.mxu0 %v149
    %v4417 = vpop.f32.mrf.mxu0
    %v4418 = vadd.f32 0.0, %v4417
    %4419 = vmatmul.f32.gmra.mxu0 %v152
    %v4420 = vpop.f32.mrf.mxu0
    %v4421 = vadd.f32 0.0, %v4420
    %4422 = vmatmul.f32.gmra.mxu0 %v155
    %v4423 = vpop.f32.mrf.mxu0
    %v4424 = vadd.f32 0.0, %v4423
    %4425 = vdwg.mxu0
    %v4426 = vsub.f32 %v4347, %v4409
    %v4427 = vsub.f32 %v4348, %v4412
    %v4428 = vsub.f32 %v4349, %v4415
    %v4429 = vsub.f32 %v4350, %v4418
    %v4430 = vsub.f32 %v4351, %v4421
    %v4431 = vsub.f32 %v4352, %v4424
    %v4432 = vmul.f32 %v4426, %v4426
    %v4433 = vmul.f32 %v4427, %v4427
    %v4434 = vmul.f32 %v4428, %v4428
    %v4435 = vmul.f32 %v4429, %v4429
    %v4436 = vmul.f32 %v4430, %v4430
    %v4437 = vmul.f32 %v4431, %v4431
    %4438 = vmatpush.msra.mxu0 0.0
    %4439 = vmatpush.msra.mxu0 0.0
    %4440 = vmatpush.msra.mxu0 0.0
    %4441 = vmatpush.msra.mxu0 0.0
    %4442 = vmatpush.msra.mxu0 0.0
    %4443 = vmatpush.msra.mxu0 0.0
    %4444 = vmatpush.msra.mxu0 0.0
    %4445 = vmatpush.msra.mxu0 0.0
    %4446 = vmatpush.msra.mxu0 0.0
    %4447 = vmatpush.msra.mxu0 0.0
    %4448 = vmatpush.msra.mxu0 %v4437
    %4449 = vmatpush.msra.mxu0 %v4436
    %4450 = vmatpush.msra.mxu0 %v4435
    %4451 = vmatpush.msra.mxu0 %v4434
    %4452 = vmatpush.msra.mxu0 %v4433
    %4453 = vmatpush.msra.mxu0 %v4432
    %4454 = vmatmul.f32.gmra.mxu0 %v115
    %v4455 = vpop.f32.mrf.mxu0
    %v4456 = vadd.f32 0.0, %v4455
    %4457 = vdwg.mxu0
    %v4458 = vmul.f32 %v4456, 0.0625
    %v4459 = vadd.f32 %v4458, 1e-12
    %v4460 = vrsqrt.pop %v4459
    %v4461 = vmul.f32 %v4460, %v4459
    %v4462 = vmul.f32 %v4461, %v4460
    %v4463 = vmul.f32 0.5, %v4462
    %v4464 = vsub.f32 1.5, %v4463
    %v4465 = vmul.f32 %v4460, %v4464
    %vm4466 = vweird.f32 %v4459
    %vm4467 = vweird.f32 %v4460
    %vm4468 = vmor %vm4466, %vm4467
    %v4469 = vsel %vm4468, %v4460, %v4465
    %v4471 = vsel %vm157, %v4469, 0
    %4473 = vmatpush.msra.mxu0 0.0
    %4474 = vmatpush.msra.mxu0 0.0
    %4475 = vmatpush.msra.mxu0 0.0
    %4476 = vmatpush.msra.mxu0 0.0
    %4477 = vmatpush.msra.mxu0 0.0
    %4478 = vmatpush.msra.mxu0 0.0
    %4479 = vmatpush.msra.mxu0 0.0
    %4480 = vmatpush.msra.mxu0 0.0
    %4481 = vmatpush.msra.mxu0 0.0
    %4482 = vmatpush.msra.mxu0 0.0
    %4483 = vmatpush.msra.mxu0 0.0
    %4484 = vmatpush.msra.mxu0 0.0
    %4485 = vmatpush.msra.mxu0 0.0
    %4486 = vmatpush.msra.mxu0 0.0
    %4487 = vmatpush.msra.mxu0 0.0
    %4488 = vmatpush.msra.mxu0 %v4471
    %4489 = vmatmul.f32.gmra.mxu0 %v140
    %v4490 = vpop.f32.mrf.mxu0
    %v4491 = vadd.f32 0.0, %v4490
    %4492 = vmatmul.f32.gmra.mxu0 %v143
    %v4493 = vpop.f32.mrf.mxu0
    %v4494 = vadd.f32 0.0, %v4493
    %4495 = vmatmul.f32.gmra.mxu0 %v146
    %v4496 = vpop.f32.mrf.mxu0
    %v4497 = vadd.f32 0.0, %v4496
    %4498 = vmatmul.f32.gmra.mxu0 %v149
    %v4499 = vpop.f32.mrf.mxu0
    %v4500 = vadd.f32 0.0, %v4499
    %4501 = vmatmul.f32.gmra.mxu0 %v152
    %v4502 = vpop.f32.mrf.mxu0
    %v4503 = vadd.f32 0.0, %v4502
    %4504 = vmatmul.f32.gmra.mxu0 %v155
    %v4505 = vpop.f32.mrf.mxu0
    %v4506 = vadd.f32 0.0, %v4505
    %4507 = vdwg.mxu0
    %v4508 = vmul.f32 %v4426, %v4491
    %v4509 = vmul.f32 %v4427, %v4494
    %v4510 = vmul.f32 %v4428, %v4497
    %v4511 = vmul.f32 %v4429, %v4500
    %v4512 = vmul.f32 %v4430, %v4503
    %v4513 = vmul.f32 %v4431, %v4506
    %4515 = vset.pattern.permute.xlu0 0
    %4516 = vperm.xlu0 %4515, %v4354
    %v4517 = vpop.permute.xlu0 %4516
    %4520 = vset.pattern.permute.xlu0 0
    %4521 = vperm.xlu0 %4520, %v4355
    %v4522 = vpop.permute.xlu0 %4521
    %4525 = vset.pattern.permute.xlu0 0
    %4526 = vperm.xlu0 %4525, %v4356
    %v4527 = vpop.permute.xlu0 %4526
    %4530 = vset.pattern.permute.xlu0 0
    %4531 = vperm.xlu0 %4530, %v4357
    %v4532 = vpop.permute.xlu0 %4531
    %4535 = vset.pattern.permute.xlu0 0
    %4536 = vperm.xlu0 %4535, %v4358
    %v4537 = vpop.permute.xlu0 %4536
    %4540 = vset.pattern.permute.xlu0 0
    %4541 = vperm.xlu0 %4540, %v4359
    %v4542 = vpop.permute.xlu0 %4541
    %v4544 = vmul.f32 %v4508, %v4517
    %v4545 = vmul.f32 %v4509, %v4522
    %v4546 = vmul.f32 %v4510, %v4527
    %v4547 = vmul.f32 %v4511, %v4532
    %v4548 = vmul.f32 %v4512, %v4537
    %v4549 = vmul.f32 %v4513, %v4542
    %4551 = vset.pattern.permute.xlu0 0
    %4552 = vperm.xlu0 %4551, %v4361
    %v4553 = vpop.permute.xlu0 %4552
    %4556 = vset.pattern.permute.xlu0 0
    %4557 = vperm.xlu0 %4556, %v4362
    %v4558 = vpop.permute.xlu0 %4557
    %4561 = vset.pattern.permute.xlu0 0
    %4562 = vperm.xlu0 %4561, %v4363
    %v4563 = vpop.permute.xlu0 %4562
    %4566 = vset.pattern.permute.xlu0 0
    %4567 = vperm.xlu0 %4566, %v4364
    %v4568 = vpop.permute.xlu0 %4567
    %4571 = vset.pattern.permute.xlu0 0
    %4572 = vperm.xlu0 %4571, %v4365
    %v4573 = vpop.permute.xlu0 %4572
    %4576 = vset.pattern.permute.xlu0 0
    %4577 = vperm.xlu0 %4576, %v4366
    %v4578 = vpop.permute.xlu0 %4577
    %v4580 = vadd.f32 %v4544, %v4553
    %v4581 = vadd.f32 %v4545, %v4558
    %v4582 = vadd.f32 %v4546, %v4563
    %v4583 = vadd.f32 %v4547, %v4568
    %v4584 = vadd.f32 %v4548, %v4573
    %v4585 = vadd.f32 %v4549, %v4578
    %v4586 = vld [vmem:[%s23] sm:$0x3]
    %v4587 = vld [vmem:[%s24] sm:$0x3]
    %4589 = vset.pattern.permute.xlu0 0
    %4590 = vperm.xlu0 %4589, %v4587
    %v4591 = vpop.permute.xlu0 %4590
    %v4594 = vsel %vm113, %v4586, 0
    %4596 = vmatpush.msra.mxu0 0.0
    %4597 = vmatpush.msra.mxu0 0.0
    %4598 = vmatpush.msra.mxu0 0.0
    %4599 = vmatpush.msra.mxu0 0.0
    %4600 = vmatpush.msra.mxu0 0.0
    %4601 = vmatpush.msra.mxu0 0.0
    %4602 = vmatpush.msra.mxu0 0.0
    %4603 = vmatpush.msra.mxu0 0.0
    %4604 = vmatpush.msra.mxu0 0.0
    %4605 = vmatpush.msra.mxu0 0.0
    %4606 = vmatpush.msra.mxu0 %v4585
    %4607 = vmatpush.msra.mxu0 %v4584
    %4608 = vmatpush.msra.mxu0 %v4583
    %4609 = vmatpush.msra.mxu0 %v4582
    %4610 = vmatpush.msra.mxu0 %v4581
    %4611 = vmatpush.msra.mxu0 %v4580
    %4612 = vmatmul.f32.gmra.mxu0 %v4594
    %v4613 = vpop.f32.mrf.mxu0
    %v4614 = vadd.f32 %v4591, %v4613
    %4615 = vdwg.mxu0
    %4616 = vst [vmem:[#allocation2] sm:$0x3] %v4614
    // Predicated region
    $region102: #{tpu_custom_call.1} parent=1 // pred_check
      _
    $region103: #{tpu_custom_call.1} parent=1 // pred_check_branch
      %4618 = sbr.rel (0) target = $region105
    $region104: #{tpu_custom_call.1} parent=1 // pred_region
      %4620 = vsyncadd [#allocation3], 0
      %s4622 = sshll.u32 [#allocation2], 4
      %s4623 = int_to_ptr.vmem [resolvable:$true] %s4622
      %s4624 = sshll.u32 %s25, 4
      %s4625 = int_to_ptr.hbm [resolvable:$true] %s4624
      %4627 = dma.vmem_to_hbm [thread:$0]  %s4623, 32, %s4625, [#allocation3]
    $region105: #{tpu_custom_call.1} parent=1 // pred_fallthru
      _
    // Predicated region
    $region106: #{tpu_custom_call.1} parent=1 // pred_check
      _
    $region107: #{tpu_custom_call.1} parent=1 // pred_check_branch
      %4629 = sbr.rel (0) target = $region109
    $region108: #{tpu_custom_call.1} parent=1 // pred_region
      %4631 = dma.done [#allocation3], 32
    $region109: #{tpu_custom_call.1} parent=1 // pred_fallthru
      _
    %4632 = vsyncpa [#allocation3], 1

</llo_original>
